<compile_context>
chip_gen: v6e
topology: v6e:2x2x1
jax: 0.10.0
libtpu: 0.0.40
codegen_flags: <defaults>
</compile_context>

<pallas_src>
import functools

import jax
import jax.numpy as jnp
from jax import lax
from jax.experimental import pallas as pl
from jax.experimental.pallas import tpu as pltpu


def _softplus(x):
    # matches torch.nn.functional.softplus (beta=1, threshold=20)
    return jnp.where(x > 20.0, x, jnp.log1p(jnp.exp(jnp.minimum(x, 20.0))))


def encoder_layer_kernel(
    # ---- inputs ----
    x_ref,                    # (M, D)  f32, M = BB * S  (row = b*S + t)
    wz_ref, bz_ref,           # z_proj      : (D, D) bf16, (1, D) f32
    wx_ref, bx_ref,           # x_proj      : (D, D) bf16, (1, D) f32
    wc_ref, bc_ref,           # conv1d(k=1) : (D, D) bf16, (1, D) f32
    wd_ref, bd_ref,           # delta proj  : (D, R) f32,  (1, R) f32
    wb_ref, bb_ref,           # B proj      : (D, N) f32,  (1, N) f32
    wcc_ref, bcc_ref,         # C proj      : (D, N) f32,  (1, N) f32
    wdt_ref, bdt_ref,         # dt_proj     : (R, DI) f32, (1, DI) f32
    alogT_ref,                # A_log^T     : (N, DI) f32
    dpar_ref,                 # D parameter : (1, DI) f32
    wo_ref, bo_ref,           # out_proj    : (D, D) bf16, (1, D) f32
    wave_ref,                 # SMEM (4,) f32: [act1.w1, act1.w2, act2.w1, act2.w2]
    # ---- outputs ----
    o_ref,                    # (M, D) f32
    # ---- scratch ----
    delta_s, dxc_s, b_s, c_s, ys_s,
    *, batch_block, seq_len, time_chunk,
):
    BB, S, TC = batch_block, seq_len, time_chunk
    N, DI = alogT_ref.shape
    f32, bf16 = jnp.float32, jnp.bfloat16

    xin = x_ref[...]                               # (M, D) f32
    xin_b = xin.astype(bf16)
    w1a, w2a, w1b, w2b = wave_ref[0], wave_ref[1], wave_ref[2], wave_ref[3]

    # ---- z branch: z_proj -> WaveAct(act1) ----  (bf16 MXU, f32 accumulate)
    z = jnp.dot(xin_b, wz_ref[...], preferred_element_type=f32) + bz_ref[...]
    z = w1a * jnp.sin(z) + w2a * jnp.cos(z)

    # ---- x branch: x_proj -> conv1d(k=1) -> softplus -> WaveAct(act2) ----
    xp = jnp.dot(xin_b, wx_ref[...], preferred_element_type=f32) + bx_ref[...]
    xc = jnp.dot(xp.astype(bf16), wc_ref[...], preferred_element_type=f32) + bc_ref[...]
    xc = _softplus(xc)
    xc = w1b * jnp.sin(xc) + w2b * jnp.cos(xc)

    # ---- SSM input projections (lane-aligned split of deltaBC, f32) ----
    dlow = jnp.dot(xc, wd_ref[...], preferred_element_type=f32) + bd_ref[...]    # (M, R)
    Bm = jnp.dot(xc, wb_ref[...], preferred_element_type=f32) + bb_ref[...]      # (M, N)
    Cm = jnp.dot(xc, wcc_ref[...], preferred_element_type=f32) + bcc_ref[...]    # (M, N)
    delta = _softplus(
        jnp.dot(dlow, wdt_ref[...], preferred_element_type=f32) + bdt_ref[...])  # (M, DI)

    # Stage per-timestep scan inputs once in VMEM (row = b*S + t).
    delta_s[...] = delta
    dxc_s[...] = delta * xc
    b_s[...] = Bm
    c_s[...] = Cm

    A_negT = -jnp.exp(alogT_ref[...])              # (N, DI), DI dense on lanes

    n_chunks = S // TC

    def chunk_body(c, h):
        # h: (BB, N, DI) recurrent state -- one independent chain per batch row,
        # kept in lockstep so the short dependency chains overlap.
        t0 = c * TC

        def rows(ref, b):
            start = pl.multiple_of(b * S + t0, TC)
            return ref[pl.ds(start, TC), :]

        d_ch = jnp.stack([rows(delta_s, b) for b in range(BB)], axis=0)   # (BB,TC,DI)
        dx_ch = jnp.stack([rows(dxc_s, b) for b in range(BB)], axis=0)    # (BB,TC,DI)
        bm_ch = jnp.stack([rows(b_s, b) for b in range(BB)], axis=0)      # (BB,TC,N)
        cm_ch = jnp.stack([rows(c_s, b) for b in range(BB)], axis=0)      # (BB,TC,N)

        # deltaA / BX for the whole chunk at once (batched EUP exp);
        # layout (BB, TC, N, DI): DI on lanes, N on sublanes.
        dA = jnp.exp(d_ch[:, :, None, :] * A_negT[None, None, :, :])
        bx = dx_ch[:, :, None, :] * bm_ch[:, :, :, None]
        ct = cm_ch[:, :, :, None]                                         # (BB,TC,N,1)

        ys = []
        for k in range(TC):                        # unrolled inner time steps
            h = dA[:, k] * h + bx[:, k]            # (BB, N, DI)
            ys.append(jnp.sum(h * ct[:, k], axis=1))   # sublane reduce -> (BB, DI)
        y_ch = jnp.stack(ys, axis=1)               # (BB, TC, DI)

        for b in range(BB):                        # chunked (>= 8-row) stores
            start = pl.multiple_of(b * S + t0, TC)
            ys_s[pl.ds(start, TC), :] = y_ch[b]
        return h

    lax.fori_loop(0, n_chunks, chunk_body, jnp.zeros((BB, N, DI), f32))

    # ---- skip term, gate, out_proj, residual ----
    y = ys_s[...] + dpar_ref[...] * xc             # (M, DI)
    u = (y * z).astype(bf16)
    out = jnp.dot(u, wo_ref[...], preferred_element_type=f32) + bo_ref[...] + xin
    o_ref[...] = out.astype(o_ref.dtype)


def encoder_layer(x, p, *, dt_rank, d_state, single_buffer_weights=True):
    """Pallas TPU implementation of EncoderLayer.forward (PINNMamba)."""
    B, S, D = x.shape
    DI = p["A_log"].shape[0]
    N, R = d_state, dt_rank
    assert DI == D, "module wiring (gating / out_proj / residual) requires dim_inner == d_model"

    # Batch block: pack batch rows into the GEMM M dimension (target ~256 rows),
    # keeping the recurrence independent per batch row.
    max_bb = max(1, min(B, 256 // max(S, 1)))
    BB = 1
    for cand in range(max_bb, 0, -1):
        if B % cand == 0:
            BB = cand
            break
    M = BB * S
    grid = (B // BB,)

    # Time chunk for the selective scan (largest divisor of S up to 16).
    TC = 1
    for cand in (16, 8, 4, 2, 1):
        if S % cand == 0:
            TC = cand
            break

    f32, bf16 = jnp.float32, jnp.bfloat16
    x2 = x.reshape(B * S, D).astype(f32)

    # Lane-aligned split of the fused deltaBC projection into three GEMMs.
    Wd = p["Wdbc"][:, :R]
    WB = p["Wdbc"][:, R:R + N]
    WC = p["Wdbc"][:, R + N:R + 2 * N]
    bd = p["bdbc"][:R]
    bB = p["bdbc"][R:R + N]
    bC = p["bdbc"][R + N:R + 2 * N]

    def row(v):
        return v.reshape(1, -1).astype(f32)

    args = (
        x2,
        p["Wz"].astype(bf16), row(p["bz"]),
        p["Wx"].astype(bf16), row(p["bx"]),
        p["Wc"].astype(bf16), row(p["bc"]),
        Wd.astype(f32), row(bd),
        WB.astype(f32), row(bB),
        WC.astype(f32), row(bC),
        p["Wdt"].astype(f32), row(p["bdt"]),
        p["A_log"].T.astype(f32),
        row(p["Dp"]),
        p["Wo"].astype(bf16), row(p["bo"]),
        p["wave"].astype(f32),
    )

    def wspec(shape):
        ndim = len(shape)
        idx = lambda i, _n=ndim: (0,) * _n
        if single_buffer_weights:
            # Weight block index never changes across the grid -> 1 buffer.
            return pl.BlockSpec(shape, idx, pipeline_mode=pl.Buffered(1))
        return pl.BlockSpec(shape, idx)

    in_specs = [
        pl.BlockSpec((M, D), lambda i: (i, 0)),       # x rows for this batch block
        wspec((D, D)), wspec((1, D)),                 # z_proj
        wspec((D, D)), wspec((1, D)),                 # x_proj
        wspec((D, D)), wspec((1, D)),                 # conv1d (k=1)
        wspec((D, R)), wspec((1, R)),                 # delta low-rank proj
        wspec((D, N)), wspec((1, N)),                 # B proj
        wspec((D, N)), wspec((1, N)),                 # C proj
        wspec((R, DI)), wspec((1, DI)),               # dt_proj
        wspec((N, DI)),                               # A_log^T
        wspec((1, DI)),                               # D parameter
        wspec((D, D)), wspec((1, D)),                 # out_proj
        pl.BlockSpec(memory_space=pltpu.SMEM),        # WaveAct scalars
    ]

    kernel = functools.partial(
        encoder_layer_kernel, batch_block=BB, seq_len=S, time_chunk=TC)

    out2 = pl.pallas_call(
        kernel,
        out_shape=jax.ShapeDtypeStruct((B * S, D), f32),
        grid=grid,
        in_specs=in_specs,
        out_specs=pl.BlockSpec((M, D), lambda i: (i, 0)),
        scratch_shapes=[
            pltpu.VMEM((M, DI), f32),     # delta
            pltpu.VMEM((M, DI), f32),     # delta * xc
            pltpu.VMEM((M, N), f32),      # B
            pltpu.VMEM((M, N), f32),      # C
            pltpu.VMEM((M, DI), f32),     # scan output y
        ],
        compiler_params=pltpu.CompilerParams(
            dimension_semantics=("parallel",),        # batch blocks independent
            vmem_limit_bytes=64 * 1024 * 1024,
        ),
    )(*args)
    return out2.reshape(B, S, D)


def encoder_layer_ref(x, p, dt_rank, d_state):
    """Pure-JAX f32 reference with identical semantics (for verification)."""
    z = x @ p["Wz"] + p["bz"]
    z = p["wave"][0] * jnp.sin(z) + p["wave"][1] * jnp.cos(z)
    xp = x @ p["Wx"] + p["bx"]
    xc = _softplus(xp @ p["Wc"] + p["bc"])
    xc = p["wave"][2] * jnp.sin(xc) + p["wave"][3] * jnp.cos(xc)
    dbc = xc @ p["Wdbc"] + p["bdbc"]
    delta = dbc[..., :dt_rank]
    Bm = dbc[..., dt_rank:dt_rank + d_state]
    Cm = dbc[..., dt_rank + d_state:dt_rank + 2 * d_state]
    delta = _softplus(delta @ p["Wdt"] + p["bdt"])
    A = -jnp.exp(p["A_log"])
    dA = jnp.exp(delta[..., None] * A)                                # (B,S,DI,N)
    BX = (delta[..., None] * Bm[..., None, :]) * xc[..., None]        # (B,S,DI,N)

    def step(h, inp):
        dAt, BXt = inp
        h = dAt * h + BXt
        return h, h

    Bsz, S, DI, N = dA.shape
    h0 = jnp.zeros((Bsz, DI, N), jnp.float32)
    _, hs = lax.scan(step, h0, (jnp.moveaxis(dA, 1, 0), jnp.moveaxis(BX, 1, 0)))
    hs = jnp.moveaxis(hs, 0, 1)                                       # (B,S,DI,N)
    y = jnp.sum(hs * Cm[..., None, :], axis=-1) + p["Dp"] * xc
    return (y * z) @ p["Wo"] + p["bo"] + x


def encoder_layer_ref_mixed(x, p, dt_rank, d_state):
    """Reference mirroring the kernel's precision (bf16 D x D GEMMs, f32 rest)."""
    bf = jnp.bfloat16
    f32 = jnp.float32

    def mm_bf(a, w):
        return jnp.dot(a.astype(bf), w.astype(bf), preferred_element_type=f32)

    R, N = dt_rank, d_state
    z = mm_bf(x, p["Wz"]) + p["bz"]
    z = p["wave"][0] * jnp.sin(z) + p["wave"][1] * jnp.cos(z)
    xp = mm_bf(x, p["Wx"]) + p["bx"]
    xc = _softplus(mm_bf(xp, p["Wc"]) + p["bc"])
    xc = p["wave"][2] * jnp.sin(xc) + p["wave"][3] * jnp.cos(xc)
    Wd, WB, WC = p["Wdbc"][:, :R], p["Wdbc"][:, R:R + N], p["Wdbc"][:, R + N:R + 2 * N]
    bd, bB, bC = p["bdbc"][:R], p["bdbc"][R:R + N], p["bdbc"][R + N:R + 2 * N]
    dlow = xc @ Wd + bd
    Bm = xc @ WB + bB
    Cm = xc @ WC + bC
    delta = _softplus(dlow @ p["Wdt"] + p["bdt"])
    A = -jnp.exp(p["A_log"])
    dA = jnp.exp(delta[..., None] * A)
    BX = (delta[..., None] * Bm[..., None, :]) * xc[..., None]

    def step(h, inp):
        dAt, BXt = inp
        h = dAt * h + BXt
        return h, h

    Bsz = x.shape[0]
    h0 = jnp.zeros((Bsz, p["A_log"].shape[0], d_state), f32)
    _, hs = lax.scan(step, h0, (jnp.moveaxis(dA, 1, 0), jnp.moveaxis(BX, 1, 0)))
    hs = jnp.moveaxis(hs, 0, 1)
    y = jnp.sum(hs * Cm[..., None, :], axis=-1) + p["Dp"] * xc
    return mm_bf(y * z, p["Wo"]) + p["bo"] + x


if __name__ == "__main__":
    B, S, D = 2, 8, 32
    dt_rank, d_state = 8, 8
    DI = D  # dim_inner must equal d_model for the gating / skip to be valid

    key = jax.random.PRNGKey(0)
    keys = jax.random.split(key, 16)

    def init(k, shape, scale=0.1):
        return scale * jax.random.normal(k, shape, dtype=jnp.float32)

    params = {
        "Wz": init(keys[0], (D, D)), "bz": init(keys[1], (D,)),
        "Wx": init(keys[2], (D, D)), "bx": init(keys[3], (D,)),
        "Wc": init(keys[4], (D, D)), "bc": init(keys[5], (D,)),
        "Wdbc": init(keys[6], (D, dt_rank + 2 * d_state)),
        "bdbc": init(keys[7], (dt_rank + 2 * d_state,)),
        "Wdt": init(keys[8], (dt_rank, DI)), "bdt": init(keys[9], (DI,)),
        # matches nn.Parameter(torch.log(arange(1, d_state+1).repeat(dim_inner, 1)))
        "A_log": jnp.log(jnp.tile(jnp.arange(1, d_state + 1, dtype=jnp.float32)[None, :],
                                  (DI, 1))),
        "Dp": jnp.ones((DI,), jnp.float32),
        "Wo": init(keys[10], (D, D)), "bo": init(keys[11], (D,)),
        # WaveAct params: [act1.w1, act1.w2, act2.w1, act2.w2]
        "wave": jnp.array([1.0, 0.8, 1.2, 0.9], jnp.float32),
    }

    x = jax.random.normal(keys[12], (B, S, D), dtype=jnp.float32)

    try:
        out = jax.block_until_ready(
            encoder_layer(x, params, dt_rank=dt_rank, d_state=d_state))
    except Exception:
        # pl.Buffered(1) not available / rejected on this JAX version -> fall
        # back to default double-buffered weight specs (identical semantics).
        out = jax.block_until_ready(
            encoder_layer(x, params, dt_rank=dt_rank, d_state=d_state,
                          single_buffer_weights=False))

    ref_mixed = encoder_layer_ref_mixed(x, params, dt_rank, d_state)
    ref_f32 = encoder_layer_ref(x, params, dt_rank, d_state)

    assert out.shape == (B, S, D)
    # Tight check vs a reference that mirrors the kernel's precision choices.
    assert jnp.allclose(out, ref_mixed, atol=5e-3, rtol=5e-3), \
        float(jnp.max(jnp.abs(out - ref_mixed)))
    # Loose sanity check vs the pure-f32 reference (bf16 GEMMs change numerics).
    assert float(jnp.max(jnp.abs(out - ref_f32))) < 0.25

    print("KERNEL_OK")
</pallas_src>

<mosaic_0001>
module attributes {stable_mosaic.version = 11 : i64} {
  func.func @encoder_layer_kernel(%arg0: i32, %arg1: memref<16x32xf32, #tpu.memory_space<vmem>>, %arg2: memref<32x32xbf16, #tpu.memory_space<vmem>>, %arg3: memref<1x32xf32, #tpu.memory_space<vmem>>, %arg4: memref<32x32xbf16, #tpu.memory_space<vmem>>, %arg5: memref<1x32xf32, #tpu.memory_space<vmem>>, %arg6: memref<32x32xbf16, #tpu.memory_space<vmem>>, %arg7: memref<1x32xf32, #tpu.memory_space<vmem>>, %arg8: memref<32x8xf32, #tpu.memory_space<vmem>>, %arg9: memref<1x8xf32, #tpu.memory_space<vmem>>, %arg10: memref<32x8xf32, #tpu.memory_space<vmem>>, %arg11: memref<1x8xf32, #tpu.memory_space<vmem>>, %arg12: memref<32x8xf32, #tpu.memory_space<vmem>>, %arg13: memref<1x8xf32, #tpu.memory_space<vmem>>, %arg14: memref<8x32xf32, #tpu.memory_space<vmem>>, %arg15: memref<1x32xf32, #tpu.memory_space<vmem>>, %arg16: memref<8x32xf32, #tpu.memory_space<vmem>>, %arg17: memref<1x32xf32, #tpu.memory_space<vmem>>, %arg18: memref<32x32xbf16, #tpu.memory_space<vmem>>, %arg19: memref<1x32xf32, #tpu.memory_space<vmem>>, %arg20: memref<4xf32, #tpu.memory_space<smem>>, %arg21: memref<16x32xf32, #tpu.memory_space<vmem>>, %arg22: memref<16x32xf32, #tpu.memory_space<vmem>>, %arg23: memref<16x32xf32, #tpu.memory_space<vmem>>, %arg24: memref<16x8xf32, #tpu.memory_space<vmem>>, %arg25: memref<16x8xf32, #tpu.memory_space<vmem>>, %arg26: memref<16x32xf32, #tpu.memory_space<vmem>>) attributes {dimension_semantics = [#tpu.dimension_semantics<parallel>], iteration_bounds = array<i64: 1>, scalar_prefetch = 0 : i64, scratch_operands = 5 : i64, tpu.core_type = #tpu.core_type<tc>, window_params = [{transform_indices = @transform_0, window_bounds = array<i64: 16, 32>}, {pipeline_mode = #tpu.pipeline_mode<synchronous>, transform_indices = @transform_1, window_bounds = array<i64: 32, 32>}, {pipeline_mode = #tpu.pipeline_mode<synchronous>, transform_indices = @transform_2, window_bounds = array<i64: 1, 32>}, {pipeline_mode = #tpu.pipeline_mode<synchronous>, transform_indices = @transform_3, window_bounds = array<i64: 32, 32>}, {pipeline_mode = #tpu.pipeline_mode<synchronous>, transform_indices = @transform_4, window_bounds = array<i64: 1, 32>}, {pipeline_mode = #tpu.pipeline_mode<synchronous>, transform_indices = @transform_5, window_bounds = array<i64: 32, 32>}, {pipeline_mode = #tpu.pipeline_mode<synchronous>, transform_indices = @transform_6, window_bounds = array<i64: 1, 32>}, {pipeline_mode = #tpu.pipeline_mode<synchronous>, transform_indices = @transform_7, window_bounds = array<i64: 32, 8>}, {pipeline_mode = #tpu.pipeline_mode<synchronous>, transform_indices = @transform_8, window_bounds = array<i64: 1, 8>}, {pipeline_mode = #tpu.pipeline_mode<synchronous>, transform_indices = @transform_9, window_bounds = array<i64: 32, 8>}, {pipeline_mode = #tpu.pipeline_mode<synchronous>, transform_indices = @transform_10, window_bounds = array<i64: 1, 8>}, {pipeline_mode = #tpu.pipeline_mode<synchronous>, transform_indices = @transform_11, window_bounds = array<i64: 32, 8>}, {pipeline_mode = #tpu.pipeline_mode<synchronous>, transform_indices = @transform_12, window_bounds = array<i64: 1, 8>}, {pipeline_mode = #tpu.pipeline_mode<synchronous>, transform_indices = @transform_13, window_bounds = array<i64: 8, 32>}, {pipeline_mode = #tpu.pipeline_mode<synchronous>, transform_indices = @transform_14, window_bounds = array<i64: 1, 32>}, {pipeline_mode = #tpu.pipeline_mode<synchronous>, transform_indices = @transform_15, window_bounds = array<i64: 8, 32>}, {pipeline_mode = #tpu.pipeline_mode<synchronous>, transform_indices = @transform_16, window_bounds = array<i64: 1, 32>}, {pipeline_mode = #tpu.pipeline_mode<synchronous>, transform_indices = @transform_17, window_bounds = array<i64: 32, 32>}, {pipeline_mode = #tpu.pipeline_mode<synchronous>, transform_indices = @transform_18, window_bounds = array<i64: 1, 32>}, {transform_indices = @transform_19, window_bounds = array<i64: 4>}, {transform_indices = @transform_20, window_bounds = array<i64: 16, 32>}]} {
    %c0 = arith.constant 0 : index
    %c0_0 = arith.constant 0 : index
    %0 = vector.load %arg1[%c0, %c0_0] : memref<16x32xf32, #tpu.memory_space<vmem>>, vector<16x32xf32>
    %1 = arith.truncf %0 : vector<16x32xf32> to vector<16x32xbf16>
    %c0_1 = arith.constant 0 : index
    %2 = memref.load %arg20[%c0_1] : memref<4xf32, #tpu.memory_space<smem>>
    %c1 = arith.constant 1 : index
    %3 = memref.load %arg20[%c1] : memref<4xf32, #tpu.memory_space<smem>>
    %c2 = arith.constant 2 : index
    %4 = memref.load %arg20[%c2] : memref<4xf32, #tpu.memory_space<smem>>
    %c3 = arith.constant 3 : index
    %5 = memref.load %arg20[%c3] : memref<4xf32, #tpu.memory_space<smem>>
    %c0_2 = arith.constant 0 : index
    %c0_3 = arith.constant 0 : index
    %6 = vector.load %arg2[%c0_2, %c0_3] : memref<32x32xbf16, #tpu.memory_space<vmem>>, vector<32x32xbf16>
    %cst = arith.constant dense<0.000000e+00> : vector<16x32xf32>
    %7 = tpu.matmul %1, %6, %cst {dimension_numbers = #tpu.dot_dimension_numbers<[1], [0], [0], [1], [0, 0, 1, 1], [], []>} : vector<16x32xbf16>, vector<32x32xbf16>, vector<16x32xf32> -> vector<16x32xf32>
    %c0_4 = arith.constant 0 : index
    %c0_5 = arith.constant 0 : index
    %8 = vector.load %arg3[%c0_4, %c0_5] : memref<1x32xf32, #tpu.memory_space<vmem>>, vector<1x32xf32>
    %9 = vector.broadcast %8 : vector<1x32xf32> to vector<16x32xf32>
    %10 = arith.addf %7, %9 : vector<16x32xf32>
    %11 = math.sin %10 : vector<16x32xf32>
    %12 = vector.broadcast %2 : f32 to vector<16x32xf32>
    %13 = arith.mulf %12, %11 : vector<16x32xf32>
    %14 = math.cos %10 : vector<16x32xf32>
    %15 = vector.broadcast %3 : f32 to vector<16x32xf32>
    %16 = arith.mulf %15, %14 : vector<16x32xf32>
    %17 = arith.addf %13, %16 : vector<16x32xf32>
    %c0_6 = arith.constant 0 : index
    %c0_7 = arith.constant 0 : index
    %18 = vector.load %arg4[%c0_6, %c0_7] : memref<32x32xbf16, #tpu.memory_space<vmem>>, vector<32x32xbf16>
    %cst_8 = arith.constant dense<0.000000e+00> : vector<16x32xf32>
    %19 = tpu.matmul %1, %18, %cst_8 {dimension_numbers = #tpu.dot_dimension_numbers<[1], [0], [0], [1], [0, 0, 1, 1], [], []>} : vector<16x32xbf16>, vector<32x32xbf16>, vector<16x32xf32> -> vector<16x32xf32>
    %c0_9 = arith.constant 0 : index
    %c0_10 = arith.constant 0 : index
    %20 = vector.load %arg5[%c0_9, %c0_10] : memref<1x32xf32, #tpu.memory_space<vmem>>, vector<1x32xf32>
    %21 = vector.broadcast %20 : vector<1x32xf32> to vector<16x32xf32>
    %22 = arith.addf %19, %21 : vector<16x32xf32>
    %23 = arith.truncf %22 : vector<16x32xf32> to vector<16x32xbf16>
    %c0_11 = arith.constant 0 : index
    %c0_12 = arith.constant 0 : index
    %24 = vector.load %arg6[%c0_11, %c0_12] : memref<32x32xbf16, #tpu.memory_space<vmem>>, vector<32x32xbf16>
    %cst_13 = arith.constant dense<0.000000e+00> : vector<16x32xf32>
    %25 = tpu.matmul %23, %24, %cst_13 {dimension_numbers = #tpu.dot_dimension_numbers<[1], [0], [0], [1], [0, 0, 1, 1], [], []>} : vector<16x32xbf16>, vector<32x32xbf16>, vector<16x32xf32> -> vector<16x32xf32>
    %c0_14 = arith.constant 0 : index
    %c0_15 = arith.constant 0 : index
    %26 = vector.load %arg7[%c0_14, %c0_15] : memref<1x32xf32, #tpu.memory_space<vmem>>, vector<1x32xf32>
    %27 = vector.broadcast %26 : vector<1x32xf32> to vector<16x32xf32>
    %28 = arith.addf %25, %27 : vector<16x32xf32>
    %cst_16 = arith.constant 2.000000e+01 : f32
    %29 = vector.broadcast %cst_16 : f32 to vector<16x32xf32>
    %30 = arith.cmpf ogt, %28, %29 : vector<16x32xf32>
    %cst_17 = arith.constant 2.000000e+01 : f32
    %31 = vector.broadcast %cst_17 : f32 to vector<16x32xf32>
    %32 = arith.minimumf %28, %31 : vector<16x32xf32>
    %33 = math.exp %32 : vector<16x32xf32>
    %34 = math.log1p %33 : vector<16x32xf32>
    %35 = arith.select %30, %28, %34 : vector<16x32xi1>, vector<16x32xf32>
    %36 = math.sin %35 : vector<16x32xf32>
    %37 = vector.broadcast %4 : f32 to vector<16x32xf32>
    %38 = arith.mulf %37, %36 : vector<16x32xf32>
    %39 = math.cos %35 : vector<16x32xf32>
    %40 = vector.broadcast %5 : f32 to vector<16x32xf32>
    %41 = arith.mulf %40, %39 : vector<16x32xf32>
    %42 = arith.addf %38, %41 : vector<16x32xf32>
    %c0_18 = arith.constant 0 : index
    %c0_19 = arith.constant 0 : index
    %43 = vector.load %arg8[%c0_18, %c0_19] : memref<32x8xf32, #tpu.memory_space<vmem>>, vector<32x8xf32>
    %cst_20 = arith.constant dense<0.000000e+00> : vector<16x8xf32>
    %44 = tpu.matmul %42, %43, %cst_20 {dimension_numbers = #tpu.dot_dimension_numbers<[1], [0], [0], [1], [0, 0, 1, 1], [], []>} : vector<16x32xf32>, vector<32x8xf32>, vector<16x8xf32> -> vector<16x8xf32>
    %c0_21 = arith.constant 0 : index
    %c0_22 = arith.constant 0 : index
    %45 = vector.load %arg9[%c0_21, %c0_22] : memref<1x8xf32, #tpu.memory_space<vmem>>, vector<1x8xf32>
    %46 = vector.broadcast %45 : vector<1x8xf32> to vector<16x8xf32>
    %47 = arith.addf %44, %46 : vector<16x8xf32>
    %c0_23 = arith.constant 0 : index
    %c0_24 = arith.constant 0 : index
    %48 = vector.load %arg10[%c0_23, %c0_24] : memref<32x8xf32, #tpu.memory_space<vmem>>, vector<32x8xf32>
    %cst_25 = arith.constant dense<0.000000e+00> : vector<16x8xf32>
    %49 = tpu.matmul %42, %48, %cst_25 {dimension_numbers = #tpu.dot_dimension_numbers<[1], [0], [0], [1], [0, 0, 1, 1], [], []>} : vector<16x32xf32>, vector<32x8xf32>, vector<16x8xf32> -> vector<16x8xf32>
    %c0_26 = arith.constant 0 : index
    %c0_27 = arith.constant 0 : index
    %50 = vector.load %arg11[%c0_26, %c0_27] : memref<1x8xf32, #tpu.memory_space<vmem>>, vector<1x8xf32>
    %51 = vector.broadcast %50 : vector<1x8xf32> to vector<16x8xf32>
    %52 = arith.addf %49, %51 : vector<16x8xf32>
    %c0_28 = arith.constant 0 : index
    %c0_29 = arith.constant 0 : index
    %53 = vector.load %arg12[%c0_28, %c0_29] : memref<32x8xf32, #tpu.memory_space<vmem>>, vector<32x8xf32>
    %cst_30 = arith.constant dense<0.000000e+00> : vector<16x8xf32>
    %54 = tpu.matmul %42, %53, %cst_30 {dimension_numbers = #tpu.dot_dimension_numbers<[1], [0], [0], [1], [0, 0, 1, 1], [], []>} : vector<16x32xf32>, vector<32x8xf32>, vector<16x8xf32> -> vector<16x8xf32>
    %c0_31 = arith.constant 0 : index
    %c0_32 = arith.constant 0 : index
    %55 = vector.load %arg13[%c0_31, %c0_32] : memref<1x8xf32, #tpu.memory_space<vmem>>, vector<1x8xf32>
    %56 = vector.broadcast %55 : vector<1x8xf32> to vector<16x8xf32>
    %57 = arith.addf %54, %56 : vector<16x8xf32>
    %c0_33 = arith.constant 0 : index
    %c0_34 = arith.constant 0 : index
    %58 = vector.load %arg14[%c0_33, %c0_34] : memref<8x32xf32, #tpu.memory_space<vmem>>, vector<8x32xf32>
    %cst_35 = arith.constant dense<0.000000e+00> : vector<16x32xf32>
    %59 = tpu.matmul %47, %58, %cst_35 {dimension_numbers = #tpu.dot_dimension_numbers<[1], [0], [0], [1], [0, 0, 1, 1], [], []>} : vector<16x8xf32>, vector<8x32xf32>, vector<16x32xf32> -> vector<16x32xf32>
    %c0_36 = arith.constant 0 : index
    %c0_37 = arith.constant 0 : index
    %60 = vector.load %arg15[%c0_36, %c0_37] : memref<1x32xf32, #tpu.memory_space<vmem>>, vector<1x32xf32>
    %61 = vector.broadcast %60 : vector<1x32xf32> to vector<16x32xf32>
    %62 = arith.addf %59, %61 : vector<16x32xf32>
    %cst_38 = arith.constant 2.000000e+01 : f32
    %63 = vector.broadcast %cst_38 : f32 to vector<16x32xf32>
    %64 = arith.cmpf ogt, %62, %63 : vector<16x32xf32>
    %cst_39 = arith.constant 2.000000e+01 : f32
    %65 = vector.broadcast %cst_39 : f32 to vector<16x32xf32>
    %66 = arith.minimumf %62, %65 : vector<16x32xf32>
    %67 = math.exp %66 : vector<16x32xf32>
    %68 = math.log1p %67 : vector<16x32xf32>
    %69 = arith.select %64, %62, %68 : vector<16x32xi1>, vector<16x32xf32>
    %c0_40 = arith.constant 0 : index
    %c0_41 = arith.constant 0 : index
    %70 = vector.load %arg22[%c0_40, %c0_41] : memref<16x32xf32, #tpu.memory_space<vmem>>, vector<16x32xf32>
    tpu.vector_store %arg22[%c0_40, %c0_41], %69 {strides = array<i32>} : memref<16x32xf32, #tpu.memory_space<vmem>>, vector<16x32xf32>,
    %71 = arith.mulf %69, %42 : vector<16x32xf32>
    %c0_42 = arith.constant 0 : index
    %c0_43 = arith.constant 0 : index
    %72 = vector.load %arg23[%c0_42, %c0_43] : memref<16x32xf32, #tpu.memory_space<vmem>>, vector<16x32xf32>
    tpu.vector_store %arg23[%c0_42, %c0_43], %71 {strides = array<i32>} : memref<16x32xf32, #tpu.memory_space<vmem>>, vector<16x32xf32>,
    %c0_44 = arith.constant 0 : index
    %c0_45 = arith.constant 0 : index
    %73 = vector.load %arg24[%c0_44, %c0_45] : memref<16x8xf32, #tpu.memory_space<vmem>>, vector<16x8xf32>
    tpu.vector_store %arg24[%c0_44, %c0_45], %52 {strides = array<i32>} : memref<16x8xf32, #tpu.memory_space<vmem>>, vector<16x8xf32>,
    %c0_46 = arith.constant 0 : index
    %c0_47 = arith.constant 0 : index
    %74 = vector.load %arg25[%c0_46, %c0_47] : memref<16x8xf32, #tpu.memory_space<vmem>>, vector<16x8xf32>
    tpu.vector_store %arg25[%c0_46, %c0_47], %57 {strides = array<i32>} : memref<16x8xf32, #tpu.memory_space<vmem>>, vector<16x8xf32>,
    %c0_48 = arith.constant 0 : index
    %c0_49 = arith.constant 0 : index
    %75 = vector.load %arg16[%c0_48, %c0_49] : memref<8x32xf32, #tpu.memory_space<vmem>>, vector<8x32xf32>
    %76 = math.exp %75 : vector<8x32xf32>
    %cst_50 = arith.constant 0.000000e+00 : f32
    %77 = vector.broadcast %cst_50 : f32 to vector<8x32xf32>
    %78 = arith.subf %77, %76 : vector<8x32xf32>
    %cst_51 = arith.constant 0.000000e+00 : f32
    %79 = vector.broadcast %cst_51 : f32 to vector<2x8x32xf32>
    %c0_i32 = arith.constant 0 : i32
    %c8_i32 = arith.constant 8 : i32
    %80 = arith.muli %c0_i32, %c8_i32 : i32
    %c0_i32_52 = arith.constant 0 : i32
    %81 = arith.addi %c0_i32_52, %80 : i32
    %82 = tpu.assume_multiple %81, 8 : i32
    %83 = arith.index_cast %82 : i32 to index
    %c0_53 = arith.constant 0 : index
    %84 = vector.load %arg22[%83, %c0_53] : memref<16x32xf32, #tpu.memory_space<vmem>>, vector<8x32xf32>
    %c8_i32_54 = arith.constant 8 : i32
    %85 = arith.addi %c8_i32_54, %80 : i32
    %86 = tpu.assume_multiple %85, 8 : i32
    %87 = arith.index_cast %86 : i32 to index
    %c0_55 = arith.constant 0 : index
    %88 = vector.load %arg22[%87, %c0_55] : memref<16x32xf32, #tpu.memory_space<vmem>>, vector<8x32xf32>
    %89 = vector.shape_cast %84 : vector<8x32xf32> to vector<1x8x32xf32>
    %90 = vector.shape_cast %88 : vector<8x32xf32> to vector<1x8x32xf32>
    %91 = tpu.concatenate %89, %90 in 0 : vector<1x8x32xf32>, vector<1x8x32xf32> -> vector<2x8x32xf32>
    %c0_i32_56 = arith.constant 0 : i32
    %92 = arith.addi %c0_i32_56, %80 : i32
    %93 = tpu.assume_multiple %92, 8 : i32
    %94 = arith.index_cast %93 : i32 to index
    %c0_57 = arith.constant 0 : index
    %95 = vector.load %arg23[%94, %c0_57] : memref<16x32xf32, #tpu.memory_space<vmem>>, vector<8x32xf32>
    %c8_i32_58 = arith.constant 8 : i32
    %96 = arith.addi %c8_i32_58, %80 : i32
    %97 = tpu.assume_multiple %96, 8 : i32
    %98 = arith.index_cast %97 : i32 to index
    %c0_59 = arith.constant 0 : index
    %99 = vector.load %arg23[%98, %c0_59] : memref<16x32xf32, #tpu.memory_space<vmem>>, vector<8x32xf32>
    %100 = vector.shape_cast %95 : vector<8x32xf32> to vector<1x8x32xf32>
    %101 = vector.shape_cast %99 : vector<8x32xf32> to vector<1x8x32xf32>
    %102 = tpu.concatenate %100, %101 in 0 : vector<1x8x32xf32>, vector<1x8x32xf32> -> vector<2x8x32xf32>
    %c0_i32_60 = arith.constant 0 : i32
    %103 = arith.addi %c0_i32_60, %80 : i32
    %104 = tpu.assume_multiple %103, 8 : i32
    %105 = arith.index_cast %104 : i32 to index
    %c0_61 = arith.constant 0 : index
    %106 = vector.load %arg24[%105, %c0_61] : memref<16x8xf32, #tpu.memory_space<vmem>>, vector<8x8xf32>
    %c8_i32_62 = arith.constant 8 : i32
    %107 = arith.addi %c8_i32_62, %80 : i32
    %108 = tpu.assume_multiple %107, 8 : i32
    %109 = arith.index_cast %108 : i32 to index
    %c0_63 = arith.constant 0 : index
    %110 = vector.load %arg24[%109, %c0_63] : memref<16x8xf32, #tpu.memory_space<vmem>>, vector<8x8xf32>
    %111 = vector.shape_cast %106 : vector<8x8xf32> to vector<1x8x8xf32>
    %112 = vector.shape_cast %110 : vector<8x8xf32> to vector<1x8x8xf32>
    %113 = tpu.concatenate %111, %112 in 0 : vector<1x8x8xf32>, vector<1x8x8xf32> -> vector<2x8x8xf32>
    %c0_i32_64 = arith.constant 0 : i32
    %114 = arith.addi %c0_i32_64, %80 : i32
    %115 = tpu.assume_multiple %114, 8 : i32
    %116 = arith.index_cast %115 : i32 to index
    %c0_65 = arith.constant 0 : index
    %117 = vector.load %arg25[%116, %c0_65] : memref<16x8xf32, #tpu.memory_space<vmem>>, vector<8x8xf32>
    %c8_i32_66 = arith.constant 8 : i32
    %118 = arith.addi %c8_i32_66, %80 : i32
    %119 = tpu.assume_multiple %118, 8 : i32
    %120 = arith.index_cast %119 : i32 to index
    %c0_67 = arith.constant 0 : index
    %121 = vector.load %arg25[%120, %c0_67] : memref<16x8xf32, #tpu.memory_space<vmem>>, vector<8x8xf32>
    %122 = vector.shape_cast %117 : vector<8x8xf32> to vector<1x8x8xf32>
    %123 = vector.shape_cast %121 : vector<8x8xf32> to vector<1x8x8xf32>
    %124 = tpu.concatenate %122, %123 in 0 : vector<1x8x8xf32>, vector<1x8x8xf32> -> vector<2x8x8xf32>
    %125 = vector.shape_cast %91 : vector<2x8x32xf32> to vector<2x8x1x32xf32>
    %126 = vector.shape_cast %78 : vector<8x32xf32> to vector<1x1x8x32xf32>
    %127 = vector.broadcast %125 : vector<2x8x1x32xf32> to vector<2x8x8x32xf32>
    %128 = vector.broadcast %126 : vector<1x1x8x32xf32> to vector<2x8x8x32xf32>
    %129 = arith.mulf %127, %128 : vector<2x8x8x32xf32>
    %130 = math.exp %129 : vector<2x8x8x32xf32>
    %131 = vector.shape_cast %102 : vector<2x8x32xf32> to vector<2x8x1x32xf32>
    %132 = vector.shape_cast %113 : vector<2x8x8xf32> to vector<2x8x8x1xf32>
    %133 = vector.broadcast %131 : vector<2x8x1x32xf32> to vector<2x8x8x32xf32>
    %134 = vector.broadcast %132 : vector<2x8x8x1xf32> to vector<2x8x8x32xf32>
    %135 = arith.mulf %133, %134 : vector<2x8x8x32xf32>
    %136 = vector.shape_cast %124 : vector<2x8x8xf32> to vector<2x8x8x1xf32>
    %137 = vector.extract_strided_slice %130 {offsets = [0, 0, 0, 0], sizes = [2, 1, 8, 32], strides = [1, 1, 1, 1]} : vector<2x8x8x32xf32> to vector<2x1x8x32xf32>
    %138 = vector.shape_cast %137 : vector<2x1x8x32xf32> to vector<2x8x32xf32>
    %139 = arith.mulf %138, %79 : vector<2x8x32xf32>
    %140 = vector.extract_strided_slice %135 {offsets = [0, 0, 0, 0], sizes = [2, 1, 8, 32], strides = [1, 1, 1, 1]} : vector<2x8x8x32xf32> to vector<2x1x8x32xf32>
    %141 = vector.shape_cast %140 : vector<2x1x8x32xf32> to vector<2x8x32xf32>
    %142 = arith.addf %139, %141 : vector<2x8x32xf32>
    %143 = vector.extract_strided_slice %136 {offsets = [0, 0, 0, 0], sizes = [2, 1, 8, 1], strides = [1, 1, 1, 1]} : vector<2x8x8x1xf32> to vector<2x1x8x1xf32>
    %144 = vector.shape_cast %143 : vector<2x1x8x1xf32> to vector<2x8x1xf32>
    %145 = vector.broadcast %144 : vector<2x8x1xf32> to vector<2x8x32xf32>
    %146 = arith.mulf %142, %145 : vector<2x8x32xf32>
    %cst_68 = arith.constant dense<0.000000e+00> : vector<2x32xf32>
    %147 = vector.multi_reduction <add>, %146, %cst_68 [1] : vector<2x8x32xf32> to vector<2x32xf32>
    %148 = vector.extract_strided_slice %130 {offsets = [0, 1, 0, 0], sizes = [2, 1, 8, 32], strides = [1, 1, 1, 1]} : vector<2x8x8x32xf32> to vector<2x1x8x32xf32>
    %149 = vector.shape_cast %148 : vector<2x1x8x32xf32> to vector<2x8x32xf32>
    %150 = arith.mulf %149, %142 : vector<2x8x32xf32>
    %151 = vector.extract_strided_slice %135 {offsets = [0, 1, 0, 0], sizes = [2, 1, 8, 32], strides = [1, 1, 1, 1]} : vector<2x8x8x32xf32> to vector<2x1x8x32xf32>
    %152 = vector.shape_cast %151 : vector<2x1x8x32xf32> to vector<2x8x32xf32>
    %153 = arith.addf %150, %152 : vector<2x8x32xf32>
    %154 = vector.extract_strided_slice %136 {offsets = [0, 1, 0, 0], sizes = [2, 1, 8, 1], strides = [1, 1, 1, 1]} : vector<2x8x8x1xf32> to vector<2x1x8x1xf32>
    %155 = vector.shape_cast %154 : vector<2x1x8x1xf32> to vector<2x8x1xf32>
    %156 = vector.broadcast %155 : vector<2x8x1xf32> to vector<2x8x32xf32>
    %157 = arith.mulf %153, %156 : vector<2x8x32xf32>
    %cst_69 = arith.constant dense<0.000000e+00> : vector<2x32xf32>
    %158 = vector.multi_reduction <add>, %157, %cst_69 [1] : vector<2x8x32xf32> to vector<2x32xf32>
    %159 = vector.extract_strided_slice %130 {offsets = [0, 2, 0, 0], sizes = [2, 1, 8, 32], strides = [1, 1, 1, 1]} : vector<2x8x8x32xf32> to vector<2x1x8x32xf32>
    %160 = vector.shape_cast %159 : vector<2x1x8x32xf32> to vector<2x8x32xf32>
    %161 = arith.mulf %160, %153 : vector<2x8x32xf32>
    %162 = vector.extract_strided_slice %135 {offsets = [0, 2, 0, 0], sizes = [2, 1, 8, 32], strides = [1, 1, 1, 1]} : vector<2x8x8x32xf32> to vector<2x1x8x32xf32>
    %163 = vector.shape_cast %162 : vector<2x1x8x32xf32> to vector<2x8x32xf32>
    %164 = arith.addf %161, %163 : vector<2x8x32xf32>
    %165 = vector.extract_strided_slice %136 {offsets = [0, 2, 0, 0], sizes = [2, 1, 8, 1], strides = [1, 1, 1, 1]} : vector<2x8x8x1xf32> to vector<2x1x8x1xf32>
    %166 = vector.shape_cast %165 : vector<2x1x8x1xf32> to vector<2x8x1xf32>
    %167 = vector.broadcast %166 : vector<2x8x1xf32> to vector<2x8x32xf32>
    %168 = arith.mulf %164, %167 : vector<2x8x32xf32>
    %cst_70 = arith.constant dense<0.000000e+00> : vector<2x32xf32>
    %169 = vector.multi_reduction <add>, %168, %cst_70 [1] : vector<2x8x32xf32> to vector<2x32xf32>
    %170 = vector.extract_strided_slice %130 {offsets = [0, 3, 0, 0], sizes = [2, 1, 8, 32], strides = [1, 1, 1, 1]} : vector<2x8x8x32xf32> to vector<2x1x8x32xf32>
    %171 = vector.shape_cast %170 : vector<2x1x8x32xf32> to vector<2x8x32xf32>
    %172 = arith.mulf %171, %164 : vector<2x8x32xf32>
    %173 = vector.extract_strided_slice %135 {offsets = [0, 3, 0, 0], sizes = [2, 1, 8, 32], strides = [1, 1, 1, 1]} : vector<2x8x8x32xf32> to vector<2x1x8x32xf32>
    %174 = vector.shape_cast %173 : vector<2x1x8x32xf32> to vector<2x8x32xf32>
    %175 = arith.addf %172, %174 : vector<2x8x32xf32>
    %176 = vector.extract_strided_slice %136 {offsets = [0, 3, 0, 0], sizes = [2, 1, 8, 1], strides = [1, 1, 1, 1]} : vector<2x8x8x1xf32> to vector<2x1x8x1xf32>
    %177 = vector.shape_cast %176 : vector<2x1x8x1xf32> to vector<2x8x1xf32>
    %178 = vector.broadcast %177 : vector<2x8x1xf32> to vector<2x8x32xf32>
    %179 = arith.mulf %175, %178 : vector<2x8x32xf32>
    %cst_71 = arith.constant dense<0.000000e+00> : vector<2x32xf32>
    %180 = vector.multi_reduction <add>, %179, %cst_71 [1] : vector<2x8x32xf32> to vector<2x32xf32>
    %181 = vector.extract_strided_slice %130 {offsets = [0, 4, 0, 0], sizes = [2, 1, 8, 32], strides = [1, 1, 1, 1]} : vector<2x8x8x32xf32> to vector<2x1x8x32xf32>
    %182 = vector.shape_cast %181 : vector<2x1x8x32xf32> to vector<2x8x32xf32>
    %183 = arith.mulf %182, %175 : vector<2x8x32xf32>
    %184 = vector.extract_strided_slice %135 {offsets = [0, 4, 0, 0], sizes = [2, 1, 8, 32], strides = [1, 1, 1, 1]} : vector<2x8x8x32xf32> to vector<2x1x8x32xf32>
    %185 = vector.shape_cast %184 : vector<2x1x8x32xf32> to vector<2x8x32xf32>
    %186 = arith.addf %183, %185 : vector<2x8x32xf32>
    %187 = vector.extract_strided_slice %136 {offsets = [0, 4, 0, 0], sizes = [2, 1, 8, 1], strides = [1, 1, 1, 1]} : vector<2x8x8x1xf32> to vector<2x1x8x1xf32>
    %188 = vector.shape_cast %187 : vector<2x1x8x1xf32> to vector<2x8x1xf32>
    %189 = vector.broadcast %188 : vector<2x8x1xf32> to vector<2x8x32xf32>
    %190 = arith.mulf %186, %189 : vector<2x8x32xf32>
    %cst_72 = arith.constant dense<0.000000e+00> : vector<2x32xf32>
    %191 = vector.multi_reduction <add>, %190, %cst_72 [1] : vector<2x8x32xf32> to vector<2x32xf32>
    %192 = vector.extract_strided_slice %130 {offsets = [0, 5, 0, 0], sizes = [2, 1, 8, 32], strides = [1, 1, 1, 1]} : vector<2x8x8x32xf32> to vector<2x1x8x32xf32>
    %193 = vector.shape_cast %192 : vector<2x1x8x32xf32> to vector<2x8x32xf32>
    %194 = arith.mulf %193, %186 : vector<2x8x32xf32>
    %195 = vector.extract_strided_slice %135 {offsets = [0, 5, 0, 0], sizes = [2, 1, 8, 32], strides = [1, 1, 1, 1]} : vector<2x8x8x32xf32> to vector<2x1x8x32xf32>
    %196 = vector.shape_cast %195 : vector<2x1x8x32xf32> to vector<2x8x32xf32>
    %197 = arith.addf %194, %196 : vector<2x8x32xf32>
    %198 = vector.extract_strided_slice %136 {offsets = [0, 5, 0, 0], sizes = [2, 1, 8, 1], strides = [1, 1, 1, 1]} : vector<2x8x8x1xf32> to vector<2x1x8x1xf32>
    %199 = vector.shape_cast %198 : vector<2x1x8x1xf32> to vector<2x8x1xf32>
    %200 = vector.broadcast %199 : vector<2x8x1xf32> to vector<2x8x32xf32>
    %201 = arith.mulf %197, %200 : vector<2x8x32xf32>
    %cst_73 = arith.constant dense<0.000000e+00> : vector<2x32xf32>
    %202 = vector.multi_reduction <add>, %201, %cst_73 [1] : vector<2x8x32xf32> to vector<2x32xf32>
    %203 = vector.extract_strided_slice %130 {offsets = [0, 6, 0, 0], sizes = [2, 1, 8, 32], strides = [1, 1, 1, 1]} : vector<2x8x8x32xf32> to vector<2x1x8x32xf32>
    %204 = vector.shape_cast %203 : vector<2x1x8x32xf32> to vector<2x8x32xf32>
    %205 = arith.mulf %204, %197 : vector<2x8x32xf32>
    %206 = vector.extract_strided_slice %135 {offsets = [0, 6, 0, 0], sizes = [2, 1, 8, 32], strides = [1, 1, 1, 1]} : vector<2x8x8x32xf32> to vector<2x1x8x32xf32>
    %207 = vector.shape_cast %206 : vector<2x1x8x32xf32> to vector<2x8x32xf32>
    %208 = arith.addf %205, %207 : vector<2x8x32xf32>
    %209 = vector.extract_strided_slice %136 {offsets = [0, 6, 0, 0], sizes = [2, 1, 8, 1], strides = [1, 1, 1, 1]} : vector<2x8x8x1xf32> to vector<2x1x8x1xf32>
    %210 = vector.shape_cast %209 : vector<2x1x8x1xf32> to vector<2x8x1xf32>
    %211 = vector.broadcast %210 : vector<2x8x1xf32> to vector<2x8x32xf32>
    %212 = arith.mulf %208, %211 : vector<2x8x32xf32>
    %cst_74 = arith.constant dense<0.000000e+00> : vector<2x32xf32>
    %213 = vector.multi_reduction <add>, %212, %cst_74 [1] : vector<2x8x32xf32> to vector<2x32xf32>
    %214 = vector.extract_strided_slice %130 {offsets = [0, 7, 0, 0], sizes = [2, 1, 8, 32], strides = [1, 1, 1, 1]} : vector<2x8x8x32xf32> to vector<2x1x8x32xf32>
    %215 = vector.shape_cast %214 : vector<2x1x8x32xf32> to vector<2x8x32xf32>
    %216 = arith.mulf %215, %208 : vector<2x8x32xf32>
    %217 = vector.extract_strided_slice %135 {offsets = [0, 7, 0, 0], sizes = [2, 1, 8, 32], strides = [1, 1, 1, 1]} : vector<2x8x8x32xf32> to vector<2x1x8x32xf32>
    %218 = vector.shape_cast %217 : vector<2x1x8x32xf32> to vector<2x8x32xf32>
    %219 = arith.addf %216, %218 : vector<2x8x32xf32>
    %220 = vector.extract_strided_slice %136 {offsets = [0, 7, 0, 0], sizes = [2, 1, 8, 1], strides = [1, 1, 1, 1]} : vector<2x8x8x1xf32> to vector<2x1x8x1xf32>
    %221 = vector.shape_cast %220 : vector<2x1x8x1xf32> to vector<2x8x1xf32>
    %222 = vector.broadcast %221 : vector<2x8x1xf32> to vector<2x8x32xf32>
    %223 = arith.mulf %219, %222 : vector<2x8x32xf32>
    %cst_75 = arith.constant dense<0.000000e+00> : vector<2x32xf32>
    %224 = vector.multi_reduction <add>, %223, %cst_75 [1] : vector<2x8x32xf32> to vector<2x32xf32>
    %225 = vector.shape_cast %147 : vector<2x32xf32> to vector<2x1x32xf32>
    %226 = vector.shape_cast %158 : vector<2x32xf32> to vector<2x1x32xf32>
    %227 = vector.shape_cast %169 : vector<2x32xf32> to vector<2x1x32xf32>
    %228 = vector.shape_cast %180 : vector<2x32xf32> to vector<2x1x32xf32>
    %229 = vector.shape_cast %191 : vector<2x32xf32> to vector<2x1x32xf32>
    %230 = vector.shape_cast %202 : vector<2x32xf32> to vector<2x1x32xf32>
    %231 = vector.shape_cast %213 : vector<2x32xf32> to vector<2x1x32xf32>
    %232 = vector.shape_cast %224 : vector<2x32xf32> to vector<2x1x32xf32>
    %233 = tpu.concatenate %225, %226, %227, %228, %229, %230, %231, %232 in 1 : vector<2x1x32xf32>, vector<2x1x32xf32>, vector<2x1x32xf32>, vector<2x1x32xf32>, vector<2x1x32xf32>, vector<2x1x32xf32>, vector<2x1x32xf32>, vector<2x1x32xf32> -> vector<2x8x32xf32>
    %c0_i32_76 = arith.constant 0 : i32
    %234 = arith.addi %c0_i32_76, %80 : i32
    %235 = tpu.assume_multiple %234, 8 : i32
    %236 = vector.extract_strided_slice %233 {offsets = [0, 0, 0], sizes = [1, 8, 32], strides = [1, 1, 1]} : vector<2x8x32xf32> to vector<1x8x32xf32>
    %237 = vector.shape_cast %236 : vector<1x8x32xf32> to vector<8x32xf32>
    %238 = arith.index_cast %235 : i32 to index
    %c0_77 = arith.constant 0 : index
    %239 = vector.load %arg26[%238, %c0_77] : memref<16x32xf32, #tpu.memory_space<vmem>>, vector<8x32xf32>
    tpu.vector_store %arg26[%238, %c0_77], %237 {strides = array<i32>} : memref<16x32xf32, #tpu.memory_space<vmem>>, vector<8x32xf32>,
    %c8_i32_78 = arith.constant 8 : i32
    %240 = arith.addi %c8_i32_78, %80 : i32
    %241 = tpu.assume_multiple %240, 8 : i32
    %242 = vector.extract_strided_slice %233 {offsets = [1, 0, 0], sizes = [1, 8, 32], strides = [1, 1, 1]} : vector<2x8x32xf32> to vector<1x8x32xf32>
    %243 = vector.shape_cast %242 : vector<1x8x32xf32> to vector<8x32xf32>
    %244 = arith.index_cast %241 : i32 to index
    %c0_79 = arith.constant 0 : index
    %245 = vector.load %arg26[%244, %c0_79] : memref<16x32xf32, #tpu.memory_space<vmem>>, vector<8x32xf32>
    tpu.vector_store %arg26[%244, %c0_79], %243 {strides = array<i32>} : memref<16x32xf32, #tpu.memory_space<vmem>>, vector<8x32xf32>,
    %c1_i32 = arith.constant 1 : i32
    %c0_80 = arith.constant 0 : index
    %c0_81 = arith.constant 0 : index
    %246 = vector.load %arg26[%c0_80, %c0_81] : memref<16x32xf32, #tpu.memory_space<vmem>>, vector<16x32xf32>
    %c0_82 = arith.constant 0 : index
    %c0_83 = arith.constant 0 : index
    %247 = vector.load %arg17[%c0_82, %c0_83] : memref<1x32xf32, #tpu.memory_space<vmem>>, vector<1x32xf32>
    %248 = vector.broadcast %247 : vector<1x32xf32> to vector<16x32xf32>
    %249 = arith.mulf %248, %42 : vector<16x32xf32>
    %250 = arith.addf %246, %249 : vector<16x32xf32>
    %251 = arith.mulf %250, %17 : vector<16x32xf32>
    %252 = arith.truncf %251 : vector<16x32xf32> to vector<16x32xbf16>
    %c0_84 = arith.constant 0 : index
    %c0_85 = arith.constant 0 : index
    %253 = vector.load %arg18[%c0_84, %c0_85] : memref<32x32xbf16, #tpu.memory_space<vmem>>, vector<32x32xbf16>
    %cst_86 = arith.constant dense<0.000000e+00> : vector<16x32xf32>
    %254 = tpu.matmul %252, %253, %cst_86 {dimension_numbers = #tpu.dot_dimension_numbers<[1], [0], [0], [1], [0, 0, 1, 1], [], []>} : vector<16x32xbf16>, vector<32x32xbf16>, vector<16x32xf32> -> vector<16x32xf32>
    %c0_87 = arith.constant 0 : index
    %c0_88 = arith.constant 0 : index
    %255 = vector.load %arg19[%c0_87, %c0_88] : memref<1x32xf32, #tpu.memory_space<vmem>>, vector<1x32xf32>
    %256 = vector.broadcast %255 : vector<1x32xf32> to vector<16x32xf32>
    %257 = arith.addf %254, %256 : vector<16x32xf32>
    %258 = arith.addf %257, %0 : vector<16x32xf32>
    %c0_89 = arith.constant 0 : index
    %c0_90 = arith.constant 0 : index
    %259 = vector.load %arg21[%c0_89, %c0_90] : memref<16x32xf32, #tpu.memory_space<vmem>>, vector<16x32xf32>
    tpu.vector_store %arg21[%c0_89, %c0_90], %258 {strides = array<i32>} : memref<16x32xf32, #tpu.memory_space<vmem>>, vector<16x32xf32>,
    return
  }
  func.func @transform_0(%arg0: i32) -> (i32, i32) {
    %c0_i32 = arith.constant 0 : i32
    %c0_i32_0 = arith.constant 0 : i32
    return %arg0, %c0_i32 : i32, i32
  }
  func.func @transform_1(%arg0: i32) -> (i32, i32) {
    %c0_i32 = arith.constant 0 : i32
    %c0_i32_0 = arith.constant 0 : i32
    %c0_i32_1 = arith.constant 0 : i32
    return %c0_i32, %c0_i32_0 : i32, i32
  }
  func.func @transform_2(%arg0: i32) -> (i32, i32) {
    %c0_i32 = arith.constant 0 : i32
    %c0_i32_0 = arith.constant 0 : i32
    %c0_i32_1 = arith.constant 0 : i32
    return %c0_i32, %c0_i32_0 : i32, i32
  }
  func.func @transform_3(%arg0: i32) -> (i32, i32) {
    %c0_i32 = arith.constant 0 : i32
    %c0_i32_0 = arith.constant 0 : i32
    %c0_i32_1 = arith.constant 0 : i32
    return %c0_i32, %c0_i32_0 : i32, i32
  }
  func.func @transform_4(%arg0: i32) -> (i32, i32) {
    %c0_i32 = arith.constant 0 : i32
    %c0_i32_0 = arith.constant 0 : i32
    %c0_i32_1 = arith.constant 0 : i32
    return %c0_i32, %c0_i32_0 : i32, i32
  }
  func.func @transform_5(%arg0: i32) -> (i32, i32) {
    %c0_i32 = arith.constant 0 : i32
    %c0_i32_0 = arith.constant 0 : i32
    %c0_i32_1 = arith.constant 0 : i32
    return %c0_i32, %c0_i32_0 : i32, i32
  }
  func.func @transform_6(%arg0: i32) -> (i32, i32) {
    %c0_i32 = arith.constant 0 : i32
    %c0_i32_0 = arith.constant 0 : i32
    %c0_i32_1 = arith.constant 0 : i32
    return %c0_i32, %c0_i32_0 : i32, i32
  }
  func.func @transform_7(%arg0: i32) -> (i32, i32) {
    %c0_i32 = arith.constant 0 : i32
    %c0_i32_0 = arith.constant 0 : i32
    %c0_i32_1 = arith.constant 0 : i32
    return %c0_i32, %c0_i32_0 : i32, i32
  }
  func.func @transform_8(%arg0: i32) -> (i32, i32) {
    %c0_i32 = arith.constant 0 : i32
    %c0_i32_0 = arith.constant 0 : i32
    %c0_i32_1 = arith.constant 0 : i32
    return %c0_i32, %c0_i32_0 : i32, i32
  }
  func.func @transform_9(%arg0: i32) -> (i32, i32) {
    %c0_i32 = arith.constant 0 : i32
    %c0_i32_0 = arith.constant 0 : i32
    %c0_i32_1 = arith.constant 0 : i32
    return %c0_i32, %c0_i32_0 : i32, i32
  }
  func.func @transform_10(%arg0: i32) -> (i32, i32) {
    %c0_i32 = arith.constant 0 : i32
    %c0_i32_0 = arith.constant 0 : i32
    %c0_i32_1 = arith.constant 0 : i32
    return %c0_i32, %c0_i32_0 : i32, i32
  }
  func.func @transform_11(%arg0: i32) -> (i32, i32) {
    %c0_i32 = arith.constant 0 : i32
    %c0_i32_0 = arith.constant 0 : i32
    %c0_i32_1 = arith.constant 0 : i32
    return %c0_i32, %c0_i32_0 : i32, i32
  }
  func.func @transform_12(%arg0: i32) -> (i32, i32) {
    %c0_i32 = arith.constant 0 : i32
    %c0_i32_0 = arith.constant 0 : i32
    %c0_i32_1 = arith.constant 0 : i32
    return %c0_i32, %c0_i32_0 : i32, i32
  }
  func.func @transform_13(%arg0: i32) -> (i32, i32) {
    %c0_i32 = arith.constant 0 : i32
    %c0_i32_0 = arith.constant 0 : i32
    %c0_i32_1 = arith.constant 0 : i32
    return %c0_i32, %c0_i32_0 : i32, i32
  }
  func.func @transform_14(%arg0: i32) -> (i32, i32) {
    %c0_i32 = arith.constant 0 : i32
    %c0_i32_0 = arith.constant 0 : i32
    %c0_i32_1 = arith.constant 0 : i32
    return %c0_i32, %c0_i32_0 : i32, i32
  }
  func.func @transform_15(%arg0: i32) -> (i32, i32) {
    %c0_i32 = arith.constant 0 : i32
    %c0_i32_0 = arith.constant 0 : i32
    %c0_i32_1 = arith.constant 0 : i32
    return %c0_i32, %c0_i32_0 : i32, i32
  }
  func.func @transform_16(%arg0: i32) -> (i32, i32) {
    %c0_i32 = arith.constant 0 : i32
    %c0_i32_0 = arith.constant 0 : i32
    %c0_i32_1 = arith.constant 0 : i32
    return %c0_i32, %c0_i32_0 : i32, i32
  }
  func.func @transform_17(%arg0: i32) -> (i32, i32) {
    %c0_i32 = arith.constant 0 : i32
    %c0_i32_0 = arith.constant 0 : i32
    %c0_i32_1 = arith.constant 0 : i32
    return %c0_i32, %c0_i32_0 : i32, i32
  }
  func.func @transform_18(%arg0: i32) -> (i32, i32) {
    %c0_i32 = arith.constant 0 : i32
    %c0_i32_0 = arith.constant 0 : i32
    %c0_i32_1 = arith.constant 0 : i32
    return %c0_i32, %c0_i32_0 : i32, i32
  }
  func.func @transform_19(%arg0: i32) -> i32 {
    %c0_i32 = arith.constant 0 : i32
    %c0_i32_0 = arith.constant 0 : i32
    return %c0_i32 : i32
  }
  func.func @transform_20(%arg0: i32) -> (i32, i32) {
    %c0_i32 = arith.constant 0 : i32
    %c0_i32_0 = arith.constant 0 : i32
    return %arg0, %c0_i32 : i32, i32
  }
}

module attributes {stable_mosaic.version = 11 : i64} {
  func.func @encoder_layer_kernel(%arg0: i32, %arg1: memref<16x32xf32, #tpu.memory_space<vmem>>, %arg2: memref<32x32xbf16, #tpu.memory_space<vmem>>, %arg3: memref<1x32xf32, #tpu.memory_space<vmem>>, %arg4: memref<32x32xbf16, #tpu.memory_space<vmem>>, %arg5: memref<1x32xf32, #tpu.memory_space<vmem>>, %arg6: memref<32x32xbf16, #tpu.memory_space<vmem>>, %arg7: memref<1x32xf32, #tpu.memory_space<vmem>>, %arg8: memref<32x8xf32, #tpu.memory_space<vmem>>, %arg9: memref<1x8xf32, #tpu.memory_space<vmem>>, %arg10: memref<32x8xf32, #tpu.memory_space<vmem>>, %arg11: memref<1x8xf32, #tpu.memory_space<vmem>>, %arg12: memref<32x8xf32, #tpu.memory_space<vmem>>, %arg13: memref<1x8xf32, #tpu.memory_space<vmem>>, %arg14: memref<8x32xf32, #tpu.memory_space<vmem>>, %arg15: memref<1x32xf32, #tpu.memory_space<vmem>>, %arg16: memref<8x32xf32, #tpu.memory_space<vmem>>, %arg17: memref<1x32xf32, #tpu.memory_space<vmem>>, %arg18: memref<32x32xbf16, #tpu.memory_space<vmem>>, %arg19: memref<1x32xf32, #tpu.memory_space<vmem>>, %arg20: memref<4xf32, #tpu.memory_space<smem>>, %arg21: memref<16x32xf32, #tpu.memory_space<vmem>>, %arg22: memref<16x32xf32, #tpu.memory_space<vmem>>, %arg23: memref<16x32xf32, #tpu.memory_space<vmem>>, %arg24: memref<16x8xf32, #tpu.memory_space<vmem>>, %arg25: memref<16x8xf32, #tpu.memory_space<vmem>>, %arg26: memref<16x32xf32, #tpu.memory_space<vmem>>) attributes {dimension_semantics = [#tpu.dimension_semantics<parallel>], iteration_bounds = array<i64: 1>, scalar_prefetch = 0 : i64, scratch_operands = 5 : i64, tpu.core_type = #tpu.core_type<tc>, window_params = [{transform_indices = @transform_0, window_bounds = array<i64: 16, 32>}, {pipeline_mode = #tpu.pipeline_mode<synchronous>, transform_indices = @transform_1, window_bounds = array<i64: 32, 32>}, {pipeline_mode = #tpu.pipeline_mode<synchronous>, transform_indices = @transform_2, window_bounds = array<i64: 1, 32>}, {pipeline_mode = #tpu.pipeline_mode<synchronous>, transform_indices = @transform_3, window_bounds = array<i64: 32, 32>}, {pipeline_mode = #tpu.pipeline_mode<synchronous>, transform_indices = @transform_4, window_bounds = array<i64: 1, 32>}, {pipeline_mode = #tpu.pipeline_mode<synchronous>, transform_indices = @transform_5, window_bounds = array<i64: 32, 32>}, {pipeline_mode = #tpu.pipeline_mode<synchronous>, transform_indices = @transform_6, window_bounds = array<i64: 1, 32>}, {pipeline_mode = #tpu.pipeline_mode<synchronous>, transform_indices = @transform_7, window_bounds = array<i64: 32, 8>}, {pipeline_mode = #tpu.pipeline_mode<synchronous>, transform_indices = @transform_8, window_bounds = array<i64: 1, 8>}, {pipeline_mode = #tpu.pipeline_mode<synchronous>, transform_indices = @transform_9, window_bounds = array<i64: 32, 8>}, {pipeline_mode = #tpu.pipeline_mode<synchronous>, transform_indices = @transform_10, window_bounds = array<i64: 1, 8>}, {pipeline_mode = #tpu.pipeline_mode<synchronous>, transform_indices = @transform_11, window_bounds = array<i64: 32, 8>}, {pipeline_mode = #tpu.pipeline_mode<synchronous>, transform_indices = @transform_12, window_bounds = array<i64: 1, 8>}, {pipeline_mode = #tpu.pipeline_mode<synchronous>, transform_indices = @transform_13, window_bounds = array<i64: 8, 32>}, {pipeline_mode = #tpu.pipeline_mode<synchronous>, transform_indices = @transform_14, window_bounds = array<i64: 1, 32>}, {pipeline_mode = #tpu.pipeline_mode<synchronous>, transform_indices = @transform_15, window_bounds = array<i64: 8, 32>}, {pipeline_mode = #tpu.pipeline_mode<synchronous>, transform_indices = @transform_16, window_bounds = array<i64: 1, 32>}, {pipeline_mode = #tpu.pipeline_mode<synchronous>, transform_indices = @transform_17, window_bounds = array<i64: 32, 32>}, {pipeline_mode = #tpu.pipeline_mode<synchronous>, transform_indices = @transform_18, window_bounds = array<i64: 1, 32>}, {transform_indices = @transform_19, window_bounds = array<i64: 4>}, {transform_indices = @transform_20, window_bounds = array<i64: 16, 32>}]} {
    %c0 = arith.constant 0 : index
    %c0_0 = arith.constant 0 : index
    %0 = vector.load %arg1[%c0, %c0_0] : memref<16x32xf32, #tpu.memory_space<vmem>>, vector<16x32xf32>
    %1 = arith.truncf %0 : vector<16x32xf32> to vector<16x32xbf16>
    %c0_1 = arith.constant 0 : index
    %2 = memref.load %arg20[%c0_1] : memref<4xf32, #tpu.memory_space<smem>>
    %c1 = arith.constant 1 : index
    %3 = memref.load %arg20[%c1] : memref<4xf32, #tpu.memory_space<smem>>
    %c2 = arith.constant 2 : index
    %4 = memref.load %arg20[%c2] : memref<4xf32, #tpu.memory_space<smem>>
    %c3 = arith.constant 3 : index
    %5 = memref.load %arg20[%c3] : memref<4xf32, #tpu.memory_space<smem>>
    %c0_2 = arith.constant 0 : index
    %c0_3 = arith.constant 0 : index
    %6 = vector.load %arg2[%c0_2, %c0_3] : memref<32x32xbf16, #tpu.memory_space<vmem>>, vector<32x32xbf16>
    %cst = arith.constant dense<0.000000e+00> : vector<16x32xf32>
    %7 = tpu.matmul %1, %6, %cst {dimension_numbers = #tpu.dot_dimension_numbers<[1], [0], [0], [1], [0, 0, 1, 1], [], []>} : vector<16x32xbf16>, vector<32x32xbf16>, vector<16x32xf32> -> vector<16x32xf32>
    %c0_4 = arith.constant 0 : index
    %c0_5 = arith.constant 0 : index
    %8 = vector.load %arg3[%c0_4, %c0_5] : memref<1x32xf32, #tpu.memory_space<vmem>>, vector<1x32xf32>
    %9 = vector.broadcast %8 : vector<1x32xf32> to vector<16x32xf32>
    %10 = arith.addf %7, %9 : vector<16x32xf32>
    %11 = math.sin %10 : vector<16x32xf32>
    %12 = vector.broadcast %2 : f32 to vector<16x32xf32>
    %13 = arith.mulf %12, %11 : vector<16x32xf32>
    %14 = math.cos %10 : vector<16x32xf32>
    %15 = vector.broadcast %3 : f32 to vector<16x32xf32>
    %16 = arith.mulf %15, %14 : vector<16x32xf32>
    %17 = arith.addf %13, %16 : vector<16x32xf32>
    %c0_6 = arith.constant 0 : index
    %c0_7 = arith.constant 0 : index
    %18 = vector.load %arg4[%c0_6, %c0_7] : memref<32x32xbf16, #tpu.memory_space<vmem>>, vector<32x32xbf16>
    %cst_8 = arith.constant dense<0.000000e+00> : vector<16x32xf32>
    %19 = tpu.matmul %1, %18, %cst_8 {dimension_numbers = #tpu.dot_dimension_numbers<[1], [0], [0], [1], [0, 0, 1, 1], [], []>} : vector<16x32xbf16>, vector<32x32xbf16>, vector<16x32xf32> -> vector<16x32xf32>
    %c0_9 = arith.constant 0 : index
    %c0_10 = arith.constant 0 : index
    %20 = vector.load %arg5[%c0_9, %c0_10] : memref<1x32xf32, #tpu.memory_space<vmem>>, vector<1x32xf32>
    %21 = vector.broadcast %20 : vector<1x32xf32> to vector<16x32xf32>
    %22 = arith.addf %19, %21 : vector<16x32xf32>
    %23 = arith.truncf %22 : vector<16x32xf32> to vector<16x32xbf16>
    %c0_11 = arith.constant 0 : index
    %c0_12 = arith.constant 0 : index
    %24 = vector.load %arg6[%c0_11, %c0_12] : memref<32x32xbf16, #tpu.memory_space<vmem>>, vector<32x32xbf16>
    %cst_13 = arith.constant dense<0.000000e+00> : vector<16x32xf32>
    %25 = tpu.matmul %23, %24, %cst_13 {dimension_numbers = #tpu.dot_dimension_numbers<[1], [0], [0], [1], [0, 0, 1, 1], [], []>} : vector<16x32xbf16>, vector<32x32xbf16>, vector<16x32xf32> -> vector<16x32xf32>
    %c0_14 = arith.constant 0 : index
    %c0_15 = arith.constant 0 : index
    %26 = vector.load %arg7[%c0_14, %c0_15] : memref<1x32xf32, #tpu.memory_space<vmem>>, vector<1x32xf32>
    %27 = vector.broadcast %26 : vector<1x32xf32> to vector<16x32xf32>
    %28 = arith.addf %25, %27 : vector<16x32xf32>
    %cst_16 = arith.constant 2.000000e+01 : f32
    %29 = vector.broadcast %cst_16 : f32 to vector<16x32xf32>
    %30 = arith.cmpf ogt, %28, %29 : vector<16x32xf32>
    %cst_17 = arith.constant 2.000000e+01 : f32
    %31 = vector.broadcast %cst_17 : f32 to vector<16x32xf32>
    %32 = arith.minimumf %28, %31 : vector<16x32xf32>
    %33 = math.exp %32 : vector<16x32xf32>
    %34 = math.log1p %33 : vector<16x32xf32>
    %35 = arith.select %30, %28, %34 : vector<16x32xi1>, vector<16x32xf32>
    %36 = math.sin %35 : vector<16x32xf32>
    %37 = vector.broadcast %4 : f32 to vector<16x32xf32>
    %38 = arith.mulf %37, %36 : vector<16x32xf32>
    %39 = math.cos %35 : vector<16x32xf32>
    %40 = vector.broadcast %5 : f32 to vector<16x32xf32>
    %41 = arith.mulf %40, %39 : vector<16x32xf32>
    %42 = arith.addf %38, %41 : vector<16x32xf32>
    %c0_18 = arith.constant 0 : index
    %c0_19 = arith.constant 0 : index
    %43 = vector.load %arg8[%c0_18, %c0_19] : memref<32x8xf32, #tpu.memory_space<vmem>>, vector<32x8xf32>
    %cst_20 = arith.constant dense<0.000000e+00> : vector<16x8xf32>
    %44 = tpu.matmul %42, %43, %cst_20 {dimension_numbers = #tpu.dot_dimension_numbers<[1], [0], [0], [1], [0, 0, 1, 1], [], []>} : vector<16x32xf32>, vector<32x8xf32>, vector<16x8xf32> -> vector<16x8xf32>
    %c0_21 = arith.constant 0 : index
    %c0_22 = arith.constant 0 : index
    %45 = vector.load %arg9[%c0_21, %c0_22] : memref<1x8xf32, #tpu.memory_space<vmem>>, vector<1x8xf32>
    %46 = vector.broadcast %45 : vector<1x8xf32> to vector<16x8xf32>
    %47 = arith.addf %44, %46 : vector<16x8xf32>
    %c0_23 = arith.constant 0 : index
    %c0_24 = arith.constant 0 : index
    %48 = vector.load %arg10[%c0_23, %c0_24] : memref<32x8xf32, #tpu.memory_space<vmem>>, vector<32x8xf32>
    %cst_25 = arith.constant dense<0.000000e+00> : vector<16x8xf32>
    %49 = tpu.matmul %42, %48, %cst_25 {dimension_numbers = #tpu.dot_dimension_numbers<[1], [0], [0], [1], [0, 0, 1, 1], [], []>} : vector<16x32xf32>, vector<32x8xf32>, vector<16x8xf32> -> vector<16x8xf32>
    %c0_26 = arith.constant 0 : index
    %c0_27 = arith.constant 0 : index
    %50 = vector.load %arg11[%c0_26, %c0_27] : memref<1x8xf32, #tpu.memory_space<vmem>>, vector<1x8xf32>
    %51 = vector.broadcast %50 : vector<1x8xf32> to vector<16x8xf32>
    %52 = arith.addf %49, %51 : vector<16x8xf32>
    %c0_28 = arith.constant 0 : index
    %c0_29 = arith.constant 0 : index
    %53 = vector.load %arg12[%c0_28, %c0_29] : memref<32x8xf32, #tpu.memory_space<vmem>>, vector<32x8xf32>
    %cst_30 = arith.constant dense<0.000000e+00> : vector<16x8xf32>
    %54 = tpu.matmul %42, %53, %cst_30 {dimension_numbers = #tpu.dot_dimension_numbers<[1], [0], [0], [1], [0, 0, 1, 1], [], []>} : vector<16x32xf32>, vector<32x8xf32>, vector<16x8xf32> -> vector<16x8xf32>
    %c0_31 = arith.constant 0 : index
    %c0_32 = arith.constant 0 : index
    %55 = vector.load %arg13[%c0_31, %c0_32] : memref<1x8xf32, #tpu.memory_space<vmem>>, vector<1x8xf32>
    %56 = vector.broadcast %55 : vector<1x8xf32> to vector<16x8xf32>
    %57 = arith.addf %54, %56 : vector<16x8xf32>
    %c0_33 = arith.constant 0 : index
    %c0_34 = arith.constant 0 : index
    %58 = vector.load %arg14[%c0_33, %c0_34] : memref<8x32xf32, #tpu.memory_space<vmem>>, vector<8x32xf32>
    %cst_35 = arith.constant dense<0.000000e+00> : vector<16x32xf32>
    %59 = tpu.matmul %47, %58, %cst_35 {dimension_numbers = #tpu.dot_dimension_numbers<[1], [0], [0], [1], [0, 0, 1, 1], [], []>} : vector<16x8xf32>, vector<8x32xf32>, vector<16x32xf32> -> vector<16x32xf32>
    %c0_36 = arith.constant 0 : index
    %c0_37 = arith.constant 0 : index
    %60 = vector.load %arg15[%c0_36, %c0_37] : memref<1x32xf32, #tpu.memory_space<vmem>>, vector<1x32xf32>
    %61 = vector.broadcast %60 : vector<1x32xf32> to vector<16x32xf32>
    %62 = arith.addf %59, %61 : vector<16x32xf32>
    %cst_38 = arith.constant 2.000000e+01 : f32
    %63 = vector.broadcast %cst_38 : f32 to vector<16x32xf32>
    %64 = arith.cmpf ogt, %62, %63 : vector<16x32xf32>
    %cst_39 = arith.constant 2.000000e+01 : f32
    %65 = vector.broadcast %cst_39 : f32 to vector<16x32xf32>
    %66 = arith.minimumf %62, %65 : vector<16x32xf32>
    %67 = math.exp %66 : vector<16x32xf32>
    %68 = math.log1p %67 : vector<16x32xf32>
    %69 = arith.select %64, %62, %68 : vector<16x32xi1>, vector<16x32xf32>
    %c0_40 = arith.constant 0 : index
    %c0_41 = arith.constant 0 : index
    %70 = vector.load %arg22[%c0_40, %c0_41] : memref<16x32xf32, #tpu.memory_space<vmem>>, vector<16x32xf32>
    tpu.vector_store %arg22[%c0_40, %c0_41], %69 {strides = array<i32>} : memref<16x32xf32, #tpu.memory_space<vmem>>, vector<16x32xf32>,
    %71 = arith.mulf %69, %42 : vector<16x32xf32>
    %c0_42 = arith.constant 0 : index
    %c0_43 = arith.constant 0 : index
    %72 = vector.load %arg23[%c0_42, %c0_43] : memref<16x32xf32, #tpu.memory_space<vmem>>, vector<16x32xf32>
    tpu.vector_store %arg23[%c0_42, %c0_43], %71 {strides = array<i32>} : memref<16x32xf32, #tpu.memory_space<vmem>>, vector<16x32xf32>,
    %c0_44 = arith.constant 0 : index
    %c0_45 = arith.constant 0 : index
    %73 = vector.load %arg24[%c0_44, %c0_45] : memref<16x8xf32, #tpu.memory_space<vmem>>, vector<16x8xf32>
    tpu.vector_store %arg24[%c0_44, %c0_45], %52 {strides = array<i32>} : memref<16x8xf32, #tpu.memory_space<vmem>>, vector<16x8xf32>,
    %c0_46 = arith.constant 0 : index
    %c0_47 = arith.constant 0 : index
    %74 = vector.load %arg25[%c0_46, %c0_47] : memref<16x8xf32, #tpu.memory_space<vmem>>, vector<16x8xf32>
    tpu.vector_store %arg25[%c0_46, %c0_47], %57 {strides = array<i32>} : memref<16x8xf32, #tpu.memory_space<vmem>>, vector<16x8xf32>,
    %c0_48 = arith.constant 0 : index
    %c0_49 = arith.constant 0 : index
    %75 = vector.load %arg16[%c0_48, %c0_49] : memref<8x32xf32, #tpu.memory_space<vmem>>, vector<8x32xf32>
    %76 = math.exp %75 : vector<8x32xf32>
    %cst_50 = arith.constant 0.000000e+00 : f32
    %77 = vector.broadcast %cst_50 : f32 to vector<8x32xf32>
    %78 = arith.subf %77, %76 : vector<8x32xf32>
    %cst_51 = arith.constant 0.000000e+00 : f32
    %79 = vector.broadcast %cst_51 : f32 to vector<2x8x32xf32>
    %c0_i32 = arith.constant 0 : i32
    %c8_i32 = arith.constant 8 : i32
    %80 = arith.muli %c0_i32, %c8_i32 : i32
    %c0_i32_52 = arith.constant 0 : i32
    %81 = arith.addi %c0_i32_52, %80 : i32
    %82 = tpu.assume_multiple %81, 8 : i32
    %83 = arith.index_cast %82 : i32 to index
    %c0_53 = arith.constant 0 : index
    %84 = vector.load %arg22[%83, %c0_53] : memref<16x32xf32, #tpu.memory_space<vmem>>, vector<8x32xf32>
    %c8_i32_54 = arith.constant 8 : i32
    %85 = arith.addi %c8_i32_54, %80 : i32
    %86 = tpu.assume_multiple %85, 8 : i32
    %87 = arith.index_cast %86 : i32 to index
    %c0_55 = arith.constant 0 : index
    %88 = vector.load %arg22[%87, %c0_55] : memref<16x32xf32, #tpu.memory_space<vmem>>, vector<8x32xf32>
    %89 = vector.shape_cast %84 : vector<8x32xf32> to vector<1x8x32xf32>
    %90 = vector.shape_cast %88 : vector<8x32xf32> to vector<1x8x32xf32>
    %91 = tpu.concatenate %89, %90 in 0 : vector<1x8x32xf32>, vector<1x8x32xf32> -> vector<2x8x32xf32>
    %c0_i32_56 = arith.constant 0 : i32
    %92 = arith.addi %c0_i32_56, %80 : i32
    %93 = tpu.assume_multiple %92, 8 : i32
    %94 = arith.index_cast %93 : i32 to index
    %c0_57 = arith.constant 0 : index
    %95 = vector.load %arg23[%94, %c0_57] : memref<16x32xf32, #tpu.memory_space<vmem>>, vector<8x32xf32>
    %c8_i32_58 = arith.constant 8 : i32
    %96 = arith.addi %c8_i32_58, %80 : i32
    %97 = tpu.assume_multiple %96, 8 : i32
    %98 = arith.index_cast %97 : i32 to index
    %c0_59 = arith.constant 0 : index
    %99 = vector.load %arg23[%98, %c0_59] : memref<16x32xf32, #tpu.memory_space<vmem>>, vector<8x32xf32>
    %100 = vector.shape_cast %95 : vector<8x32xf32> to vector<1x8x32xf32>
    %101 = vector.shape_cast %99 : vector<8x32xf32> to vector<1x8x32xf32>
    %102 = tpu.concatenate %100, %101 in 0 : vector<1x8x32xf32>, vector<1x8x32xf32> -> vector<2x8x32xf32>
    %c0_i32_60 = arith.constant 0 : i32
    %103 = arith.addi %c0_i32_60, %80 : i32
    %104 = tpu.assume_multiple %103, 8 : i32
    %105 = arith.index_cast %104 : i32 to index
    %c0_61 = arith.constant 0 : index
    %106 = vector.load %arg24[%105, %c0_61] : memref<16x8xf32, #tpu.memory_space<vmem>>, vector<8x8xf32>
    %c8_i32_62 = arith.constant 8 : i32
    %107 = arith.addi %c8_i32_62, %80 : i32
    %108 = tpu.assume_multiple %107, 8 : i32
    %109 = arith.index_cast %108 : i32 to index
    %c0_63 = arith.constant 0 : index
    %110 = vector.load %arg24[%109, %c0_63] : memref<16x8xf32, #tpu.memory_space<vmem>>, vector<8x8xf32>
    %111 = vector.shape_cast %106 : vector<8x8xf32> to vector<1x8x8xf32>
    %112 = vector.shape_cast %110 : vector<8x8xf32> to vector<1x8x8xf32>
    %113 = tpu.concatenate %111, %112 in 0 : vector<1x8x8xf32>, vector<1x8x8xf32> -> vector<2x8x8xf32>
    %c0_i32_64 = arith.constant 0 : i32
    %114 = arith.addi %c0_i32_64, %80 : i32
    %115 = tpu.assume_multiple %114, 8 : i32
    %116 = arith.index_cast %115 : i32 to index
    %c0_65 = arith.constant 0 : index
    %117 = vector.load %arg25[%116, %c0_65] : memref<16x8xf32, #tpu.memory_space<vmem>>, vector<8x8xf32>
    %c8_i32_66 = arith.constant 8 : i32
    %118 = arith.addi %c8_i32_66, %80 : i32
    %119 = tpu.assume_multiple %118, 8 : i32
    %120 = arith.index_cast %119 : i32 to index
    %c0_67 = arith.constant 0 : index
    %121 = vector.load %arg25[%120, %c0_67] : memref<16x8xf32, #tpu.memory_space<vmem>>, vector<8x8xf32>
    %122 = vector.shape_cast %117 : vector<8x8xf32> to vector<1x8x8xf32>
    %123 = vector.shape_cast %121 : vector<8x8xf32> to vector<1x8x8xf32>
    %124 = tpu.concatenate %122, %123 in 0 : vector<1x8x8xf32>, vector<1x8x8xf32> -> vector<2x8x8xf32>
    %125 = vector.shape_cast %91 : vector<2x8x32xf32> to vector<2x8x1x32xf32>
    %126 = vector.shape_cast %78 : vector<8x32xf32> to vector<1x1x8x32xf32>
    %127 = vector.broadcast %125 : vector<2x8x1x32xf32> to vector<2x8x8x32xf32>
    %128 = vector.broadcast %126 : vector<1x1x8x32xf32> to vector<2x8x8x32xf32>
    %129 = arith.mulf %127, %128 : vector<2x8x8x32xf32>
    %130 = math.exp %129 : vector<2x8x8x32xf32>
    %131 = vector.shape_cast %102 : vector<2x8x32xf32> to vector<2x8x1x32xf32>
    %132 = vector.shape_cast %113 : vector<2x8x8xf32> to vector<2x8x8x1xf32>
    %133 = vector.broadcast %131 : vector<2x8x1x32xf32> to vector<2x8x8x32xf32>
    %134 = vector.broadcast %132 : vector<2x8x8x1xf32> to vector<2x8x8x32xf32>
    %135 = arith.mulf %133, %134 : vector<2x8x8x32xf32>
    %136 = vector.shape_cast %124 : vector<2x8x8xf32> to vector<2x8x8x1xf32>
    %137 = vector.extract_strided_slice %130 {offsets = [0, 0, 0, 0], sizes = [2, 1, 8, 32], strides = [1, 1, 1, 1]} : vector<2x8x8x32xf32> to vector<2x1x8x32xf32>
    %138 = vector.shape_cast %137 : vector<2x1x8x32xf32> to vector<2x8x32xf32>
    %139 = arith.mulf %138, %79 : vector<2x8x32xf32>
    %140 = vector.extract_strided_slice %135 {offsets = [0, 0, 0, 0], sizes = [2, 1, 8, 32], strides = [1, 1, 1, 1]} : vector<2x8x8x32xf32> to vector<2x1x8x32xf32>
    %141 = vector.shape_cast %140 : vector<2x1x8x32xf32> to vector<2x8x32xf32>
    %142 = arith.addf %139, %141 : vector<2x8x32xf32>
    %143 = vector.extract_strided_slice %136 {offsets = [0, 0, 0, 0], sizes = [2, 1, 8, 1], strides = [1, 1, 1, 1]} : vector<2x8x8x1xf32> to vector<2x1x8x1xf32>
    %144 = vector.shape_cast %143 : vector<2x1x8x1xf32> to vector<2x8x1xf32>
    %145 = vector.broadcast %144 : vector<2x8x1xf32> to vector<2x8x32xf32>
    %146 = arith.mulf %142, %145 : vector<2x8x32xf32>
    %cst_68 = arith.constant dense<0.000000e+00> : vector<2x32xf32>
    %147 = vector.multi_reduction <add>, %146, %cst_68 [1] : vector<2x8x32xf32> to vector<2x32xf32>
    %148 = vector.extract_strided_slice %130 {offsets = [0, 1, 0, 0], sizes = [2, 1, 8, 32], strides = [1, 1, 1, 1]} : vector<2x8x8x32xf32> to vector<2x1x8x32xf32>
    %149 = vector.shape_cast %148 : vector<2x1x8x32xf32> to vector<2x8x32xf32>
    %150 = arith.mulf %149, %142 : vector<2x8x32xf32>
    %151 = vector.extract_strided_slice %135 {offsets = [0, 1, 0, 0], sizes = [2, 1, 8, 32], strides = [1, 1, 1, 1]} : vector<2x8x8x32xf32> to vector<2x1x8x32xf32>
    %152 = vector.shape_cast %151 : vector<2x1x8x32xf32> to vector<2x8x32xf32>
    %153 = arith.addf %150, %152 : vector<2x8x32xf32>
    %154 = vector.extract_strided_slice %136 {offsets = [0, 1, 0, 0], sizes = [2, 1, 8, 1], strides = [1, 1, 1, 1]} : vector<2x8x8x1xf32> to vector<2x1x8x1xf32>
    %155 = vector.shape_cast %154 : vector<2x1x8x1xf32> to vector<2x8x1xf32>
    %156 = vector.broadcast %155 : vector<2x8x1xf32> to vector<2x8x32xf32>
    %157 = arith.mulf %153, %156 : vector<2x8x32xf32>
    %cst_69 = arith.constant dense<0.000000e+00> : vector<2x32xf32>
    %158 = vector.multi_reduction <add>, %157, %cst_69 [1] : vector<2x8x32xf32> to vector<2x32xf32>
    %159 = vector.extract_strided_slice %130 {offsets = [0, 2, 0, 0], sizes = [2, 1, 8, 32], strides = [1, 1, 1, 1]} : vector<2x8x8x32xf32> to vector<2x1x8x32xf32>
    %160 = vector.shape_cast %159 : vector<2x1x8x32xf32> to vector<2x8x32xf32>
    %161 = arith.mulf %160, %153 : vector<2x8x32xf32>
    %162 = vector.extract_strided_slice %135 {offsets = [0, 2, 0, 0], sizes = [2, 1, 8, 32], strides = [1, 1, 1, 1]} : vector<2x8x8x32xf32> to vector<2x1x8x32xf32>
    %163 = vector.shape_cast %162 : vector<2x1x8x32xf32> to vector<2x8x32xf32>
    %164 = arith.addf %161, %163 : vector<2x8x32xf32>
    %165 = vector.extract_strided_slice %136 {offsets = [0, 2, 0, 0], sizes = [2, 1, 8, 1], strides = [1, 1, 1, 1]} : vector<2x8x8x1xf32> to vector<2x1x8x1xf32>
    %166 = vector.shape_cast %165 : vector<2x1x8x1xf32> to vector<2x8x1xf32>
    %167 = vector.broadcast %166 : vector<2x8x1xf32> to vector<2x8x32xf32>
    %168 = arith.mulf %164, %167 : vector<2x8x32xf32>
    %cst_70 = arith.constant dense<0.000000e+00> : vector<2x32xf32>
    %169 = vector.multi_reduction <add>, %168, %cst_70 [1] : vector<2x8x32xf32> to vector<2x32xf32>
    %170 = vector.extract_strided_slice %130 {offsets = [0, 3, 0, 0], sizes = [2, 1, 8, 32], strides = [1, 1, 1, 1]} : vector<2x8x8x32xf32> to vector<2x1x8x32xf32>
    %171 = vector.shape_cast %170 : vector<2x1x8x32xf32> to vector<2x8x32xf32>
    %172 = arith.mulf %171, %164 : vector<2x8x32xf32>
    %173 = vector.extract_strided_slice %135 {offsets = [0, 3, 0, 0], sizes = [2, 1, 8, 32], strides = [1, 1, 1, 1]} : vector<2x8x8x32xf32> to vector<2x1x8x32xf32>
    %174 = vector.shape_cast %173 : vector<2x1x8x32xf32> to vector<2x8x32xf32>
    %175 = arith.addf %172, %174 : vector<2x8x32xf32>
    %176 = vector.extract_strided_slice %136 {offsets = [0, 3, 0, 0], sizes = [2, 1, 8, 1], strides = [1, 1, 1, 1]} : vector<2x8x8x1xf32> to vector<2x1x8x1xf32>
    %177 = vector.shape_cast %176 : vector<2x1x8x1xf32> to vector<2x8x1xf32>
    %178 = vector.broadcast %177 : vector<2x8x1xf32> to vector<2x8x32xf32>
    %179 = arith.mulf %175, %178 : vector<2x8x32xf32>
    %cst_71 = arith.constant dense<0.000000e+00> : vector<2x32xf32>
    %180 = vector.multi_reduction <add>, %179, %cst_71 [1] : vector<2x8x32xf32> to vector<2x32xf32>
    %181 = vector.extract_strided_slice %130 {offsets = [0, 4, 0, 0], sizes = [2, 1, 8, 32], strides = [1, 1, 1, 1]} : vector<2x8x8x32xf32> to vector<2x1x8x32xf32>
    %182 = vector.shape_cast %181 : vector<2x1x8x32xf32> to vector<2x8x32xf32>
    %183 = arith.mulf %182, %175 : vector<2x8x32xf32>
    %184 = vector.extract_strided_slice %135 {offsets = [0, 4, 0, 0], sizes = [2, 1, 8, 32], strides = [1, 1, 1, 1]} : vector<2x8x8x32xf32> to vector<2x1x8x32xf32>
    %185 = vector.shape_cast %184 : vector<2x1x8x32xf32> to vector<2x8x32xf32>
    %186 = arith.addf %183, %185 : vector<2x8x32xf32>
    %187 = vector.extract_strided_slice %136 {offsets = [0, 4, 0, 0], sizes = [2, 1, 8, 1], strides = [1, 1, 1, 1]} : vector<2x8x8x1xf32> to vector<2x1x8x1xf32>
    %188 = vector.shape_cast %187 : vector<2x1x8x1xf32> to vector<2x8x1xf32>
    %189 = vector.broadcast %188 : vector<2x8x1xf32> to vector<2x8x32xf32>
    %190 = arith.mulf %186, %189 : vector<2x8x32xf32>
    %cst_72 = arith.constant dense<0.000000e+00> : vector<2x32xf32>
    %191 = vector.multi_reduction <add>, %190, %cst_72 [1] : vector<2x8x32xf32> to vector<2x32xf32>
    %192 = vector.extract_strided_slice %130 {offsets = [0, 5, 0, 0], sizes = [2, 1, 8, 32], strides = [1, 1, 1, 1]} : vector<2x8x8x32xf32> to vector<2x1x8x32xf32>
    %193 = vector.shape_cast %192 : vector<2x1x8x32xf32> to vector<2x8x32xf32>
    %194 = arith.mulf %193, %186 : vector<2x8x32xf32>
    %195 = vector.extract_strided_slice %135 {offsets = [0, 5, 0, 0], sizes = [2, 1, 8, 32], strides = [1, 1, 1, 1]} : vector<2x8x8x32xf32> to vector<2x1x8x32xf32>
    %196 = vector.shape_cast %195 : vector<2x1x8x32xf32> to vector<2x8x32xf32>
    %197 = arith.addf %194, %196 : vector<2x8x32xf32>
    %198 = vector.extract_strided_slice %136 {offsets = [0, 5, 0, 0], sizes = [2, 1, 8, 1], strides = [1, 1, 1, 1]} : vector<2x8x8x1xf32> to vector<2x1x8x1xf32>
    %199 = vector.shape_cast %198 : vector<2x1x8x1xf32> to vector<2x8x1xf32>
    %200 = vector.broadcast %199 : vector<2x8x1xf32> to vector<2x8x32xf32>
    %201 = arith.mulf %197, %200 : vector<2x8x32xf32>
    %cst_73 = arith.constant dense<0.000000e+00> : vector<2x32xf32>
    %202 = vector.multi_reduction <add>, %201, %cst_73 [1] : vector<2x8x32xf32> to vector<2x32xf32>
    %203 = vector.extract_strided_slice %130 {offsets = [0, 6, 0, 0], sizes = [2, 1, 8, 32], strides = [1, 1, 1, 1]} : vector<2x8x8x32xf32> to vector<2x1x8x32xf32>
    %204 = vector.shape_cast %203 : vector<2x1x8x32xf32> to vector<2x8x32xf32>
    %205 = arith.mulf %204, %197 : vector<2x8x32xf32>
    %206 = vector.extract_strided_slice %135 {offsets = [0, 6, 0, 0], sizes = [2, 1, 8, 32], strides = [1, 1, 1, 1]} : vector<2x8x8x32xf32> to vector<2x1x8x32xf32>
    %207 = vector.shape_cast %206 : vector<2x1x8x32xf32> to vector<2x8x32xf32>
    %208 = arith.addf %205, %207 : vector<2x8x32xf32>
    %209 = vector.extract_strided_slice %136 {offsets = [0, 6, 0, 0], sizes = [2, 1, 8, 1], strides = [1, 1, 1, 1]} : vector<2x8x8x1xf32> to vector<2x1x8x1xf32>
    %210 = vector.shape_cast %209 : vector<2x1x8x1xf32> to vector<2x8x1xf32>
    %211 = vector.broadcast %210 : vector<2x8x1xf32> to vector<2x8x32xf32>
    %212 = arith.mulf %208, %211 : vector<2x8x32xf32>
    %cst_74 = arith.constant dense<0.000000e+00> : vector<2x32xf32>
    %213 = vector.multi_reduction <add>, %212, %cst_74 [1] : vector<2x8x32xf32> to vector<2x32xf32>
    %214 = vector.extract_strided_slice %130 {offsets = [0, 7, 0, 0], sizes = [2, 1, 8, 32], strides = [1, 1, 1, 1]} : vector<2x8x8x32xf32> to vector<2x1x8x32xf32>
    %215 = vector.shape_cast %214 : vector<2x1x8x32xf32> to vector<2x8x32xf32>
    %216 = arith.mulf %215, %208 : vector<2x8x32xf32>
    %217 = vector.extract_strided_slice %135 {offsets = [0, 7, 0, 0], sizes = [2, 1, 8, 32], strides = [1, 1, 1, 1]} : vector<2x8x8x32xf32> to vector<2x1x8x32xf32>
    %218 = vector.shape_cast %217 : vector<2x1x8x32xf32> to vector<2x8x32xf32>
    %219 = arith.addf %216, %218 : vector<2x8x32xf32>
    %220 = vector.extract_strided_slice %136 {offsets = [0, 7, 0, 0], sizes = [2, 1, 8, 1], strides = [1, 1, 1, 1]} : vector<2x8x8x1xf32> to vector<2x1x8x1xf32>
    %221 = vector.shape_cast %220 : vector<2x1x8x1xf32> to vector<2x8x1xf32>
    %222 = vector.broadcast %221 : vector<2x8x1xf32> to vector<2x8x32xf32>
    %223 = arith.mulf %219, %222 : vector<2x8x32xf32>
    %cst_75 = arith.constant dense<0.000000e+00> : vector<2x32xf32>
    %224 = vector.multi_reduction <add>, %223, %cst_75 [1] : vector<2x8x32xf32> to vector<2x32xf32>
    %225 = vector.shape_cast %147 : vector<2x32xf32> to vector<2x1x32xf32>
    %226 = vector.shape_cast %158 : vector<2x32xf32> to vector<2x1x32xf32>
    %227 = vector.shape_cast %169 : vector<2x32xf32> to vector<2x1x32xf32>
    %228 = vector.shape_cast %180 : vector<2x32xf32> to vector<2x1x32xf32>
    %229 = vector.shape_cast %191 : vector<2x32xf32> to vector<2x1x32xf32>
    %230 = vector.shape_cast %202 : vector<2x32xf32> to vector<2x1x32xf32>
    %231 = vector.shape_cast %213 : vector<2x32xf32> to vector<2x1x32xf32>
    %232 = vector.shape_cast %224 : vector<2x32xf32> to vector<2x1x32xf32>
    %233 = tpu.concatenate %225, %226, %227, %228, %229, %230, %231, %232 in 1 : vector<2x1x32xf32>, vector<2x1x32xf32>, vector<2x1x32xf32>, vector<2x1x32xf32>, vector<2x1x32xf32>, vector<2x1x32xf32>, vector<2x1x32xf32>, vector<2x1x32xf32> -> vector<2x8x32xf32>
    %c0_i32_76 = arith.constant 0 : i32
    %234 = arith.addi %c0_i32_76, %80 : i32
    %235 = tpu.assume_multiple %234, 8 : i32
    %236 = vector.extract_strided_slice %233 {offsets = [0, 0, 0], sizes = [1, 8, 32], strides = [1, 1, 1]} : vector<2x8x32xf32> to vector<1x8x32xf32>
    %237 = vector.shape_cast %236 : vector<1x8x32xf32> to vector<8x32xf32>
    %238 = arith.index_cast %235 : i32 to index
    %c0_77 = arith.constant 0 : index
    %239 = vector.load %arg26[%238, %c0_77] : memref<16x32xf32, #tpu.memory_space<vmem>>, vector<8x32xf32>
    tpu.vector_store %arg26[%238, %c0_77], %237 {strides = array<i32>} : memref<16x32xf32, #tpu.memory_space<vmem>>, vector<8x32xf32>,
    %c8_i32_78 = arith.constant 8 : i32
    %240 = arith.addi %c8_i32_78, %80 : i32
    %241 = tpu.assume_multiple %240, 8 : i32
    %242 = vector.extract_strided_slice %233 {offsets = [1, 0, 0], sizes = [1, 8, 32], strides = [1, 1, 1]} : vector<2x8x32xf32> to vector<1x8x32xf32>
    %243 = vector.shape_cast %242 : vector<1x8x32xf32> to vector<8x32xf32>
    %244 = arith.index_cast %241 : i32 to index
    %c0_79 = arith.constant 0 : index
    %245 = vector.load %arg26[%244, %c0_79] : memref<16x32xf32, #tpu.memory_space<vmem>>, vector<8x32xf32>
    tpu.vector_store %arg26[%244, %c0_79], %243 {strides = array<i32>} : memref<16x32xf32, #tpu.memory_space<vmem>>, vector<8x32xf32>,
    %c1_i32 = arith.constant 1 : i32
    %c0_80 = arith.constant 0 : index
    %c0_81 = arith.constant 0 : index
    %246 = vector.load %arg26[%c0_80, %c0_81] : memref<16x32xf32, #tpu.memory_space<vmem>>, vector<16x32xf32>
    %c0_82 = arith.constant 0 : index
    %c0_83 = arith.constant 0 : index
    %247 = vector.load %arg17[%c0_82, %c0_83] : memref<1x32xf32, #tpu.memory_space<vmem>>, vector<1x32xf32>
    %248 = vector.broadcast %247 : vector<1x32xf32> to vector<16x32xf32>
    %249 = arith.mulf %248, %42 : vector<16x32xf32>
    %250 = arith.addf %246, %249 : vector<16x32xf32>
    %251 = arith.mulf %250, %17 : vector<16x32xf32>
    %252 = arith.truncf %251 : vector<16x32xf32> to vector<16x32xbf16>
    %c0_84 = arith.constant 0 : index
    %c0_85 = arith.constant 0 : index
    %253 = vector.load %arg18[%c0_84, %c0_85] : memref<32x32xbf16, #tpu.memory_space<vmem>>, vector<32x32xbf16>
    %cst_86 = arith.constant dense<0.000000e+00> : vector<16x32xf32>
    %254 = tpu.matmul %252, %253, %cst_86 {dimension_numbers = #tpu.dot_dimension_numbers<[1], [0], [0], [1], [0, 0, 1, 1], [], []>} : vector<16x32xbf16>, vector<32x32xbf16>, vector<16x32xf32> -> vector<16x32xf32>
    %c0_87 = arith.constant 0 : index
    %c0_88 = arith.constant 0 : index
    %255 = vector.load %arg19[%c0_87, %c0_88] : memref<1x32xf32, #tpu.memory_space<vmem>>, vector<1x32xf32>
    %256 = vector.broadcast %255 : vector<1x32xf32> to vector<16x32xf32>
    %257 = arith.addf %254, %256 : vector<16x32xf32>
    %258 = arith.addf %257, %0 : vector<16x32xf32>
    %c0_89 = arith.constant 0 : index
    %c0_90 = arith.constant 0 : index
    %259 = vector.load %arg21[%c0_89, %c0_90] : memref<16x32xf32, #tpu.memory_space<vmem>>, vector<16x32xf32>
    tpu.vector_store %arg21[%c0_89, %c0_90], %258 {strides = array<i32>} : memref<16x32xf32, #tpu.memory_space<vmem>>, vector<16x32xf32>,
    return
  }
  func.func @transform_0(%arg0: i32) -> (i32, i32) {
    %c0_i32 = arith.constant 0 : i32
    %c0_i32_0 = arith.constant 0 : i32
    return %arg0, %c0_i32 : i32, i32
  }
  func.func @transform_1(%arg0: i32) -> (i32, i32) {
    %c0_i32 = arith.constant 0 : i32
    %c0_i32_0 = arith.constant 0 : i32
    %c0_i32_1 = arith.constant 0 : i32
    return %c0_i32, %c0_i32_0 : i32, i32
  }
  func.func @transform_2(%arg0: i32) -> (i32, i32) {
    %c0_i32 = arith.constant 0 : i32
    %c0_i32_0 = arith.constant 0 : i32
    %c0_i32_1 = arith.constant 0 : i32
    return %c0_i32, %c0_i32_0 : i32, i32
  }
  func.func @transform_3(%arg0: i32) -> (i32, i32) {
    %c0_i32 = arith.constant 0 : i32
    %c0_i32_0 = arith.constant 0 : i32
    %c0_i32_1 = arith.constant 0 : i32
    return %c0_i32, %c0_i32_0 : i32, i32
  }
  func.func @transform_4(%arg0: i32) -> (i32, i32) {
    %c0_i32 = arith.constant 0 : i32
    %c0_i32_0 = arith.constant 0 : i32
    %c0_i32_1 = arith.constant 0 : i32
    return %c0_i32, %c0_i32_0 : i32, i32
  }
  func.func @transform_5(%arg0: i32) -> (i32, i32) {
    %c0_i32 = arith.constant 0 : i32
    %c0_i32_0 = arith.constant 0 : i32
    %c0_i32_1 = arith.constant 0 : i32
    return %c0_i32, %c0_i32_0 : i32, i32
  }
  func.func @transform_6(%arg0: i32) -> (i32, i32) {
    %c0_i32 = arith.constant 0 : i32
    %c0_i32_0 = arith.constant 0 : i32
    %c0_i32_1 = arith.constant 0 : i32
    return %c0_i32, %c0_i32_0 : i32, i32
  }
  func.func @transform_7(%arg0: i32) -> (i32, i32) {
    %c0_i32 = arith.constant 0 : i32
    %c0_i32_0 = arith.constant 0 : i32
    %c0_i32_1 = arith.constant 0 : i32
    return %c0_i32, %c0_i32_0 : i32, i32
  }
  func.func @transform_8(%arg0: i32) -> (i32, i32) {
    %c0_i32 = arith.constant 0 : i32
    %c0_i32_0 = arith.constant 0 : i32
    %c0_i32_1 = arith.constant 0 : i32
    return %c0_i32, %c0_i32_0 : i32, i32
  }
  func.func @transform_9(%arg0: i32) -> (i32, i32) {
    %c0_i32 = arith.constant 0 : i32
    %c0_i32_0 = arith.constant 0 : i32
    %c0_i32_1 = arith.constant 0 : i32
    return %c0_i32, %c0_i32_0 : i32, i32
  }
  func.func @transform_10(%arg0: i32) -> (i32, i32) {
    %c0_i32 = arith.constant 0 : i32
    %c0_i32_0 = arith.constant 0 : i32
    %c0_i32_1 = arith.constant 0 : i32
    return %c0_i32, %c0_i32_0 : i32, i32
  }
  func.func @transform_11(%arg0: i32) -> (i32, i32) {
    %c0_i32 = arith.constant 0 : i32
    %c0_i32_0 = arith.constant 0 : i32
    %c0_i32_1 = arith.constant 0 : i32
    return %c0_i32, %c0_i32_0 : i32, i32
  }
  func.func @transform_12(%arg0: i32) -> (i32, i32) {
    %c0_i32 = arith.constant 0 : i32
    %c0_i32_0 = arith.constant 0 : i32
    %c0_i32_1 = arith.constant 0 : i32
    return %c0_i32, %c0_i32_0 : i32, i32
  }
  func.func @transform_13(%arg0: i32) -> (i32, i32) {
    %c0_i32 = arith.constant 0 : i32
    %c0_i32_0 = arith.constant 0 : i32
    %c0_i32_1 = arith.constant 0 : i32
    return %c0_i32, %c0_i32_0 : i32, i32
  }
  func.func @transform_14(%arg0: i32) -> (i32, i32) {
    %c0_i32 = arith.constant 0 : i32
    %c0_i32_0 = arith.constant 0 : i32
    %c0_i32_1 = arith.constant 0 : i32
    return %c0_i32, %c0_i32_0 : i32, i32
  }
  func.func @transform_15(%arg0: i32) -> (i32, i32) {
    %c0_i32 = arith.constant 0 : i32
    %c0_i32_0 = arith.constant 0 : i32
    %c0_i32_1 = arith.constant 0 : i32
    return %c0_i32, %c0_i32_0 : i32, i32
  }
  func.func @transform_16(%arg0: i32) -> (i32, i32) {
    %c0_i32 = arith.constant 0 : i32
    %c0_i32_0 = arith.constant 0 : i32
    %c0_i32_1 = arith.constant 0 : i32
    return %c0_i32, %c0_i32_0 : i32, i32
  }
  func.func @transform_17(%arg0: i32) -> (i32, i32) {
    %c0_i32 = arith.constant 0 : i32
    %c0_i32_0 = arith.constant 0 : i32
    %c0_i32_1 = arith.constant 0 : i32
    return %c0_i32, %c0_i32_0 : i32, i32
  }
  func.func @transform_18(%arg0: i32) -> (i32, i32) {
    %c0_i32 = arith.constant 0 : i32
    %c0_i32_0 = arith.constant 0 : i32
    %c0_i32_1 = arith.constant 0 : i32
    return %c0_i32, %c0_i32_0 : i32, i32
  }
  func.func @transform_19(%arg0: i32) -> i32 {
    %c0_i32 = arith.constant 0 : i32
    %c0_i32_0 = arith.constant 0 : i32
    return %c0_i32 : i32
  }
  func.func @transform_20(%arg0: i32) -> (i32, i32) {
    %c0_i32 = arith.constant 0 : i32
    %c0_i32_0 = arith.constant 0 : i32
    return %arg0, %c0_i32 : i32, i32
  }
}

</mosaic_0001>

<llo_original>
// kernel: tpu_custom_call.1
$region0: #{tpu_custom_call.1}
  #allocation0 [shape = 'u32[]', space=smem, size = 0x4, offset = 0x4, fixed_abs, tag = 'smem constant byte address 0x4 - core index']
  #allocation1 [shape = 'u32[144,128]{1,0:T(1,128)}', space=vmem, size = 0x12000, scoped, tag = 'internal scratch']
  #allocation2 [shape = 'f32[16,32]{1,0:T(8,128)}', space=vmem, size = 0x2000, scoped, tag = 'scratch operand']
  #allocation3 [shape = 'f32[16,32]{1,0:T(8,128)}', space=vmem, size = 0x2000, scoped, tag = 'scratch operand']
  #allocation4 [shape = 'f32[16,8]{1,0:T(8,128)}', space=vmem, size = 0x2000, scoped, tag = 'scratch operand']
  #allocation5 [shape = 'f32[16,8]{1,0:T(8,128)}', space=vmem, size = 0x2000, scoped, tag = 'scratch operand']
  #allocation6 [shape = 'f32[16,32]{1,0:T(8,128)}', space=vmem, size = 0x2000, scoped, tag = 'scratch operand']
  %s0 = inlined_call_operand.vmem [shape: f32[16,32], index: 0, kind: input, shape index: {}]
  %s1 = inlined_call_operand.vmem [shape: bf16[32,32], index: 1, kind: input, shape index: {}]
  %s2 = inlined_call_operand.vmem [shape: f32[1,32], index: 2, kind: input, shape index: {}]
  %s3 = inlined_call_operand.vmem [shape: bf16[32,32], index: 3, kind: input, shape index: {}]
  %s4 = inlined_call_operand.vmem [shape: f32[1,32], index: 4, kind: input, shape index: {}]
  %s5 = inlined_call_operand.vmem [shape: bf16[32,32], index: 5, kind: input, shape index: {}]
  %s6 = inlined_call_operand.vmem [shape: f32[1,32], index: 6, kind: input, shape index: {}]
  %s7 = inlined_call_operand.vmem [shape: f32[32,8], index: 7, kind: input, shape index: {}]
  %s8 = inlined_call_operand.vmem [shape: f32[1,8], index: 8, kind: input, shape index: {}]
  %s9 = inlined_call_operand.vmem [shape: f32[32,8], index: 9, kind: input, shape index: {}]
  %s10 = inlined_call_operand.vmem [shape: f32[1,8], index: 10, kind: input, shape index: {}]
  %s11 = inlined_call_operand.vmem [shape: f32[32,8], index: 11, kind: input, shape index: {}]
  %s12 = inlined_call_operand.vmem [shape: f32[1,8], index: 12, kind: input, shape index: {}]
  %s13 = inlined_call_operand.vmem [shape: f32[8,32], index: 13, kind: input, shape index: {}]
  %s14 = inlined_call_operand.vmem [shape: f32[1,32], index: 14, kind: input, shape index: {}]
  %s15 = inlined_call_operand.vmem [shape: f32[8,32], index: 15, kind: input, shape index: {}]
  %s16 = inlined_call_operand.vmem [shape: f32[1,32], index: 16, kind: input, shape index: {}]
  %s17 = inlined_call_operand.vmem [shape: bf16[32,32], index: 17, kind: input, shape index: {}]
  %s18 = inlined_call_operand.vmem [shape: f32[1,32], index: 18, kind: input, shape index: {}]
  %s19 = inlined_call_operand.vmem [shape: f32[4], index: 19, kind: input, shape index: {}]
  %s20 = inlined_call_operand.hbm [shape: f32[16,32], index: 20, kind: output, shape index: {}]
  %s21 = sld [smem:[#allocation0]]
  $region94: #{tpu_custom_call.1} parent=0
    _
  %s23 = ssub.s32 1, %s21
  %s24 = scalar_select 0, %s23, %s21
  $region1: #{tpu_custom_call.1} parent=0
    #allocation7 [shape = 'u8[512]{0}', space=smem, size = 0x200, scoped, tag = 'input window, operand 19, single buffered']
    #allocation8 [shape = 's32[1]{0}', space=sflag, size = 0x4, scoped, tag = 'scoped memory for tpu_custom_call.1']
    #allocation9 [shape = 's32[1]{0}', space=sflag, size = 0x4, scoped, tag = 'scoped memory for tpu_custom_call.1']
    #allocation10 [shape = 'u8[8192]{0}', space=vmem, size = 0x2000, scoped, tag = 'output window, operand 0, single buffered']
    %25 = vsyncpa [#allocation9], 0
    %26 = vsyncpa [#allocation8], 0
    // Predicated region
    $region2: #{tpu_custom_call.1} parent=1 // pred_check
      _
    $region3: #{tpu_custom_call.1} parent=1 // pred_check_branch
      %28 = sbr.rel (0) target = $region5
    $region4: #{tpu_custom_call.1} parent=1 // pred_region
      _
    $region5: #{tpu_custom_call.1} parent=1 // pred_fallthru
      _
    // Predicated region
    $region6: #{tpu_custom_call.1} parent=1 // pred_check
      _
    $region7: #{tpu_custom_call.1} parent=1 // pred_check_branch
      %30 = sbr.rel (0) target = $region9
    $region8: #{tpu_custom_call.1} parent=1 // pred_region
      _
    $region9: #{tpu_custom_call.1} parent=1 // pred_fallthru
      _
    // Predicated region
    $region10: #{tpu_custom_call.1} parent=1 // pred_check
      _
    $region11: #{tpu_custom_call.1} parent=1 // pred_check_branch
      %32 = sbr.rel (0) target = $region13
    $region12: #{tpu_custom_call.1} parent=1 // pred_region
      _
    $region13: #{tpu_custom_call.1} parent=1 // pred_fallthru
      _
    // Predicated region
    $region14: #{tpu_custom_call.1} parent=1 // pred_check
      _
    $region15: #{tpu_custom_call.1} parent=1 // pred_check_branch
      %34 = sbr.rel (0) target = $region17
    $region16: #{tpu_custom_call.1} parent=1 // pred_region
      _
    $region17: #{tpu_custom_call.1} parent=1 // pred_fallthru
      _
    // Predicated region
    $region18: #{tpu_custom_call.1} parent=1 // pred_check
      _
    $region19: #{tpu_custom_call.1} parent=1 // pred_check_branch
      %36 = sbr.rel (0) target = $region21
    $region20: #{tpu_custom_call.1} parent=1 // pred_region
      _
    $region21: #{tpu_custom_call.1} parent=1 // pred_fallthru
      _
    // Predicated region
    $region22: #{tpu_custom_call.1} parent=1 // pred_check
      _
    $region23: #{tpu_custom_call.1} parent=1 // pred_check_branch
      %38 = sbr.rel (0) target = $region25
    $region24: #{tpu_custom_call.1} parent=1 // pred_region
      _
    $region25: #{tpu_custom_call.1} parent=1 // pred_fallthru
      _
    // Predicated region
    $region26: #{tpu_custom_call.1} parent=1 // pred_check
      _
    $region27: #{tpu_custom_call.1} parent=1 // pred_check_branch
      %40 = sbr.rel (0) target = $region29
    $region28: #{tpu_custom_call.1} parent=1 // pred_region
      _
    $region29: #{tpu_custom_call.1} parent=1 // pred_fallthru
      _
    // Predicated region
    $region30: #{tpu_custom_call.1} parent=1 // pred_check
      _
    $region31: #{tpu_custom_call.1} parent=1 // pred_check_branch
      %42 = sbr.rel (0) target = $region33
    $region32: #{tpu_custom_call.1} parent=1 // pred_region
      _
    $region33: #{tpu_custom_call.1} parent=1 // pred_fallthru
      _
    // Predicated region
    $region34: #{tpu_custom_call.1} parent=1 // pred_check
      _
    $region35: #{tpu_custom_call.1} parent=1 // pred_check_branch
      %44 = sbr.rel (0) target = $region37
    $region36: #{tpu_custom_call.1} parent=1 // pred_region
      _
    $region37: #{tpu_custom_call.1} parent=1 // pred_fallthru
      _
    // Predicated region
    $region38: #{tpu_custom_call.1} parent=1 // pred_check
      _
    $region39: #{tpu_custom_call.1} parent=1 // pred_check_branch
      %46 = sbr.rel (0) target = $region41
    $region40: #{tpu_custom_call.1} parent=1 // pred_region
      _
    $region41: #{tpu_custom_call.1} parent=1 // pred_fallthru
      _
    // Predicated region
    $region42: #{tpu_custom_call.1} parent=1 // pred_check
      _
    $region43: #{tpu_custom_call.1} parent=1 // pred_check_branch
      %48 = sbr.rel (0) target = $region45
    $region44: #{tpu_custom_call.1} parent=1 // pred_region
      _
    $region45: #{tpu_custom_call.1} parent=1 // pred_fallthru
      _
    // Predicated region
    $region46: #{tpu_custom_call.1} parent=1 // pred_check
      _
    $region47: #{tpu_custom_call.1} parent=1 // pred_check_branch
      %50 = sbr.rel (0) target = $region49
    $region48: #{tpu_custom_call.1} parent=1 // pred_region
      _
    $region49: #{tpu_custom_call.1} parent=1 // pred_fallthru
      _
    // Predicated region
    $region50: #{tpu_custom_call.1} parent=1 // pred_check
      _
    $region51: #{tpu_custom_call.1} parent=1 // pred_check_branch
      %52 = sbr.rel (0) target = $region53
    $region52: #{tpu_custom_call.1} parent=1 // pred_region
      _
    $region53: #{tpu_custom_call.1} parent=1 // pred_fallthru
      _
    // Predicated region
    $region54: #{tpu_custom_call.1} parent=1 // pred_check
      _
    $region55: #{tpu_custom_call.1} parent=1 // pred_check_branch
      %54 = sbr.rel (0) target = $region57
    $region56: #{tpu_custom_call.1} parent=1 // pred_region
      _
    $region57: #{tpu_custom_call.1} parent=1 // pred_fallthru
      _
    // Predicated region
    $region58: #{tpu_custom_call.1} parent=1 // pred_check
      _
    $region59: #{tpu_custom_call.1} parent=1 // pred_check_branch
      %56 = sbr.rel (0) target = $region61
    $region60: #{tpu_custom_call.1} parent=1 // pred_region
      _
    $region61: #{tpu_custom_call.1} parent=1 // pred_fallthru
      _
    // Predicated region
    $region62: #{tpu_custom_call.1} parent=1 // pred_check
      _
    $region63: #{tpu_custom_call.1} parent=1 // pred_check_branch
      %58 = sbr.rel (0) target = $region65
    $region64: #{tpu_custom_call.1} parent=1 // pred_region
      _
    $region65: #{tpu_custom_call.1} parent=1 // pred_fallthru
      _
    // Predicated region
    $region66: #{tpu_custom_call.1} parent=1 // pred_check
      _
    $region67: #{tpu_custom_call.1} parent=1 // pred_check_branch
      %60 = sbr.rel (0) target = $region69
    $region68: #{tpu_custom_call.1} parent=1 // pred_region
      _
    $region69: #{tpu_custom_call.1} parent=1 // pred_fallthru
      _
    // Predicated region
    $region70: #{tpu_custom_call.1} parent=1 // pred_check
      _
    $region71: #{tpu_custom_call.1} parent=1 // pred_check_branch
      %62 = sbr.rel (0) target = $region73
    $region72: #{tpu_custom_call.1} parent=1 // pred_region
      _
    $region73: #{tpu_custom_call.1} parent=1 // pred_fallthru
      _
    // Predicated region
    $region74: #{tpu_custom_call.1} parent=1 // pred_check
      _
    $region75: #{tpu_custom_call.1} parent=1 // pred_check_branch
      %64 = sbr.rel (0) target = $region77
    $region76: #{tpu_custom_call.1} parent=1 // pred_region
      _
    $region77: #{tpu_custom_call.1} parent=1 // pred_fallthru
      _
    // Predicated region
    $region78: #{tpu_custom_call.1} parent=1 // pred_check
      _
    $region79: #{tpu_custom_call.1} parent=1 // pred_check_branch
      %66 = sbr.rel (0) target = $region81
    $region80: #{tpu_custom_call.1} parent=1 // pred_region
      %s68 = ssub.s32 16, 16
      %69 = vsyncadd [#allocation9], %s68
      %s71 = sshll.u32 %s19, 4
      %s72 = int_to_ptr.vmem [resolvable:$true] %s71
      %74 = dma.vmem_to_smem %s72, 16, [#allocation7], [#allocation9]
    $region81: #{tpu_custom_call.1} parent=1 // pred_fallthru
      _
    // Predicated region
    $region82: #{tpu_custom_call.1} parent=1 // pred_check
      _
    $region83: #{tpu_custom_call.1} parent=1 // pred_check_branch
      %76 = sbr.rel (0) target = $region85
    $region84: #{tpu_custom_call.1} parent=1 // pred_region
      %77 = dma.done [#allocation9], 16
    $region85: #{tpu_custom_call.1} parent=1 // pred_fallthru
      _
    %78 = sfence
    %v80 = vld [vmem:[%s0] sm:$0xff]
    %v81 = vld [vmem:[%s0 + $0x8] sm:$0xff]
    %v82 = vpack.c.bf16 %v81, %v80
    %s83 = sld [smem:[#allocation7]]
    %s84 = sld [smem:[#allocation7 + $0x1]]
    %s85 = sld [smem:[#allocation7 + $0x2]]
    %s86 = sld [smem:[#allocation7 + $0x3]]
    %v87 = vld [vmem:[%s1] sm:$0xf]
    %v88 = vld [vmem:[%s1 + $0x4] sm:$0xf]
    %v89 = vld [vmem:[%s1 + $0x8] sm:$0xf]
    %v90 = vld [vmem:[%s1 + $0xc] sm:$0xf]
    %v91 = vld [vmem:[%s2] sm:$0x1]
    %v93 = vlaneseq
    %v94 = vshrl.u32 %v93, 7
    %v95 = vsub.s32 0, %v94
    %v96 = vrot.slane %v91, %v95
    %v102 = vunpack.c.l.b16 %v87
    %v103 = vunpack.c.l.b16 %v88
    %v104 = vunpack.c.l.b16 %v89
    %v105 = vunpack.c.l.b16 %v90
    %v106 = vpack.c.b16 %v103, %v102
    %v107 = vpack.c.b16 %v105, %v104
    %vm110 = vcmask 261120
    %v112 = vsel %vm110, %v82, 0
    %114 = vmatprep.subr.bf16.mxu0 0
    %115 = vmatpush1.bf16.msra.mxu0 0
    %116 = vmatprep.subr.bf16.mxu0 0
    %117 = vmatpush1.bf16.msra.mxu0 0
    %118 = vmatprep.subr.bf16.mxu0 0
    %119 = vmatpush1.bf16.msra.mxu0 0
    %120 = vmatprep.subr.bf16.mxu0 0
    %121 = vmatpush1.bf16.msra.mxu0 0
    %122 = vmatprep.subr.bf16.mxu0 0
    %123 = vmatpush1.bf16.msra.mxu0 0
    %124 = vmatprep.subr.bf16.mxu0 0
    %125 = vmatpush1.bf16.msra.mxu0 0
    %126 = vmatprep.subr.bf16.mxu0 0
    %127 = vmatpush1.bf16.msra.mxu0 %v107
    %128 = vmatprep.subr.bf16.mxu0 0
    %129 = vmatpush1.bf16.msra.mxu0 %v106
    %130 = vmatprep.subr.bf16.mxu0 0
    %131 = vmatpush2.bf16.msra.mxu0 0
    %132 = vmatprep.subr.bf16.mxu0 0
    %133 = vmatpush2.bf16.msra.mxu0 0
    %134 = vmatprep.subr.bf16.mxu0 0
    %135 = vmatpush2.bf16.msra.mxu0 0
    %136 = vmatprep.subr.bf16.mxu0 0
    %137 = vmatpush2.bf16.msra.mxu0 0
    %138 = vmatprep.subr.bf16.mxu0 0
    %139 = vmatpush2.bf16.msra.mxu0 0
    %140 = vmatprep.subr.bf16.mxu0 0
    %141 = vmatpush2.bf16.msra.mxu0 0
    %142 = vmatprep.subr.bf16.mxu0 0
    %143 = vmatpush2.bf16.msra.mxu0 0
    %144 = vmatprep.subr.bf16.mxu0 0
    %145 = vmatpush2.bf16.msra.mxu0 0
    %146 = vmatprep.mubr.bf16.mxu0 0
    %147 = vmatmul.mubr.bf16.gmra.mxu0 %v112
    %v148 = vpop.f32.mrf.mxu0
    %v149 = vadd.f32 %v96, %v148
    %v150 = vpop.f32.mrf.mxu0
    %v151 = vpop.f32.mrf.mxu0
    %v152 = vadd.f32 %v96, %v151
    %v153 = vpop.f32.mrf.mxu0
    %154 = vdwg.mxu0
    %v155 = vand.u32 2147483647, %v149
    %vm156 = vcmp.le.f32.partialorder %v155, 0.7853982
    %vm157 = vcmp.lt.s32.totalorder %v149, 0
    %v158 = vand.u32 %v149, 2139095040
    %v159 = vshrl.u32 %v158, 23
    %v160 = vsub.s32 %v159, 127
    %v161 = vand.u32 2147483647, %v149
    %v162 = vand.u32 %v161, 8388607
    %v163 = vor.u32 %v162, 8388608
    %v164 = vsub.s32 0, %v163
    %v165 = vadd.s32 %v160, 1
    %vm166 = vcmp.gt.s32.totalorder %v165, 0
    %v167 = vsel %vm166, %v165, 0
    %v168 = vshrl.u32 %v167, 5
    %v169 = vand.u32 %v167, 31
    %v170 = vsub.s32 32, %v169
    %v171 = vshrl.u32 683565275, %v170
    %v172 = vshll.u32 683565275, %v169
    %v173 = vshrl.u32 2475754826, %v170
    %v174 = vor.u32 %v172, %v173
    %v175 = vshll.u32 2475754826, %v169
    %v176 = vshrl.u32 2131351028, %v170
    %v177 = vor.u32 %v175, %v176
    %v178 = vshll.u32 2131351028, %v169
    %v179 = vshrl.u32 2102212464, %v170
    %v180 = vor.u32 %v178, %v179
    %v181 = vshll.u32 2102212464, %v169
    %v182 = vshrl.u32 920167782, %v170
    %v183 = vor.u32 %v181, %v182
    %v184 = vshll.u32 920167782, %v169
    %v185 = vshrl.u32 1326507024, %v170
    %v186 = vor.u32 %v184, %v185
    %vm187 = vcmp.lt.s32.totalorder %v168, 1
    %vm188 = vcmp.lt.s32.totalorder %v168, 2
    %vm189 = vcmp.lt.s32.totalorder %v168, 3
    %vm190 = vcmp.lt.s32.totalorder %v168, 4
    %v191 = vsel %vm187, %v171, %v174
    %v192 = vsel %vm190, %v180, 2102212464
    %v193 = vsel %vm189, %v177, %v192
    %v194 = vsel %vm188, %v191, %v193
    %v195 = vsel %vm187, %v174, %v177
    %v196 = vsel %vm190, %v183, 920167782
    %v197 = vsel %vm189, %v180, %v196
    %v198 = vsel %vm188, %v195, %v197
    %v199 = vsel %vm187, %v177, %v180
    %v200 = vsel %vm190, %v186, 1326507024
    %v201 = vsel %vm189, %v183, %v200
    %v202 = vsel %vm188, %v199, %v201
    %v203 = vshll.u32 %v163, 8
    %v204 = vmul.u32.u64.compose %v203, %v202
    %v205 = vextract.low.u32 %v204
    %v206 = vextract.high.u32 %v204
    %v207 = vmul.u32.u64.compose %v203, %v198
    %v208 = vextract.low.u32 %v207
    %v209 = vextract.high.u32 %v207
    %v210 = vmul.u32 %v203, %v194
    %v211 = vadd.s32 %v206, %v208
    %vm212 = vc.u32 %v206, %v208
    %v213 = vadd.s32 %v209, 1
    %v214 = vsel %vm212, %v213, %v209
    %v215 = vadd.s32 %v210, %v214
    %v216 = vadd.s32 %v215, 536870912
    %v217 = vshrl.u32 %v216, 30
    %v218 = vshll.u32 %v217, 30
    %v219 = vsub.s32 %v215, %v218
    %vm220 = vcmp.lt.s32.totalorder %v219, 0
    %v221 = vsub.s32 0, %v219
    %v222 = vsel %vm220, %v221, %v219
    %v223 = vclz %v222
    %v224 = vsub.s32 %v223, 2
    %vm225 = vcmp.gt.s32.totalorder 0, %v224
    %v226 = vsel %vm225, 0, %v224
    %v227 = vsub.s32 32, %v226
    %v228 = vshll.u32 %v219, %v226
    %v229 = vshrl.u32 %v211, %v227
    %v230 = vor.u32 %v228, %v229
    %v231 = vsub.s32 4294967266, %v226
    %v232 = vadd.s32 %v231, 127
    %v233 = vshll.u32 %v232, 23
    %v234 = vor.u32 4788187, %v233
    %v235 = vand.u32 2147483647, %v234
    %v237 = vcvt.s32.f32 %v230
    %v238 = vmul.f32 %v237, %v235
    %v239 = vxor.u32 %v238, 2147483648
    %v240 = vsel %vm157, %v239, %v238
    %v241 = vsub.s32 4, %v217
    %v242 = vsel %vm157, %v241, %v217
    %v243 = vsel %vm156, %v149, %v240
    %v244 = vsel %vm156, 0, %v242
    %v245 = vcosq.f32.pop %v243
    %v246 = vsinq.f32.pop %v243
    %vm247 = vweird.f32 %v149
    %v248 = vadd.s32 %v244, 3
    %v249 = vand.u32 %v248, 3
    %vm250 = vcmp.lt.s32.totalorder %v249, 2
    %vm251 = vcmp.eq.s32.totalorder %v249, 0
    %v252 = vxor.u32 %v246, 2147483648
    %v253 = vsel %vm251, %v245, %v252
    %vm254 = vcmp.eq.s32.totalorder %v249, 2
    %v255 = vxor.u32 %v245, 2147483648
    %v256 = vsel %vm254, %v255, %v246
    %v257 = vsel %vm250, %v253, %v256
    %v258 = vsel %vm247, nan, %v257
    %v259 = vand.u32 2147483647, %v152
    %vm260 = vcmp.le.f32.partialorder %v259, 0.7853982
    %vm261 = vcmp.lt.s32.totalorder %v152, 0
    %v262 = vand.u32 %v152, 2139095040
    %v263 = vshrl.u32 %v262, 23
    %v264 = vsub.s32 %v263, 127
    %v265 = vand.u32 2147483647, %v152
    %v266 = vand.u32 %v265, 8388607
    %v267 = vor.u32 %v266, 8388608
    %v268 = vsub.s32 0, %v267
    %v269 = vadd.s32 %v264, 1
    %vm270 = vcmp.gt.s32.totalorder %v269, 0
    %v271 = vsel %vm270, %v269, 0
    %v272 = vshrl.u32 %v271, 5
    %v273 = vand.u32 %v271, 31
    %v274 = vsub.s32 32, %v273
    %v275 = vshrl.u32 683565275, %v274
    %v276 = vshll.u32 683565275, %v273
    %v277 = vshrl.u32 2475754826, %v274
    %v278 = vor.u32 %v276, %v277
    %v279 = vshll.u32 2475754826, %v273
    %v280 = vshrl.u32 2131351028, %v274
    %v281 = vor.u32 %v279, %v280
    %v282 = vshll.u32 2131351028, %v273
    %v283 = vshrl.u32 2102212464, %v274
    %v284 = vor.u32 %v282, %v283
    %v285 = vshll.u32 2102212464, %v273
    %v286 = vshrl.u32 920167782, %v274
    %v287 = vor.u32 %v285, %v286
    %v288 = vshll.u32 920167782, %v273
    %v289 = vshrl.u32 1326507024, %v274
    %v290 = vor.u32 %v288, %v289
    %vm291 = vcmp.lt.s32.totalorder %v272, 1
    %vm292 = vcmp.lt.s32.totalorder %v272, 2
    %vm293 = vcmp.lt.s32.totalorder %v272, 3
    %vm294 = vcmp.lt.s32.totalorder %v272, 4
    %v295 = vsel %vm291, %v275, %v278
    %v296 = vsel %vm294, %v284, 2102212464
    %v297 = vsel %vm293, %v281, %v296
    %v298 = vsel %vm292, %v295, %v297
    %v299 = vsel %vm291, %v278, %v281
    %v300 = vsel %vm294, %v287, 920167782
    %v301 = vsel %vm293, %v284, %v300
    %v302 = vsel %vm292, %v299, %v301
    %v303 = vsel %vm291, %v281, %v284
    %v304 = vsel %vm294, %v290, 1326507024
    %v305 = vsel %vm293, %v287, %v304
    %v306 = vsel %vm292, %v303, %v305
    %v307 = vshll.u32 %v267, 8
    %v308 = vmul.u32.u64.compose %v307, %v306
    %v309 = vextract.low.u32 %v308
    %v310 = vextract.high.u32 %v308
    %v311 = vmul.u32.u64.compose %v307, %v302
    %v312 = vextract.low.u32 %v311
    %v313 = vextract.high.u32 %v311
    %v314 = vmul.u32 %v307, %v298
    %v315 = vadd.s32 %v310, %v312
    %vm316 = vc.u32 %v310, %v312
    %v317 = vadd.s32 %v313, 1
    %v318 = vsel %vm316, %v317, %v313
    %v319 = vadd.s32 %v314, %v318
    %v320 = vadd.s32 %v319, 536870912
    %v321 = vshrl.u32 %v320, 30
    %v322 = vshll.u32 %v321, 30
    %v323 = vsub.s32 %v319, %v322
    %vm324 = vcmp.lt.s32.totalorder %v323, 0
    %v325 = vsub.s32 0, %v323
    %v326 = vsel %vm324, %v325, %v323
    %v327 = vclz %v326
    %v328 = vsub.s32 %v327, 2
    %vm329 = vcmp.gt.s32.totalorder 0, %v328
    %v330 = vsel %vm329, 0, %v328
    %v331 = vsub.s32 32, %v330
    %v332 = vshll.u32 %v323, %v330
    %v333 = vshrl.u32 %v315, %v331
    %v334 = vor.u32 %v332, %v333
    %v335 = vsub.s32 4294967266, %v330
    %v336 = vadd.s32 %v335, 127
    %v337 = vshll.u32 %v336, 23
    %v338 = vor.u32 4788187, %v337
    %v339 = vand.u32 2147483647, %v338
    %v341 = vcvt.s32.f32 %v334
    %v342 = vmul.f32 %v341, %v339
    %v343 = vxor.u32 %v342, 2147483648
    %v344 = vsel %vm261, %v343, %v342
    %v345 = vsub.s32 4, %v321
    %v346 = vsel %vm261, %v345, %v321
    %v347 = vsel %vm260, %v152, %v344
    %v348 = vsel %vm260, 0, %v346
    %v349 = vcosq.f32.pop %v347
    %v350 = vsinq.f32.pop %v347
    %vm351 = vweird.f32 %v152
    %v352 = vadd.s32 %v348, 3
    %v353 = vand.u32 %v352, 3
    %vm354 = vcmp.lt.s32.totalorder %v353, 2
    %vm355 = vcmp.eq.s32.totalorder %v353, 0
    %v356 = vxor.u32 %v350, 2147483648
    %v357 = vsel %vm355, %v349, %v356
    %vm358 = vcmp.eq.s32.totalorder %v353, 2
    %v359 = vxor.u32 %v349, 2147483648
    %v360 = vsel %vm358, %v359, %v350
    %v361 = vsel %vm354, %v357, %v360
    %v362 = vsel %vm351, nan, %v361
    %v363 = vstv %s83
    %v364 = vmul.f32 %v363, %v258
    %v365 = vmul.f32 %v363, %v362
    %v366 = vand.u32 2147483647, %v149
    %vm367 = vcmp.le.f32.partialorder %v366, 0.7853982
    %vm368 = vcmp.lt.s32.totalorder %v149, 0
    %v369 = vand.u32 %v149, 2139095040
    %v370 = vshrl.u32 %v369, 23
    %v371 = vsub.s32 %v370, 127
    %v372 = vand.u32 2147483647, %v149
    %v373 = vand.u32 %v372, 8388607
    %v374 = vor.u32 %v373, 8388608
    %v375 = vsub.s32 0, %v374
    %v376 = vadd.s32 %v371, 1
    %vm377 = vcmp.gt.s32.totalorder %v376, 0
    %v378 = vsel %vm377, %v376, 0
    %v379 = vshrl.u32 %v378, 5
    %v380 = vand.u32 %v378, 31
    %v381 = vsub.s32 32, %v380
    %v382 = vshrl.u32 683565275, %v381
    %v383 = vshll.u32 683565275, %v380
    %v384 = vshrl.u32 2475754826, %v381
    %v385 = vor.u32 %v383, %v384
    %v386 = vshll.u32 2475754826, %v380
    %v387 = vshrl.u32 2131351028, %v381
    %v388 = vor.u32 %v386, %v387
    %v389 = vshll.u32 2131351028, %v380
    %v390 = vshrl.u32 2102212464, %v381
    %v391 = vor.u32 %v389, %v390
    %v392 = vshll.u32 2102212464, %v380
    %v393 = vshrl.u32 920167782, %v381
    %v394 = vor.u32 %v392, %v393
    %v395 = vshll.u32 920167782, %v380
    %v396 = vshrl.u32 1326507024, %v381
    %v397 = vor.u32 %v395, %v396
    %vm398 = vcmp.lt.s32.totalorder %v379, 1
    %vm399 = vcmp.lt.s32.totalorder %v379, 2
    %vm400 = vcmp.lt.s32.totalorder %v379, 3
    %vm401 = vcmp.lt.s32.totalorder %v379, 4
    %v402 = vsel %vm398, %v382, %v385
    %v403 = vsel %vm401, %v391, 2102212464
    %v404 = vsel %vm400, %v388, %v403
    %v405 = vsel %vm399, %v402, %v404
    %v406 = vsel %vm398, %v385, %v388
    %v407 = vsel %vm401, %v394, 920167782
    %v408 = vsel %vm400, %v391, %v407
    %v409 = vsel %vm399, %v406, %v408
    %v410 = vsel %vm398, %v388, %v391
    %v411 = vsel %vm401, %v397, 1326507024
    %v412 = vsel %vm400, %v394, %v411
    %v413 = vsel %vm399, %v410, %v412
    %v414 = vshll.u32 %v374, 8
    %v415 = vmul.u32.u64.compose %v414, %v413
    %v416 = vextract.low.u32 %v415
    %v417 = vextract.high.u32 %v415
    %v418 = vmul.u32.u64.compose %v414, %v409
    %v419 = vextract.low.u32 %v418
    %v420 = vextract.high.u32 %v418
    %v421 = vmul.u32 %v414, %v405
    %v422 = vadd.s32 %v417, %v419
    %vm423 = vc.u32 %v417, %v419
    %v424 = vadd.s32 %v420, 1
    %v425 = vsel %vm423, %v424, %v420
    %v426 = vadd.s32 %v421, %v425
    %v427 = vadd.s32 %v426, 536870912
    %v428 = vshrl.u32 %v427, 30
    %v429 = vshll.u32 %v428, 30
    %v430 = vsub.s32 %v426, %v429
    %vm431 = vcmp.lt.s32.totalorder %v430, 0
    %v432 = vsub.s32 0, %v430
    %v433 = vsel %vm431, %v432, %v430
    %v434 = vclz %v433
    %v435 = vsub.s32 %v434, 2
    %vm436 = vcmp.gt.s32.totalorder 0, %v435
    %v437 = vsel %vm436, 0, %v435
    %v438 = vsub.s32 32, %v437
    %v439 = vshll.u32 %v430, %v437
    %v440 = vshrl.u32 %v422, %v438
    %v441 = vor.u32 %v439, %v440
    %v442 = vsub.s32 4294967266, %v437
    %v443 = vadd.s32 %v442, 127
    %v444 = vshll.u32 %v443, 23
    %v445 = vor.u32 4788187, %v444
    %v446 = vand.u32 2147483647, %v445
    %v448 = vcvt.s32.f32 %v441
    %v449 = vmul.f32 %v448, %v446
    %v450 = vxor.u32 %v449, 2147483648
    %v451 = vsel %vm368, %v450, %v449
    %v452 = vsub.s32 4, %v428
    %v453 = vsel %vm368, %v452, %v428
    %v454 = vsel %vm367, %v149, %v451
    %v455 = vsel %vm367, 0, %v453
    %v456 = vcosq.f32.pop %v454
    %v457 = vsinq.f32.pop %v454
    %vm458 = vweird.f32 %v149
    %v459 = vand.u32 %v455, 3
    %vm460 = vcmp.lt.s32.totalorder %v459, 2
    %vm461 = vcmp.eq.s32.totalorder %v459, 0
    %v462 = vxor.u32 %v457, 2147483648
    %v463 = vsel %vm461, %v456, %v462
    %vm464 = vcmp.eq.s32.totalorder %v459, 2
    %v465 = vxor.u32 %v456, 2147483648
    %v466 = vsel %vm464, %v465, %v457
    %v467 = vsel %vm460, %v463, %v466
    %v468 = vsel %vm458, nan, %v467
    %v469 = vand.u32 2147483647, %v152
    %vm470 = vcmp.le.f32.partialorder %v469, 0.7853982
    %vm471 = vcmp.lt.s32.totalorder %v152, 0
    %v472 = vand.u32 %v152, 2139095040
    %v473 = vshrl.u32 %v472, 23
    %v474 = vsub.s32 %v473, 127
    %v475 = vand.u32 2147483647, %v152
    %v476 = vand.u32 %v475, 8388607
    %v477 = vor.u32 %v476, 8388608
    %v478 = vsub.s32 0, %v477
    %v479 = vadd.s32 %v474, 1
    %vm480 = vcmp.gt.s32.totalorder %v479, 0
    %v481 = vsel %vm480, %v479, 0
    %v482 = vshrl.u32 %v481, 5
    %v483 = vand.u32 %v481, 31
    %v484 = vsub.s32 32, %v483
    %v485 = vshrl.u32 683565275, %v484
    %v486 = vshll.u32 683565275, %v483
    %v487 = vshrl.u32 2475754826, %v484
    %v488 = vor.u32 %v486, %v487
    %v489 = vshll.u32 2475754826, %v483
    %v490 = vshrl.u32 2131351028, %v484
    %v491 = vor.u32 %v489, %v490
    %v492 = vshll.u32 2131351028, %v483
    %v493 = vshrl.u32 2102212464, %v484
    %v494 = vor.u32 %v492, %v493
    %v495 = vshll.u32 2102212464, %v483
    %v496 = vshrl.u32 920167782, %v484
    %v497 = vor.u32 %v495, %v496
    %v498 = vshll.u32 920167782, %v483
    %v499 = vshrl.u32 1326507024, %v484
    %v500 = vor.u32 %v498, %v499
    %vm501 = vcmp.lt.s32.totalorder %v482, 1
    %vm502 = vcmp.lt.s32.totalorder %v482, 2
    %vm503 = vcmp.lt.s32.totalorder %v482, 3
    %vm504 = vcmp.lt.s32.totalorder %v482, 4
    %v505 = vsel %vm501, %v485, %v488
    %v506 = vsel %vm504, %v494, 2102212464
    %v507 = vsel %vm503, %v491, %v506
    %v508 = vsel %vm502, %v505, %v507
    %v509 = vsel %vm501, %v488, %v491
    %v510 = vsel %vm504, %v497, 920167782
    %v511 = vsel %vm503, %v494, %v510
    %v512 = vsel %vm502, %v509, %v511
    %v513 = vsel %vm501, %v491, %v494
    %v514 = vsel %vm504, %v500, 1326507024
    %v515 = vsel %vm503, %v497, %v514
    %v516 = vsel %vm502, %v513, %v515
    %v517 = vshll.u32 %v477, 8
    %v518 = vmul.u32.u64.compose %v517, %v516
    %v519 = vextract.low.u32 %v518
    %v520 = vextract.high.u32 %v518
    %v521 = vmul.u32.u64.compose %v517, %v512
    %v522 = vextract.low.u32 %v521
    %v523 = vextract.high.u32 %v521
    %v524 = vmul.u32 %v517, %v508
    %v525 = vadd.s32 %v520, %v522
    %vm526 = vc.u32 %v520, %v522
    %v527 = vadd.s32 %v523, 1
    %v528 = vsel %vm526, %v527, %v523
    %v529 = vadd.s32 %v524, %v528
    %v530 = vadd.s32 %v529, 536870912
    %v531 = vshrl.u32 %v530, 30
    %v532 = vshll.u32 %v531, 30
    %v533 = vsub.s32 %v529, %v532
    %vm534 = vcmp.lt.s32.totalorder %v533, 0
    %v535 = vsub.s32 0, %v533
    %v536 = vsel %vm534, %v535, %v533
    %v537 = vclz %v536
    %v538 = vsub.s32 %v537, 2
    %vm539 = vcmp.gt.s32.totalorder 0, %v538
    %v540 = vsel %vm539, 0, %v538
    %v541 = vsub.s32 32, %v540
    %v542 = vshll.u32 %v533, %v540
    %v543 = vshrl.u32 %v525, %v541
    %v544 = vor.u32 %v542, %v543
    %v545 = vsub.s32 4294967266, %v540
    %v546 = vadd.s32 %v545, 127
    %v547 = vshll.u32 %v546, 23
    %v548 = vor.u32 4788187, %v547
    %v549 = vand.u32 2147483647, %v548
    %v551 = vcvt.s32.f32 %v544
    %v552 = vmul.f32 %v551, %v549
    %v553 = vxor.u32 %v552, 2147483648
    %v554 = vsel %vm471, %v553, %v552
    %v555 = vsub.s32 4, %v531
    %v556 = vsel %vm471, %v555, %v531
    %v557 = vsel %vm470, %v152, %v554
    %v558 = vsel %vm470, 0, %v556
    %v559 = vcosq.f32.pop %v557
    %v560 = vsinq.f32.pop %v557
    %vm561 = vweird.f32 %v152
    %v562 = vand.u32 %v558, 3
    %vm563 = vcmp.lt.s32.totalorder %v562, 2
    %vm564 = vcmp.eq.s32.totalorder %v562, 0
    %v565 = vxor.u32 %v560, 2147483648
    %v566 = vsel %vm564, %v559, %v565
    %vm567 = vcmp.eq.s32.totalorder %v562, 2
    %v568 = vxor.u32 %v559, 2147483648
    %v569 = vsel %vm567, %v568, %v560
    %v570 = vsel %vm563, %v566, %v569
    %v571 = vsel %vm561, nan, %v570
    %v572 = vstv %s84
    %v573 = vmul.f32 %v572, %v468
    %v574 = vmul.f32 %v572, %v571
    %v575 = vadd.f32 %v364, %v573
    %v576 = vadd.f32 %v365, %v574
    %v577 = vld [vmem:[%s3] sm:$0xf]
    %v578 = vld [vmem:[%s3 + $0x4] sm:$0xf]
    %v579 = vld [vmem:[%s3 + $0x8] sm:$0xf]
    %v580 = vld [vmem:[%s3 + $0xc] sm:$0xf]
    %v581 = vld [vmem:[%s4] sm:$0x1]
    %v583 = vlaneseq
    %v584 = vshrl.u32 %v583, 7
    %v585 = vsub.s32 0, %v584
    %v586 = vrot.slane %v581, %v585
    %v592 = vunpack.c.l.b16 %v577
    %v593 = vunpack.c.l.b16 %v578
    %v594 = vunpack.c.l.b16 %v579
    %v595 = vunpack.c.l.b16 %v580
    %v596 = vpack.c.b16 %v593, %v592
    %v597 = vpack.c.b16 %v595, %v594
    %600 = vmatprep.subr.bf16.mxu0 0
    %601 = vmatpush1.bf16.msra.mxu0 0
    %602 = vmatprep.subr.bf16.mxu0 0
    %603 = vmatpush1.bf16.msra.mxu0 0
    %604 = vmatprep.subr.bf16.mxu0 0
    %605 = vmatpush1.bf16.msra.mxu0 0
    %606 = vmatprep.subr.bf16.mxu0 0
    %607 = vmatpush1.bf16.msra.mxu0 0
    %608 = vmatprep.subr.bf16.mxu0 0
    %609 = vmatpush1.bf16.msra.mxu0 0
    %610 = vmatprep.subr.bf16.mxu0 0
    %611 = vmatpush1.bf16.msra.mxu0 0
    %612 = vmatprep.subr.bf16.mxu0 0
    %613 = vmatpush1.bf16.msra.mxu0 %v597
    %614 = vmatprep.subr.bf16.mxu0 0
    %615 = vmatpush1.bf16.msra.mxu0 %v596
    %616 = vmatprep.subr.bf16.mxu0 0
    %617 = vmatpush2.bf16.msra.mxu0 0
    %618 = vmatprep.subr.bf16.mxu0 0
    %619 = vmatpush2.bf16.msra.mxu0 0
    %620 = vmatprep.subr.bf16.mxu0 0
    %621 = vmatpush2.bf16.msra.mxu0 0
    %622 = vmatprep.subr.bf16.mxu0 0
    %623 = vmatpush2.bf16.msra.mxu0 0
    %624 = vmatprep.subr.bf16.mxu0 0
    %625 = vmatpush2.bf16.msra.mxu0 0
    %626 = vmatprep.subr.bf16.mxu0 0
    %627 = vmatpush2.bf16.msra.mxu0 0
    %628 = vmatprep.subr.bf16.mxu0 0
    %629 = vmatpush2.bf16.msra.mxu0 0
    %630 = vmatprep.subr.bf16.mxu0 0
    %631 = vmatpush2.bf16.msra.mxu0 0
    %632 = vmatprep.mubr.bf16.mxu0 0
    %633 = vmatmul.mubr.bf16.gmra.mxu0 %v112
    %v634 = vpop.f32.mrf.mxu0
    %v635 = vadd.f32 %v586, %v634
    %v636 = vpop.f32.mrf.mxu0
    %v637 = vpop.f32.mrf.mxu0
    %v638 = vadd.f32 %v586, %v637
    %v639 = vpop.f32.mrf.mxu0
    %640 = vdwg.mxu0
    %v641 = vpack.c.bf16 %v638, %v635
    %v642 = vld [vmem:[%s5] sm:$0xf]
    %v643 = vld [vmem:[%s5 + $0x4] sm:$0xf]
    %v644 = vld [vmem:[%s5 + $0x8] sm:$0xf]
    %v645 = vld [vmem:[%s5 + $0xc] sm:$0xf]
    %v646 = vld [vmem:[%s6] sm:$0x1]
    %v648 = vlaneseq
    %v649 = vshrl.u32 %v648, 7
    %v650 = vsub.s32 0, %v649
    %v651 = vrot.slane %v646, %v650
    %v657 = vunpack.c.l.b16 %v642
    %v658 = vunpack.c.l.b16 %v643
    %v659 = vunpack.c.l.b16 %v644
    %v660 = vunpack.c.l.b16 %v645
    %v661 = vpack.c.b16 %v658, %v657
    %v662 = vpack.c.b16 %v660, %v659
    %v666 = vsel %vm110, %v641, 0
    %668 = vmatprep.subr.bf16.mxu0 0
    %669 = vmatpush1.bf16.msra.mxu0 0
    %670 = vmatprep.subr.bf16.mxu0 0
    %671 = vmatpush1.bf16.msra.mxu0 0
    %672 = vmatprep.subr.bf16.mxu0 0
    %673 = vmatpush1.bf16.msra.mxu0 0
    %674 = vmatprep.subr.bf16.mxu0 0
    %675 = vmatpush1.bf16.msra.mxu0 0
    %676 = vmatprep.subr.bf16.mxu0 0
    %677 = vmatpush1.bf16.msra.mxu0 0
    %678 = vmatprep.subr.bf16.mxu0 0
    %679 = vmatpush1.bf16.msra.mxu0 0
    %680 = vmatprep.subr.bf16.mxu0 0
    %681 = vmatpush1.bf16.msra.mxu0 %v662
    %682 = vmatprep.subr.bf16.mxu0 0
    %683 = vmatpush1.bf16.msra.mxu0 %v661
    %684 = vmatprep.subr.bf16.mxu0 0
    %685 = vmatpush2.bf16.msra.mxu0 0
    %686 = vmatprep.subr.bf16.mxu0 0
    %687 = vmatpush2.bf16.msra.mxu0 0
    %688 = vmatprep.subr.bf16.mxu0 0
    %689 = vmatpush2.bf16.msra.mxu0 0
    %690 = vmatprep.subr.bf16.mxu0 0
    %691 = vmatpush2.bf16.msra.mxu0 0
    %692 = vmatprep.subr.bf16.mxu0 0
    %693 = vmatpush2.bf16.msra.mxu0 0
    %694 = vmatprep.subr.bf16.mxu0 0
    %695 = vmatpush2.bf16.msra.mxu0 0
    %696 = vmatprep.subr.bf16.mxu0 0
    %697 = vmatpush2.bf16.msra.mxu0 0
    %698 = vmatprep.subr.bf16.mxu0 0
    %699 = vmatpush2.bf16.msra.mxu0 0
    %700 = vmatprep.mubr.bf16.mxu0 0
    %701 = vmatmul.mubr.bf16.gmra.mxu0 %v666
    %v702 = vpop.f32.mrf.mxu0
    %v703 = vadd.f32 %v651, %v702
    %v704 = vpop.f32.mrf.mxu0
    %v705 = vpop.f32.mrf.mxu0
    %v706 = vadd.f32 %v651, %v705
    %v707 = vpop.f32.mrf.mxu0
    %708 = vdwg.mxu0
    %vm709 = vcmp.gt.f32.partialorder %v703, 20.0
    %vm710 = vcmp.gt.f32.partialorder %v706, 20.0
    %v711 = vmin.f32 %v703, 20.0
    %v712 = vmin.f32 %v706, 20.0
    %v713 = vmul.f32 %v711, 1.442695
    %v714 = vpow.pop %v713
    %v715 = vmul.f32 %v712, 1.442695
    %v716 = vpow.pop %v715
    %v717 = vadd.f32 %v714, 1.0
    %v718 = vlog2.pop %v717
    %v719 = vmul.f32 %v718, 0.6931472
    %v720 = vmul.f32 -0.5, %v714
    %v721 = vadd.f32 %v720, 1.0
    %v722 = vmul.f32 %v721, %v714
    %v723 = vand.u32 2147483647, %v714
    %vm724 = vcmp.lt.f32.partialorder %v723, 0.0004427343
    %v725 = vsel %vm724, %v722, %v719
    %v726 = vadd.f32 %v716, 1.0
    %v727 = vlog2.pop %v726
    %v728 = vmul.f32 %v727, 0.6931472
    %v729 = vmul.f32 -0.5, %v716
    %v730 = vadd.f32 %v729, 1.0
    %v731 = vmul.f32 %v730, %v716
    %v732 = vand.u32 2147483647, %v716
    %vm733 = vcmp.lt.f32.partialorder %v732, 0.0004427343
    %v734 = vsel %vm733, %v731, %v728
    %v735 = vsel %vm709, %v703, %v725
    %v736 = vsel %vm710, %v706, %v734
    %v737 = vand.u32 2147483647, %v735
    %vm738 = vcmp.le.f32.partialorder %v737, 0.7853982
    %vm739 = vcmp.lt.s32.totalorder %v735, 0
    %v740 = vand.u32 %v735, 2139095040
    %v741 = vshrl.u32 %v740, 23
    %v742 = vsub.s32 %v741, 127
    %v743 = vand.u32 2147483647, %v735
    %v744 = vand.u32 %v743, 8388607
    %v745 = vor.u32 %v744, 8388608
    %v746 = vsub.s32 0, %v745
    %v747 = vadd.s32 %v742, 1
    %vm748 = vcmp.gt.s32.totalorder %v747, 0
    %v749 = vsel %vm748, %v747, 0
    %v750 = vshrl.u32 %v749, 5
    %v751 = vand.u32 %v749, 31
    %v752 = vsub.s32 32, %v751
    %v753 = vshrl.u32 683565275, %v752
    %v754 = vshll.u32 683565275, %v751
    %v755 = vshrl.u32 2475754826, %v752
    %v756 = vor.u32 %v754, %v755
    %v757 = vshll.u32 2475754826, %v751
    %v758 = vshrl.u32 2131351028, %v752
    %v759 = vor.u32 %v757, %v758
    %v760 = vshll.u32 2131351028, %v751
    %v761 = vshrl.u32 2102212464, %v752
    %v762 = vor.u32 %v760, %v761
    %v763 = vshll.u32 2102212464, %v751
    %v764 = vshrl.u32 920167782, %v752
    %v765 = vor.u32 %v763, %v764
    %v766 = vshll.u32 920167782, %v751
    %v767 = vshrl.u32 1326507024, %v752
    %v768 = vor.u32 %v766, %v767
    %vm769 = vcmp.lt.s32.totalorder %v750, 1
    %vm770 = vcmp.lt.s32.totalorder %v750, 2
    %vm771 = vcmp.lt.s32.totalorder %v750, 3
    %vm772 = vcmp.lt.s32.totalorder %v750, 4
    %v773 = vsel %vm769, %v753, %v756
    %v774 = vsel %vm772, %v762, 2102212464
    %v775 = vsel %vm771, %v759, %v774
    %v776 = vsel %vm770, %v773, %v775
    %v777 = vsel %vm769, %v756, %v759
    %v778 = vsel %vm772, %v765, 920167782
    %v779 = vsel %vm771, %v762, %v778
    %v780 = vsel %vm770, %v777, %v779
    %v781 = vsel %vm769, %v759, %v762
    %v782 = vsel %vm772, %v768, 1326507024
    %v783 = vsel %vm771, %v765, %v782
    %v784 = vsel %vm770, %v781, %v783
    %v785 = vshll.u32 %v745, 8
    %v786 = vmul.u32.u64.compose %v785, %v784
    %v787 = vextract.low.u32 %v786
    %v788 = vextract.high.u32 %v786
    %v789 = vmul.u32.u64.compose %v785, %v780
    %v790 = vextract.low.u32 %v789
    %v791 = vextract.high.u32 %v789
    %v792 = vmul.u32 %v785, %v776
    %v793 = vadd.s32 %v788, %v790
    %vm794 = vc.u32 %v788, %v790
    %v795 = vadd.s32 %v791, 1
    %v796 = vsel %vm794, %v795, %v791
    %v797 = vadd.s32 %v792, %v796
    %v798 = vadd.s32 %v797, 536870912
    %v799 = vshrl.u32 %v798, 30
    %v800 = vshll.u32 %v799, 30
    %v801 = vsub.s32 %v797, %v800
    %vm802 = vcmp.lt.s32.totalorder %v801, 0
    %v803 = vsub.s32 0, %v801
    %v804 = vsel %vm802, %v803, %v801
    %v805 = vclz %v804
    %v806 = vsub.s32 %v805, 2
    %vm807 = vcmp.gt.s32.totalorder 0, %v806
    %v808 = vsel %vm807, 0, %v806
    %v809 = vsub.s32 32, %v808
    %v810 = vshll.u32 %v801, %v808
    %v811 = vshrl.u32 %v793, %v809
    %v812 = vor.u32 %v810, %v811
    %v813 = vsub.s32 4294967266, %v808
    %v814 = vadd.s32 %v813, 127
    %v815 = vshll.u32 %v814, 23
    %v816 = vor.u32 4788187, %v815
    %v817 = vand.u32 2147483647, %v816
    %v819 = vcvt.s32.f32 %v812
    %v820 = vmul.f32 %v819, %v817
    %v821 = vxor.u32 %v820, 2147483648
    %v822 = vsel %vm739, %v821, %v820
    %v823 = vsub.s32 4, %v799
    %v824 = vsel %vm739, %v823, %v799
    %v825 = vsel %vm738, %v735, %v822
    %v826 = vsel %vm738, 0, %v824
    %v827 = vcosq.f32.pop %v825
    %v828 = vsinq.f32.pop %v825
    %vm829 = vweird.f32 %v735
    %v830 = vadd.s32 %v826, 3
    %v831 = vand.u32 %v830, 3
    %vm832 = vcmp.lt.s32.totalorder %v831, 2
    %vm833 = vcmp.eq.s32.totalorder %v831, 0
    %v834 = vxor.u32 %v828, 2147483648
    %v835 = vsel %vm833, %v827, %v834
    %vm836 = vcmp.eq.s32.totalorder %v831, 2
    %v837 = vxor.u32 %v827, 2147483648
    %v838 = vsel %vm836, %v837, %v828
    %v839 = vsel %vm832, %v835, %v838
    %v840 = vsel %vm829, nan, %v839
    %v841 = vand.u32 2147483647, %v736
    %vm842 = vcmp.le.f32.partialorder %v841, 0.7853982
    %vm843 = vcmp.lt.s32.totalorder %v736, 0
    %v844 = vand.u32 %v736, 2139095040
    %v845 = vshrl.u32 %v844, 23
    %v846 = vsub.s32 %v845, 127
    %v847 = vand.u32 2147483647, %v736
    %v848 = vand.u32 %v847, 8388607
    %v849 = vor.u32 %v848, 8388608
    %v850 = vsub.s32 0, %v849
    %v851 = vadd.s32 %v846, 1
    %vm852 = vcmp.gt.s32.totalorder %v851, 0
    %v853 = vsel %vm852, %v851, 0
    %v854 = vshrl.u32 %v853, 5
    %v855 = vand.u32 %v853, 31
    %v856 = vsub.s32 32, %v855
    %v857 = vshrl.u32 683565275, %v856
    %v858 = vshll.u32 683565275, %v855
    %v859 = vshrl.u32 2475754826, %v856
    %v860 = vor.u32 %v858, %v859
    %v861 = vshll.u32 2475754826, %v855
    %v862 = vshrl.u32 2131351028, %v856
    %v863 = vor.u32 %v861, %v862
    %v864 = vshll.u32 2131351028, %v855
    %v865 = vshrl.u32 2102212464, %v856
    %v866 = vor.u32 %v864, %v865
    %v867 = vshll.u32 2102212464, %v855
    %v868 = vshrl.u32 920167782, %v856
    %v869 = vor.u32 %v867, %v868
    %v870 = vshll.u32 920167782, %v855
    %v871 = vshrl.u32 1326507024, %v856
    %v872 = vor.u32 %v870, %v871
    %vm873 = vcmp.lt.s32.totalorder %v854, 1
    %vm874 = vcmp.lt.s32.totalorder %v854, 2
    %vm875 = vcmp.lt.s32.totalorder %v854, 3
    %vm876 = vcmp.lt.s32.totalorder %v854, 4
    %v877 = vsel %vm873, %v857, %v860
    %v878 = vsel %vm876, %v866, 2102212464
    %v879 = vsel %vm875, %v863, %v878
    %v880 = vsel %vm874, %v877, %v879
    %v881 = vsel %vm873, %v860, %v863
    %v882 = vsel %vm876, %v869, 920167782
    %v883 = vsel %vm875, %v866, %v882
    %v884 = vsel %vm874, %v881, %v883
    %v885 = vsel %vm873, %v863, %v866
    %v886 = vsel %vm876, %v872, 1326507024
    %v887 = vsel %vm875, %v869, %v886
    %v888 = vsel %vm874, %v885, %v887
    %v889 = vshll.u32 %v849, 8
    %v890 = vmul.u32.u64.compose %v889, %v888
    %v891 = vextract.low.u32 %v890
    %v892 = vextract.high.u32 %v890
    %v893 = vmul.u32.u64.compose %v889, %v884
    %v894 = vextract.low.u32 %v893
    %v895 = vextract.high.u32 %v893
    %v896 = vmul.u32 %v889, %v880
    %v897 = vadd.s32 %v892, %v894
    %vm898 = vc.u32 %v892, %v894
    %v899 = vadd.s32 %v895, 1
    %v900 = vsel %vm898, %v899, %v895
    %v901 = vadd.s32 %v896, %v900
    %v902 = vadd.s32 %v901, 536870912
    %v903 = vshrl.u32 %v902, 30
    %v904 = vshll.u32 %v903, 30
    %v905 = vsub.s32 %v901, %v904
    %vm906 = vcmp.lt.s32.totalorder %v905, 0
    %v907 = vsub.s32 0, %v905
    %v908 = vsel %vm906, %v907, %v905
    %v909 = vclz %v908
    %v910 = vsub.s32 %v909, 2
    %vm911 = vcmp.gt.s32.totalorder 0, %v910
    %v912 = vsel %vm911, 0, %v910
    %v913 = vsub.s32 32, %v912
    %v914 = vshll.u32 %v905, %v912
    %v915 = vshrl.u32 %v897, %v913
    %v916 = vor.u32 %v914, %v915
    %v917 = vsub.s32 4294967266, %v912
    %v918 = vadd.s32 %v917, 127
    %v919 = vshll.u32 %v918, 23
    %v920 = vor.u32 4788187, %v919
    %v921 = vand.u32 2147483647, %v920
    %v923 = vcvt.s32.f32 %v916
    %v924 = vmul.f32 %v923, %v921
    %v925 = vxor.u32 %v924, 2147483648
    %v926 = vsel %vm843, %v925, %v924
    %v927 = vsub.s32 4, %v903
    %v928 = vsel %vm843, %v927, %v903
    %v929 = vsel %vm842, %v736, %v926
    %v930 = vsel %vm842, 0, %v928
    %v931 = vcosq.f32.pop %v929
    %v932 = vsinq.f32.pop %v929
    %vm933 = vweird.f32 %v736
    %v934 = vadd.s32 %v930, 3
    %v935 = vand.u32 %v934, 3
    %vm936 = vcmp.lt.s32.totalorder %v935, 2
    %vm937 = vcmp.eq.s32.totalorder %v935, 0
    %v938 = vxor.u32 %v932, 2147483648
    %v939 = vsel %vm937, %v931, %v938
    %vm940 = vcmp.eq.s32.totalorder %v935, 2
    %v941 = vxor.u32 %v931, 2147483648
    %v942 = vsel %vm940, %v941, %v932
    %v943 = vsel %vm936, %v939, %v942
    %v944 = vsel %vm933, nan, %v943
    %v945 = vstv %s85
    %v946 = vmul.f32 %v945, %v840
    %v947 = vmul.f32 %v945, %v944
    %v948 = vand.u32 2147483647, %v735
    %vm949 = vcmp.le.f32.partialorder %v948, 0.7853982
    %vm950 = vcmp.lt.s32.totalorder %v735, 0
    %v951 = vand.u32 %v735, 2139095040
    %v952 = vshrl.u32 %v951, 23
    %v953 = vsub.s32 %v952, 127
    %v954 = vand.u32 2147483647, %v735
    %v955 = vand.u32 %v954, 8388607
    %v956 = vor.u32 %v955, 8388608
    %v957 = vsub.s32 0, %v956
    %v958 = vadd.s32 %v953, 1
    %vm959 = vcmp.gt.s32.totalorder %v958, 0
    %v960 = vsel %vm959, %v958, 0
    %v961 = vshrl.u32 %v960, 5
    %v962 = vand.u32 %v960, 31
    %v963 = vsub.s32 32, %v962
    %v964 = vshrl.u32 683565275, %v963
    %v965 = vshll.u32 683565275, %v962
    %v966 = vshrl.u32 2475754826, %v963
    %v967 = vor.u32 %v965, %v966
    %v968 = vshll.u32 2475754826, %v962
    %v969 = vshrl.u32 2131351028, %v963
    %v970 = vor.u32 %v968, %v969
    %v971 = vshll.u32 2131351028, %v962
    %v972 = vshrl.u32 2102212464, %v963
    %v973 = vor.u32 %v971, %v972
    %v974 = vshll.u32 2102212464, %v962
    %v975 = vshrl.u32 920167782, %v963
    %v976 = vor.u32 %v974, %v975
    %v977 = vshll.u32 920167782, %v962
    %v978 = vshrl.u32 1326507024, %v963
    %v979 = vor.u32 %v977, %v978
    %vm980 = vcmp.lt.s32.totalorder %v961, 1
    %vm981 = vcmp.lt.s32.totalorder %v961, 2
    %vm982 = vcmp.lt.s32.totalorder %v961, 3
    %vm983 = vcmp.lt.s32.totalorder %v961, 4
    %v984 = vsel %vm980, %v964, %v967
    %v985 = vsel %vm983, %v973, 2102212464
    %v986 = vsel %vm982, %v970, %v985
    %v987 = vsel %vm981, %v984, %v986
    %v988 = vsel %vm980, %v967, %v970
    %v989 = vsel %vm983, %v976, 920167782
    %v990 = vsel %vm982, %v973, %v989
    %v991 = vsel %vm981, %v988, %v990
    %v992 = vsel %vm980, %v970, %v973
    %v993 = vsel %vm983, %v979, 1326507024
    %v994 = vsel %vm982, %v976, %v993
    %v995 = vsel %vm981, %v992, %v994
    %v996 = vshll.u32 %v956, 8
    %v997 = vmul.u32.u64.compose %v996, %v995
    %v998 = vextract.low.u32 %v997
    %v999 = vextract.high.u32 %v997
    %v1000 = vmul.u32.u64.compose %v996, %v991
    %v1001 = vextract.low.u32 %v1000
    %v1002 = vextract.high.u32 %v1000
    %v1003 = vmul.u32 %v996, %v987
    %v1004 = vadd.s32 %v999, %v1001
    %vm1005 = vc.u32 %v999, %v1001
    %v1006 = vadd.s32 %v1002, 1
    %v1007 = vsel %vm1005, %v1006, %v1002
    %v1008 = vadd.s32 %v1003, %v1007
    %v1009 = vadd.s32 %v1008, 536870912
    %v1010 = vshrl.u32 %v1009, 30
    %v1011 = vshll.u32 %v1010, 30
    %v1012 = vsub.s32 %v1008, %v1011
    %vm1013 = vcmp.lt.s32.totalorder %v1012, 0
    %v1014 = vsub.s32 0, %v1012
    %v1015 = vsel %vm1013, %v1014, %v1012
    %v1016 = vclz %v1015
    %v1017 = vsub.s32 %v1016, 2
    %vm1018 = vcmp.gt.s32.totalorder 0, %v1017
    %v1019 = vsel %vm1018, 0, %v1017
    %v1020 = vsub.s32 32, %v1019
    %v1021 = vshll.u32 %v1012, %v1019
    %v1022 = vshrl.u32 %v1004, %v1020
    %v1023 = vor.u32 %v1021, %v1022
    %v1024 = vsub.s32 4294967266, %v1019
    %v1025 = vadd.s32 %v1024, 127
    %v1026 = vshll.u32 %v1025, 23
    %v1027 = vor.u32 4788187, %v1026
    %v1028 = vand.u32 2147483647, %v1027
    %v1030 = vcvt.s32.f32 %v1023
    %v1031 = vmul.f32 %v1030, %v1028
    %v1032 = vxor.u32 %v1031, 2147483648
    %v1033 = vsel %vm950, %v1032, %v1031
    %v1034 = vsub.s32 4, %v1010
    %v1035 = vsel %vm950, %v1034, %v1010
    %v1036 = vsel %vm949, %v735, %v1033
    %v1037 = vsel %vm949, 0, %v1035
    %v1038 = vcosq.f32.pop %v1036
    %v1039 = vsinq.f32.pop %v1036
    %vm1040 = vweird.f32 %v735
    %v1041 = vand.u32 %v1037, 3
    %vm1042 = vcmp.lt.s32.totalorder %v1041, 2
    %vm1043 = vcmp.eq.s32.totalorder %v1041, 0
    %v1044 = vxor.u32 %v1039, 2147483648
    %v1045 = vsel %vm1043, %v1038, %v1044
    %vm1046 = vcmp.eq.s32.totalorder %v1041, 2
    %v1047 = vxor.u32 %v1038, 2147483648
    %v1048 = vsel %vm1046, %v1047, %v1039
    %v1049 = vsel %vm1042, %v1045, %v1048
    %v1050 = vsel %vm1040, nan, %v1049
    %v1051 = vand.u32 2147483647, %v736
    %vm1052 = vcmp.le.f32.partialorder %v1051, 0.7853982
    %vm1053 = vcmp.lt.s32.totalorder %v736, 0
    %v1054 = vand.u32 %v736, 2139095040
    %v1055 = vshrl.u32 %v1054, 23
    %v1056 = vsub.s32 %v1055, 127
    %v1057 = vand.u32 2147483647, %v736
    %v1058 = vand.u32 %v1057, 8388607
    %v1059 = vor.u32 %v1058, 8388608
    %v1060 = vsub.s32 0, %v1059
    %v1061 = vadd.s32 %v1056, 1
    %vm1062 = vcmp.gt.s32.totalorder %v1061, 0
    %v1063 = vsel %vm1062, %v1061, 0
    %v1064 = vshrl.u32 %v1063, 5
    %v1065 = vand.u32 %v1063, 31
    %v1066 = vsub.s32 32, %v1065
    %v1067 = vshrl.u32 683565275, %v1066
    %v1068 = vshll.u32 683565275, %v1065
    %v1069 = vshrl.u32 2475754826, %v1066
    %v1070 = vor.u32 %v1068, %v1069
    %v1071 = vshll.u32 2475754826, %v1065
    %v1072 = vshrl.u32 2131351028, %v1066
    %v1073 = vor.u32 %v1071, %v1072
    %v1074 = vshll.u32 2131351028, %v1065
    %v1075 = vshrl.u32 2102212464, %v1066
    %v1076 = vor.u32 %v1074, %v1075
    %v1077 = vshll.u32 2102212464, %v1065
    %v1078 = vshrl.u32 920167782, %v1066
    %v1079 = vor.u32 %v1077, %v1078
    %v1080 = vshll.u32 920167782, %v1065
    %v1081 = vshrl.u32 1326507024, %v1066
    %v1082 = vor.u32 %v1080, %v1081
    %vm1083 = vcmp.lt.s32.totalorder %v1064, 1
    %vm1084 = vcmp.lt.s32.totalorder %v1064, 2
    %vm1085 = vcmp.lt.s32.totalorder %v1064, 3
    %vm1086 = vcmp.lt.s32.totalorder %v1064, 4
    %v1087 = vsel %vm1083, %v1067, %v1070
    %v1088 = vsel %vm1086, %v1076, 2102212464
    %v1089 = vsel %vm1085, %v1073, %v1088
    %v1090 = vsel %vm1084, %v1087, %v1089
    %v1091 = vsel %vm1083, %v1070, %v1073
    %v1092 = vsel %vm1086, %v1079, 920167782
    %v1093 = vsel %vm1085, %v1076, %v1092
    %v1094 = vsel %vm1084, %v1091, %v1093
    %v1095 = vsel %vm1083, %v1073, %v1076
    %v1096 = vsel %vm1086, %v1082, 1326507024
    %v1097 = vsel %vm1085, %v1079, %v1096
    %v1098 = vsel %vm1084, %v1095, %v1097
    %v1099 = vshll.u32 %v1059, 8
    %v1100 = vmul.u32.u64.compose %v1099, %v1098
    %v1101 = vextract.low.u32 %v1100
    %v1102 = vextract.high.u32 %v1100
    %v1103 = vmul.u32.u64.compose %v1099, %v1094
    %v1104 = vextract.low.u32 %v1103
    %v1105 = vextract.high.u32 %v1103
    %v1106 = vmul.u32 %v1099, %v1090
    %v1107 = vadd.s32 %v1102, %v1104
    %vm1108 = vc.u32 %v1102, %v1104
    %v1109 = vadd.s32 %v1105, 1
    %v1110 = vsel %vm1108, %v1109, %v1105
    %v1111 = vadd.s32 %v1106, %v1110
    %v1112 = vadd.s32 %v1111, 536870912
    %v1113 = vshrl.u32 %v1112, 30
    %v1114 = vshll.u32 %v1113, 30
    %v1115 = vsub.s32 %v1111, %v1114
    %vm1116 = vcmp.lt.s32.totalorder %v1115, 0
    %v1117 = vsub.s32 0, %v1115
    %v1118 = vsel %vm1116, %v1117, %v1115
    %v1119 = vclz %v1118
    %v1120 = vsub.s32 %v1119, 2
    %vm1121 = vcmp.gt.s32.totalorder 0, %v1120
    %v1122 = vsel %vm1121, 0, %v1120
    %v1123 = vsub.s32 32, %v1122
    %v1124 = vshll.u32 %v1115, %v1122
    %v1125 = vshrl.u32 %v1107, %v1123
    %v1126 = vor.u32 %v1124, %v1125
    %v1127 = vsub.s32 4294967266, %v1122
    %v1128 = vadd.s32 %v1127, 127
    %v1129 = vshll.u32 %v1128, 23
    %v1130 = vor.u32 4788187, %v1129
    %v1131 = vand.u32 2147483647, %v1130
    %v1133 = vcvt.s32.f32 %v1126
    %v1134 = vmul.f32 %v1133, %v1131
    %v1135 = vxor.u32 %v1134, 2147483648
    %v1136 = vsel %vm1053, %v1135, %v1134
    %v1137 = vsub.s32 4, %v1113
    %v1138 = vsel %vm1053, %v1137, %v1113
    %v1139 = vsel %vm1052, %v736, %v1136
    %v1140 = vsel %vm1052, 0, %v1138
    %v1141 = vcosq.f32.pop %v1139
    %v1142 = vsinq.f32.pop %v1139
    %vm1143 = vweird.f32 %v736
    %v1144 = vand.u32 %v1140, 3
    %vm1145 = vcmp.lt.s32.totalorder %v1144, 2
    %vm1146 = vcmp.eq.s32.totalorder %v1144, 0
    %v1147 = vxor.u32 %v1142, 2147483648
    %v1148 = vsel %vm1146, %v1141, %v1147
    %vm1149 = vcmp.eq.s32.totalorder %v1144, 2
    %v1150 = vxor.u32 %v1141, 2147483648
    %v1151 = vsel %vm1149, %v1150, %v1142
    %v1152 = vsel %vm1145, %v1148, %v1151
    %v1153 = vsel %vm1143, nan, %v1152
    %v1154 = vstv %s86
    %v1155 = vmul.f32 %v1154, %v1050
    %v1156 = vmul.f32 %v1154, %v1153
    %v1157 = vadd.f32 %v946, %v1155
    %v1158 = vadd.f32 %v947, %v1156
    %v1159 = vld [vmem:[%s7] sm:$0xff]
    %v1160 = vld [vmem:[%s7 + $0x8] sm:$0xff]
    %v1161 = vld [vmem:[%s7 + $0x10] sm:$0xff]
    %v1162 = vld [vmem:[%s7 + $0x18] sm:$0xff]
    %v1163 = vld [vmem:[%s8] sm:$0x1]
    %v1165 = vlaneseq
    %v1166 = vshrl.u32 %v1165, 7
    %v1167 = vsub.s32 0, %v1166
    %v1168 = vrot.slane %v1163, %v1167
    %v1171 = vsel %vm110, %v1157, 0
    %v1174 = vsel %vm110, %v1158, 0
    %1176 = vmatprep.subr.mxu0 0.0
    %1177 = vmatpush1.msra.mxu0 0.0
    %1178 = vmatprep.subr.mxu0 0.0
    %1179 = vmatpush1.msra.mxu0 0.0
    %1180 = vmatprep.subr.mxu0 0.0
    %1181 = vmatpush1.msra.mxu0 0.0
    %1182 = vmatprep.subr.mxu0 0.0
    %1183 = vmatpush1.msra.mxu0 0.0
    %1184 = vmatprep.subr.mxu0 0.0
    %1185 = vmatpush1.msra.mxu0 0.0
    %1186 = vmatprep.subr.mxu0 0.0
    %1187 = vmatpush1.msra.mxu0 0.0
    %1188 = vmatprep.subr.mxu0 0.0
    %1189 = vmatpush1.msra.mxu0 0.0
    %1190 = vmatprep.subr.mxu0 0.0
    %1191 = vmatpush1.msra.mxu0 0.0
    %1192 = vmatprep.subr.mxu0 0.0
    %1193 = vmatpush1.msra.mxu0 0.0
    %1194 = vmatprep.subr.mxu0 0.0
    %1195 = vmatpush1.msra.mxu0 0.0
    %1196 = vmatprep.subr.mxu0 0.0
    %1197 = vmatpush1.msra.mxu0 0.0
    %1198 = vmatprep.subr.mxu0 0.0
    %1199 = vmatpush1.msra.mxu0 0.0
    %1200 = vmatprep.subr.mxu0 0.0
    %1201 = vmatpush1.msra.mxu0 %v1162
    %1202 = vmatprep.subr.mxu0 0.0
    %1203 = vmatpush1.msra.mxu0 %v1161
    %1204 = vmatprep.subr.mxu0 0.0
    %1205 = vmatpush1.msra.mxu0 %v1160
    %1206 = vmatprep.subr.mxu0 0.0
    %1207 = vmatpush1.msra.mxu0 %v1159
    %1208 = vmatprep.subr.mxu0 0.0
    %1209 = vmatpush2.msra.mxu0 0.0
    %1210 = vmatprep.subr.mxu0 0.0
    %1211 = vmatpush2.msra.mxu0 0.0
    %1212 = vmatprep.subr.mxu0 0.0
    %1213 = vmatpush2.msra.mxu0 0.0
    %1214 = vmatprep.subr.mxu0 0.0
    %1215 = vmatpush2.msra.mxu0 0.0
    %1216 = vmatprep.subr.mxu0 0.0
    %1217 = vmatpush2.msra.mxu0 0.0
    %1218 = vmatprep.subr.mxu0 0.0
    %1219 = vmatpush2.msra.mxu0 0.0
    %1220 = vmatprep.subr.mxu0 0.0
    %1221 = vmatpush2.msra.mxu0 0.0
    %1222 = vmatprep.subr.mxu0 0.0
    %1223 = vmatpush2.msra.mxu0 0.0
    %1224 = vmatprep.subr.mxu0 0.0
    %1225 = vmatpush2.msra.mxu0 0.0
    %1226 = vmatprep.subr.mxu0 0.0
    %1227 = vmatpush2.msra.mxu0 0.0
    %1228 = vmatprep.subr.mxu0 0.0
    %1229 = vmatpush2.msra.mxu0 0.0
    %1230 = vmatprep.subr.mxu0 0.0
    %1231 = vmatpush2.msra.mxu0 0.0
    %1232 = vmatprep.subr.mxu0 0.0
    %1233 = vmatpush2.msra.mxu0 0.0
    %1234 = vmatprep.subr.mxu0 0.0
    %1235 = vmatpush2.msra.mxu0 0.0
    %1236 = vmatprep.subr.mxu0 0.0
    %1237 = vmatpush2.msra.mxu0 0.0
    %1238 = vmatprep.subr.mxu0 0.0
    %1239 = vmatpush2.msra.mxu0 0.0
    %1240 = vmatprep.mubr.f32.mxu0 0.0
    %1241 = vmatmul.mubr.f32.gmra.mxu0 %v1171
    %v1242 = vpop.f32.mrf.mxu0
    %v1243 = vadd.f32 %v1168, %v1242
    %v1244 = vpop.f32.mrf.mxu0
    %1245 = vmatprep.mubr.f32.mxu0 0.0
    %1246 = vmatmul.mubr.f32.gmra.mxu0 %v1174
    %v1247 = vpop.f32.mrf.mxu0
    %v1248 = vadd.f32 %v1168, %v1247
    %v1249 = vpop.f32.mrf.mxu0
    %1250 = vdwg.mxu0
    %v1251 = vld [vmem:[%s9] sm:$0xff]
    %v1252 = vld [vmem:[%s9 + $0x8] sm:$0xff]
    %v1253 = vld [vmem:[%s9 + $0x10] sm:$0xff]
    %v1254 = vld [vmem:[%s9 + $0x18] sm:$0xff]
    %v1255 = vld [vmem:[%s10] sm:$0x1]
    %v1257 = vlaneseq
    %v1258 = vshrl.u32 %v1257, 7
    %v1259 = vsub.s32 0, %v1258
    %v1260 = vrot.slane %v1255, %v1259
    %1262 = vmatprep.subr.mxu0 0.0
    %1263 = vmatpush1.msra.mxu0 0.0
    %1264 = vmatprep.subr.mxu0 0.0
    %1265 = vmatpush1.msra.mxu0 0.0
    %1266 = vmatprep.subr.mxu0 0.0
    %1267 = vmatpush1.msra.mxu0 0.0
    %1268 = vmatprep.subr.mxu0 0.0
    %1269 = vmatpush1.msra.mxu0 0.0
    %1270 = vmatprep.subr.mxu0 0.0
    %1271 = vmatpush1.msra.mxu0 0.0
    %1272 = vmatprep.subr.mxu0 0.0
    %1273 = vmatpush1.msra.mxu0 0.0
    %1274 = vmatprep.subr.mxu0 0.0
    %1275 = vmatpush1.msra.mxu0 0.0
    %1276 = vmatprep.subr.mxu0 0.0
    %1277 = vmatpush1.msra.mxu0 0.0
    %1278 = vmatprep.subr.mxu0 0.0
    %1279 = vmatpush1.msra.mxu0 0.0
    %1280 = vmatprep.subr.mxu0 0.0
    %1281 = vmatpush1.msra.mxu0 0.0
    %1282 = vmatprep.subr.mxu0 0.0
    %1283 = vmatpush1.msra.mxu0 0.0
    %1284 = vmatprep.subr.mxu0 0.0
    %1285 = vmatpush1.msra.mxu0 0.0
    %1286 = vmatprep.subr.mxu0 0.0
    %1287 = vmatpush1.msra.mxu0 %v1254
    %1288 = vmatprep.subr.mxu0 0.0
    %1289 = vmatpush1.msra.mxu0 %v1253
    %1290 = vmatprep.subr.mxu0 0.0
    %1291 = vmatpush1.msra.mxu0 %v1252
    %1292 = vmatprep.subr.mxu0 0.0
    %1293 = vmatpush1.msra.mxu0 %v1251
    %1294 = vmatprep.subr.mxu0 0.0
    %1295 = vmatpush2.msra.mxu0 0.0
    %1296 = vmatprep.subr.mxu0 0.0
    %1297 = vmatpush2.msra.mxu0 0.0
    %1298 = vmatprep.subr.mxu0 0.0
    %1299 = vmatpush2.msra.mxu0 0.0
    %1300 = vmatprep.subr.mxu0 0.0
    %1301 = vmatpush2.msra.mxu0 0.0
    %1302 = vmatprep.subr.mxu0 0.0
    %1303 = vmatpush2.msra.mxu0 0.0
    %1304 = vmatprep.subr.mxu0 0.0
    %1305 = vmatpush2.msra.mxu0 0.0
    %1306 = vmatprep.subr.mxu0 0.0
    %1307 = vmatpush2.msra.mxu0 0.0
    %1308 = vmatprep.subr.mxu0 0.0
    %1309 = vmatpush2.msra.mxu0 0.0
    %1310 = vmatprep.subr.mxu0 0.0
    %1311 = vmatpush2.msra.mxu0 0.0
    %1312 = vmatprep.subr.mxu0 0.0
    %1313 = vmatpush2.msra.mxu0 0.0
    %1314 = vmatprep.subr.mxu0 0.0
    %1315 = vmatpush2.msra.mxu0 0.0
    %1316 = vmatprep.subr.mxu0 0.0
    %1317 = vmatpush2.msra.mxu0 0.0
    %1318 = vmatprep.subr.mxu0 0.0
    %1319 = vmatpush2.msra.mxu0 0.0
    %1320 = vmatprep.subr.mxu0 0.0
    %1321 = vmatpush2.msra.mxu0 0.0
    %1322 = vmatprep.subr.mxu0 0.0
    %1323 = vmatpush2.msra.mxu0 0.0
    %1324 = vmatprep.subr.mxu0 0.0
    %1325 = vmatpush2.msra.mxu0 0.0
    %1326 = vmatprep.mubr.f32.mxu0 0.0
    %1327 = vmatmul.mubr.f32.gmra.mxu0 %v1171
    %v1328 = vpop.f32.mrf.mxu0
    %v1329 = vadd.f32 %v1260, %v1328
    %v1330 = vpop.f32.mrf.mxu0
    %1331 = vmatprep.mubr.f32.mxu0 0.0
    %1332 = vmatmul.mubr.f32.gmra.mxu0 %v1174
    %v1333 = vpop.f32.mrf.mxu0
    %v1334 = vadd.f32 %v1260, %v1333
    %v1335 = vpop.f32.mrf.mxu0
    %1336 = vdwg.mxu0
    %v1337 = vld [vmem:[%s11] sm:$0xff]
    %v1338 = vld [vmem:[%s11 + $0x8] sm:$0xff]
    %v1339 = vld [vmem:[%s11 + $0x10] sm:$0xff]
    %v1340 = vld [vmem:[%s11 + $0x18] sm:$0xff]
    %v1341 = vld [vmem:[%s12] sm:$0x1]
    %v1343 = vlaneseq
    %v1344 = vshrl.u32 %v1343, 7
    %v1345 = vsub.s32 0, %v1344
    %v1346 = vrot.slane %v1341, %v1345
    %1348 = vmatprep.subr.mxu0 0.0
    %1349 = vmatpush1.msra.mxu0 0.0
    %1350 = vmatprep.subr.mxu0 0.0
    %1351 = vmatpush1.msra.mxu0 0.0
    %1352 = vmatprep.subr.mxu0 0.0
    %1353 = vmatpush1.msra.mxu0 0.0
    %1354 = vmatprep.subr.mxu0 0.0
    %1355 = vmatpush1.msra.mxu0 0.0
    %1356 = vmatprep.subr.mxu0 0.0
    %1357 = vmatpush1.msra.mxu0 0.0
    %1358 = vmatprep.subr.mxu0 0.0
    %1359 = vmatpush1.msra.mxu0 0.0
    %1360 = vmatprep.subr.mxu0 0.0
    %1361 = vmatpush1.msra.mxu0 0.0
    %1362 = vmatprep.subr.mxu0 0.0
    %1363 = vmatpush1.msra.mxu0 0.0
    %1364 = vmatprep.subr.mxu0 0.0
    %1365 = vmatpush1.msra.mxu0 0.0
    %1366 = vmatprep.subr.mxu0 0.0
    %1367 = vmatpush1.msra.mxu0 0.0
    %1368 = vmatprep.subr.mxu0 0.0
    %1369 = vmatpush1.msra.mxu0 0.0
    %1370 = vmatprep.subr.mxu0 0.0
    %1371 = vmatpush1.msra.mxu0 0.0
    %1372 = vmatprep.subr.mxu0 0.0
    %1373 = vmatpush1.msra.mxu0 %v1340
    %1374 = vmatprep.subr.mxu0 0.0
    %1375 = vmatpush1.msra.mxu0 %v1339
    %1376 = vmatprep.subr.mxu0 0.0
    %1377 = vmatpush1.msra.mxu0 %v1338
    %1378 = vmatprep.subr.mxu0 0.0
    %1379 = vmatpush1.msra.mxu0 %v1337
    %1380 = vmatprep.subr.mxu0 0.0
    %1381 = vmatpush2.msra.mxu0 0.0
    %1382 = vmatprep.subr.mxu0 0.0
    %1383 = vmatpush2.msra.mxu0 0.0
    %1384 = vmatprep.subr.mxu0 0.0
    %1385 = vmatpush2.msra.mxu0 0.0
    %1386 = vmatprep.subr.mxu0 0.0
    %1387 = vmatpush2.msra.mxu0 0.0
    %1388 = vmatprep.subr.mxu0 0.0
    %1389 = vmatpush2.msra.mxu0 0.0
    %1390 = vmatprep.subr.mxu0 0.0
    %1391 = vmatpush2.msra.mxu0 0.0
    %1392 = vmatprep.subr.mxu0 0.0
    %1393 = vmatpush2.msra.mxu0 0.0
    %1394 = vmatprep.subr.mxu0 0.0
    %1395 = vmatpush2.msra.mxu0 0.0
    %1396 = vmatprep.subr.mxu0 0.0
    %1397 = vmatpush2.msra.mxu0 0.0
    %1398 = vmatprep.subr.mxu0 0.0
    %1399 = vmatpush2.msra.mxu0 0.0
    %1400 = vmatprep.subr.mxu0 0.0
    %1401 = vmatpush2.msra.mxu0 0.0
    %1402 = vmatprep.subr.mxu0 0.0
    %1403 = vmatpush2.msra.mxu0 0.0
    %1404 = vmatprep.subr.mxu0 0.0
    %1405 = vmatpush2.msra.mxu0 0.0
    %1406 = vmatprep.subr.mxu0 0.0
    %1407 = vmatpush2.msra.mxu0 0.0
    %1408 = vmatprep.subr.mxu0 0.0
    %1409 = vmatpush2.msra.mxu0 0.0
    %1410 = vmatprep.subr.mxu0 0.0
    %1411 = vmatpush2.msra.mxu0 0.0
    %1412 = vmatprep.mubr.f32.mxu0 0.0
    %1413 = vmatmul.mubr.f32.gmra.mxu0 %v1171
    %v1414 = vpop.f32.mrf.mxu0
    %v1415 = vadd.f32 %v1346, %v1414
    %v1416 = vpop.f32.mrf.mxu0
    %1417 = vmatprep.mubr.f32.mxu0 0.0
    %1418 = vmatmul.mubr.f32.gmra.mxu0 %v1174
    %v1419 = vpop.f32.mrf.mxu0
    %v1420 = vadd.f32 %v1346, %v1419
    %v1421 = vpop.f32.mrf.mxu0
    %1422 = vdwg.mxu0
    %v1423 = vld [vmem:[%s13] sm:$0xff]
    %v1424 = vld [vmem:[%s14] sm:$0x1]
    %v1426 = vlaneseq
    %v1427 = vshrl.u32 %v1426, 7
    %v1428 = vsub.s32 0, %v1427
    %v1429 = vrot.slane %v1424, %v1428
    %vm1431 = vcmask 64512
    %v1433 = vsel %vm1431, %v1243, 0
    %v1436 = vsel %vm1431, %v1248, 0
    %1438 = vmatprep.subr.mxu0 0.0
    %1439 = vmatpush1.msra.mxu0 0.0
    %1440 = vmatprep.subr.mxu0 0.0
    %1441 = vmatpush1.msra.mxu0 0.0
    %1442 = vmatprep.subr.mxu0 0.0
    %1443 = vmatpush1.msra.mxu0 0.0
    %1444 = vmatprep.subr.mxu0 0.0
    %1445 = vmatpush1.msra.mxu0 0.0
    %1446 = vmatprep.subr.mxu0 0.0
    %1447 = vmatpush1.msra.mxu0 0.0
    %1448 = vmatprep.subr.mxu0 0.0
    %1449 = vmatpush1.msra.mxu0 0.0
    %1450 = vmatprep.subr.mxu0 0.0
    %1451 = vmatpush1.msra.mxu0 0.0
    %1452 = vmatprep.subr.mxu0 0.0
    %1453 = vmatpush1.msra.mxu0 0.0
    %1454 = vmatprep.subr.mxu0 0.0
    %1455 = vmatpush1.msra.mxu0 0.0
    %1456 = vmatprep.subr.mxu0 0.0
    %1457 = vmatpush1.msra.mxu0 0.0
    %1458 = vmatprep.subr.mxu0 0.0
    %1459 = vmatpush1.msra.mxu0 0.0
    %1460 = vmatprep.subr.mxu0 0.0
    %1461 = vmatpush1.msra.mxu0 0.0
    %1462 = vmatprep.subr.mxu0 0.0
    %1463 = vmatpush1.msra.mxu0 0.0
    %1464 = vmatprep.subr.mxu0 0.0
    %1465 = vmatpush1.msra.mxu0 0.0
    %1466 = vmatprep.subr.mxu0 0.0
    %1467 = vmatpush1.msra.mxu0 0.0
    %1468 = vmatprep.subr.mxu0 0.0
    %1469 = vmatpush1.msra.mxu0 %v1423
    %1470 = vmatprep.subr.mxu0 0.0
    %1471 = vmatpush2.msra.mxu0 0.0
    %1472 = vmatprep.subr.mxu0 0.0
    %1473 = vmatpush2.msra.mxu0 0.0
    %1474 = vmatprep.subr.mxu0 0.0
    %1475 = vmatpush2.msra.mxu0 0.0
    %1476 = vmatprep.subr.mxu0 0.0
    %1477 = vmatpush2.msra.mxu0 0.0
    %1478 = vmatprep.subr.mxu0 0.0
    %1479 = vmatpush2.msra.mxu0 0.0
    %1480 = vmatprep.subr.mxu0 0.0
    %1481 = vmatpush2.msra.mxu0 0.0
    %1482 = vmatprep.subr.mxu0 0.0
    %1483 = vmatpush2.msra.mxu0 0.0
    %1484 = vmatprep.subr.mxu0 0.0
    %1485 = vmatpush2.msra.mxu0 0.0
    %1486 = vmatprep.subr.mxu0 0.0
    %1487 = vmatpush2.msra.mxu0 0.0
    %1488 = vmatprep.subr.mxu0 0.0
    %1489 = vmatpush2.msra.mxu0 0.0
    %1490 = vmatprep.subr.mxu0 0.0
    %1491 = vmatpush2.msra.mxu0 0.0
    %1492 = vmatprep.subr.mxu0 0.0
    %1493 = vmatpush2.msra.mxu0 0.0
    %1494 = vmatprep.subr.mxu0 0.0
    %1495 = vmatpush2.msra.mxu0 0.0
    %1496 = vmatprep.subr.mxu0 0.0
    %1497 = vmatpush2.msra.mxu0 0.0
    %1498 = vmatprep.subr.mxu0 0.0
    %1499 = vmatpush2.msra.mxu0 0.0
    %1500 = vmatprep.subr.mxu0 0.0
    %1501 = vmatpush2.msra.mxu0 0.0
    %1502 = vmatprep.mubr.f32.mxu0 0.0
    %1503 = vmatmul.mubr.f32.gmra.mxu0 %v1433
    %v1504 = vpop.f32.mrf.mxu0
    %v1505 = vadd.f32 %v1429, %v1504
    %v1506 = vpop.f32.mrf.mxu0
    %1507 = vmatprep.mubr.f32.mxu0 0.0
    %1508 = vmatmul.mubr.f32.gmra.mxu0 %v1436
    %v1509 = vpop.f32.mrf.mxu0
    %v1510 = vadd.f32 %v1429, %v1509
    %v1511 = vpop.f32.mrf.mxu0
    %1512 = vdwg.mxu0
    %vm1513 = vcmp.gt.f32.partialorder %v1505, 20.0
    %vm1514 = vcmp.gt.f32.partialorder %v1510, 20.0
    %v1515 = vmin.f32 %v1505, 20.0
    %v1516 = vmin.f32 %v1510, 20.0
    %v1517 = vmul.f32 %v1515, 1.442695
    %v1518 = vpow.pop %v1517
    %v1519 = vmul.f32 %v1516, 1.442695
    %v1520 = vpow.pop %v1519
    %v1521 = vadd.f32 %v1518, 1.0
    %v1522 = vlog2.pop %v1521
    %v1523 = vmul.f32 %v1522, 0.6931472
    %v1524 = vmul.f32 -0.5, %v1518
    %v1525 = vadd.f32 %v1524, 1.0
    %v1526 = vmul.f32 %v1525, %v1518
    %v1527 = vand.u32 2147483647, %v1518
    %vm1528 = vcmp.lt.f32.partialorder %v1527, 0.0004427343
    %v1529 = vsel %vm1528, %v1526, %v1523
    %v1530 = vadd.f32 %v1520, 1.0
    %v1531 = vlog2.pop %v1530
    %v1532 = vmul.f32 %v1531, 0.6931472
    %v1533 = vmul.f32 -0.5, %v1520
    %v1534 = vadd.f32 %v1533, 1.0
    %v1535 = vmul.f32 %v1534, %v1520
    %v1536 = vand.u32 2147483647, %v1520
    %vm1537 = vcmp.lt.f32.partialorder %v1536, 0.0004427343
    %v1538 = vsel %vm1537, %v1535, %v1532
    %v1539 = vsel %vm1513, %v1505, %v1529
    %v1540 = vsel %vm1514, %v1510, %v1538
    %1541 = vst.msk [vmem:[#allocation2] sm:$0xff] %vm110, %v1539
    %1542 = vst.msk [vmem:[#allocation2 + $0x8] sm:$0xff] %vm110, %v1540
    %v1543 = vmul.f32 %v1539, %v1157
    %v1544 = vmul.f32 %v1540, %v1158
    %1545 = vst.msk [vmem:[#allocation3] sm:$0xff] %vm110, %v1543
    %1546 = vst.msk [vmem:[#allocation3 + $0x8] sm:$0xff] %vm110, %v1544
    %1547 = vst.msk [vmem:[#allocation4] sm:$0xff] %vm1431, %v1329
    %1548 = vst.msk [vmem:[#allocation4 + $0x8] sm:$0xff] %vm1431, %v1334
    %1549 = vst.msk [vmem:[#allocation5] sm:$0xff] %vm1431, %v1415
    %1550 = vst.msk [vmem:[#allocation5 + $0x8] sm:$0xff] %vm1431, %v1420
    %v1551 = vld [vmem:[%s15] sm:$0xff]
    %v1552 = vmul.f32 %v1551, 1.442695
    %v1553 = vpow.pop %v1552
    %v1554 = vsub.f32 0.0, %v1553
    %v1555 = vld [vmem:[#allocation2] sm:$0xff]
    %s1556 = scalar_lea.vmem [#allocation2], 8
    %v1557 = vld [vmem:[%s1556] sm:$0xff]
    %v1558 = vld [vmem:[#allocation3] sm:$0xff]
    %s1559 = scalar_lea.vmem [#allocation3], 8
    %v1560 = vld [vmem:[%s1559] sm:$0xff]
    %v1561 = vld [vmem:[#allocation4] sm:$0xff]
    %s1562 = scalar_lea.vmem [#allocation4], 8
    %v1563 = vld [vmem:[%s1562] sm:$0xff]
    %v1564 = vld [vmem:[#allocation5] sm:$0xff]
    %s1565 = scalar_lea.vmem [#allocation5], 8
    %v1566 = vld [vmem:[%s1565] sm:$0xff]
    %v1569 = vcombine.high %v1555, %v1555
    %v1571 = vunpack.c.l.s4 1966171168
    %v1572 = vunpack.c.0.s8 %v1571
    %v1573 = vlaneseq
    %v1574 = vshrl.u32 %v1573, 7
    %v1575 = vsub.s32 %v1572, %v1574
    %v1576 = vrot.slane %v1555, %v1575
    %v1578 = vunpack.c.l.s4 1966171168
    %v1579 = vunpack.c.0.s8 %v1578
    %v1580 = vlaneseq
    %v1581 = vshrl.u32 %v1580, 7
    %v1582 = vsub.s32 %v1579, %v1581
    %v1583 = vrot.slane %v1569, %v1582
    %v1584 = vcombine.high %v1576, %v1576
    %v1585 = vcombine.high %v1583, %v1583
    %v1587 = vunpack.c.l.s4 1966171168
    %v1588 = vunpack.c.0.s8 %v1587
    %v1589 = vlaneseq
    %v1590 = vshrl.u32 %v1589, 7
    %v1591 = vsub.s32 %v1588, %v1590
    %v1592 = vrot.slane %v1576, %v1591
    %v1594 = vunpack.c.l.s4 1966171168
    %v1595 = vunpack.c.0.s8 %v1594
    %v1596 = vlaneseq
    %v1597 = vshrl.u32 %v1596, 7
    %v1598 = vsub.s32 %v1595, %v1597
    %v1599 = vrot.slane %v1583, %v1598
    %v1601 = vunpack.c.l.s4 1966171168
    %v1602 = vunpack.c.0.s8 %v1601
    %v1603 = vlaneseq
    %v1604 = vshrl.u32 %v1603, 7
    %v1605 = vsub.s32 %v1602, %v1604
    %v1606 = vrot.slane %v1584, %v1605
    %v1608 = vunpack.c.l.s4 1966171168
    %v1609 = vunpack.c.0.s8 %v1608
    %v1610 = vlaneseq
    %v1611 = vshrl.u32 %v1610, 7
    %v1612 = vsub.s32 %v1609, %v1611
    %v1613 = vrot.slane %v1585, %v1612
    %v1614 = vcombine.high %v1592, %v1592
    %v1615 = vcombine.high %v1599, %v1599
    %v1616 = vcombine.high %v1606, %v1606
    %v1617 = vcombine.high %v1613, %v1613
    %v1618 = vcombine.high %v1557, %v1557
    %v1620 = vunpack.c.l.s4 1966171168
    %v1621 = vunpack.c.0.s8 %v1620
    %v1622 = vlaneseq
    %v1623 = vshrl.u32 %v1622, 7
    %v1624 = vsub.s32 %v1621, %v1623
    %v1625 = vrot.slane %v1557, %v1624
    %v1627 = vunpack.c.l.s4 1966171168
    %v1628 = vunpack.c.0.s8 %v1627
    %v1629 = vlaneseq
    %v1630 = vshrl.u32 %v1629, 7
    %v1631 = vsub.s32 %v1628, %v1630
    %v1632 = vrot.slane %v1618, %v1631
    %v1633 = vcombine.high %v1625, %v1625
    %v1634 = vcombine.high %v1632, %v1632
    %v1636 = vunpack.c.l.s4 1966171168
    %v1637 = vunpack.c.0.s8 %v1636
    %v1638 = vlaneseq
    %v1639 = vshrl.u32 %v1638, 7
    %v1640 = vsub.s32 %v1637, %v1639
    %v1641 = vrot.slane %v1625, %v1640
    %v1643 = vunpack.c.l.s4 1966171168
    %v1644 = vunpack.c.0.s8 %v1643
    %v1645 = vlaneseq
    %v1646 = vshrl.u32 %v1645, 7
    %v1647 = vsub.s32 %v1644, %v1646
    %v1648 = vrot.slane %v1632, %v1647
    %v1650 = vunpack.c.l.s4 1966171168
    %v1651 = vunpack.c.0.s8 %v1650
    %v1652 = vlaneseq
    %v1653 = vshrl.u32 %v1652, 7
    %v1654 = vsub.s32 %v1651, %v1653
    %v1655 = vrot.slane %v1633, %v1654
    %v1657 = vunpack.c.l.s4 1966171168
    %v1658 = vunpack.c.0.s8 %v1657
    %v1659 = vlaneseq
    %v1660 = vshrl.u32 %v1659, 7
    %v1661 = vsub.s32 %v1658, %v1660
    %v1662 = vrot.slane %v1634, %v1661
    %v1663 = vcombine.high %v1641, %v1641
    %v1664 = vcombine.high %v1648, %v1648
    %v1665 = vcombine.high %v1655, %v1655
    %v1666 = vcombine.high %v1662, %v1662
    %v1667 = vlaneseq
    %v1668 = vshrl.u32 %v1667, 7
    %v1669 = vsub.s32 0, %v1668
    %v1670 = vrot.slane %v1592, %v1669
    %v1671 = vlaneseq
    %v1672 = vshrl.u32 %v1671, 7
    %v1673 = vsub.s32 0, %v1672
    %v1674 = vrot.slane %v1606, %v1673
    %v1675 = vlaneseq
    %v1676 = vshrl.u32 %v1675, 7
    %v1677 = vsub.s32 0, %v1676
    %v1678 = vrot.slane %v1614, %v1677
    %v1679 = vlaneseq
    %v1680 = vshrl.u32 %v1679, 7
    %v1681 = vsub.s32 0, %v1680
    %v1682 = vrot.slane %v1616, %v1681
    %v1683 = vlaneseq
    %v1684 = vshrl.u32 %v1683, 7
    %v1685 = vsub.s32 0, %v1684
    %v1686 = vrot.slane %v1599, %v1685
    %v1687 = vlaneseq
    %v1688 = vshrl.u32 %v1687, 7
    %v1689 = vsub.s32 0, %v1688
    %v1690 = vrot.slane %v1613, %v1689
    %v1691 = vlaneseq
    %v1692 = vshrl.u32 %v1691, 7
    %v1693 = vsub.s32 0, %v1692
    %v1694 = vrot.slane %v1615, %v1693
    %v1695 = vlaneseq
    %v1696 = vshrl.u32 %v1695, 7
    %v1697 = vsub.s32 0, %v1696
    %v1698 = vrot.slane %v1617, %v1697
    %v1699 = vlaneseq
    %v1700 = vshrl.u32 %v1699, 7
    %v1701 = vsub.s32 0, %v1700
    %v1702 = vrot.slane %v1641, %v1701
    %v1703 = vlaneseq
    %v1704 = vshrl.u32 %v1703, 7
    %v1705 = vsub.s32 0, %v1704
    %v1706 = vrot.slane %v1655, %v1705
    %v1707 = vlaneseq
    %v1708 = vshrl.u32 %v1707, 7
    %v1709 = vsub.s32 0, %v1708
    %v1710 = vrot.slane %v1663, %v1709
    %v1711 = vlaneseq
    %v1712 = vshrl.u32 %v1711, 7
    %v1713 = vsub.s32 0, %v1712
    %v1714 = vrot.slane %v1665, %v1713
    %v1715 = vlaneseq
    %v1716 = vshrl.u32 %v1715, 7
    %v1717 = vsub.s32 0, %v1716
    %v1718 = vrot.slane %v1648, %v1717
    %v1719 = vlaneseq
    %v1720 = vshrl.u32 %v1719, 7
    %v1721 = vsub.s32 0, %v1720
    %v1722 = vrot.slane %v1662, %v1721
    %v1723 = vlaneseq
    %v1724 = vshrl.u32 %v1723, 7
    %v1725 = vsub.s32 0, %v1724
    %v1726 = vrot.slane %v1664, %v1725
    %v1727 = vlaneseq
    %v1728 = vshrl.u32 %v1727, 7
    %v1729 = vsub.s32 0, %v1728
    %v1730 = vrot.slane %v1666, %v1729
    %v1747 = vmul.f32 %v1670, %v1554
    %v1748 = vmul.f32 %v1674, %v1554
    %v1749 = vmul.f32 %v1678, %v1554
    %v1750 = vmul.f32 %v1682, %v1554
    %v1751 = vmul.f32 %v1686, %v1554
    %v1752 = vmul.f32 %v1690, %v1554
    %v1753 = vmul.f32 %v1694, %v1554
    %v1754 = vmul.f32 %v1698, %v1554
    %v1755 = vmul.f32 %v1702, %v1554
    %v1756 = vmul.f32 %v1706, %v1554
    %v1757 = vmul.f32 %v1710, %v1554
    %v1758 = vmul.f32 %v1714, %v1554
    %v1759 = vmul.f32 %v1718, %v1554
    %v1760 = vmul.f32 %v1722, %v1554
    %v1761 = vmul.f32 %v1726, %v1554
    %v1762 = vmul.f32 %v1730, %v1554
    %v1763 = vmul.f32 %v1747, 1.442695
    %v1764 = vpow.pop %v1763
    %v1765 = vmul.f32 %v1748, 1.442695
    %v1766 = vpow.pop %v1765
    %v1767 = vmul.f32 %v1749, 1.442695
    %v1768 = vpow.pop %v1767
    %v1769 = vmul.f32 %v1750, 1.442695
    %v1770 = vpow.pop %v1769
    %v1771 = vmul.f32 %v1751, 1.442695
    %v1772 = vpow.pop %v1771
    %v1773 = vmul.f32 %v1752, 1.442695
    %v1774 = vpow.pop %v1773
    %v1775 = vmul.f32 %v1753, 1.442695
    %v1776 = vpow.pop %v1775
    %v1777 = vmul.f32 %v1754, 1.442695
    %v1778 = vpow.pop %v1777
    %v1779 = vmul.f32 %v1755, 1.442695
    %v1780 = vpow.pop %v1779
    %v1781 = vmul.f32 %v1756, 1.442695
    %v1782 = vpow.pop %v1781
    %v1783 = vmul.f32 %v1757, 1.442695
    %v1784 = vpow.pop %v1783
    %v1785 = vmul.f32 %v1758, 1.442695
    %v1786 = vpow.pop %v1785
    %v1787 = vmul.f32 %v1759, 1.442695
    %v1788 = vpow.pop %v1787
    %v1789 = vmul.f32 %v1760, 1.442695
    %v1790 = vpow.pop %v1789
    %v1791 = vmul.f32 %v1761, 1.442695
    %v1792 = vpow.pop %v1791
    %v1793 = vmul.f32 %v1762, 1.442695
    %v1794 = vpow.pop %v1793
    %v1797 = vcombine.high %v1558, %v1558
    %v1799 = vunpack.c.l.s4 1966171168
    %v1800 = vunpack.c.0.s8 %v1799
    %v1801 = vlaneseq
    %v1802 = vshrl.u32 %v1801, 7
    %v1803 = vsub.s32 %v1800, %v1802
    %v1804 = vrot.slane %v1558, %v1803
    %v1806 = vunpack.c.l.s4 1966171168
    %v1807 = vunpack.c.0.s8 %v1806
    %v1808 = vlaneseq
    %v1809 = vshrl.u32 %v1808, 7
    %v1810 = vsub.s32 %v1807, %v1809
    %v1811 = vrot.slane %v1797, %v1810
    %v1812 = vcombine.high %v1804, %v1804
    %v1813 = vcombine.high %v1811, %v1811
    %v1815 = vunpack.c.l.s4 1966171168
    %v1816 = vunpack.c.0.s8 %v1815
    %v1817 = vlaneseq
    %v1818 = vshrl.u32 %v1817, 7
    %v1819 = vsub.s32 %v1816, %v1818
    %v1820 = vrot.slane %v1804, %v1819
    %v1822 = vunpack.c.l.s4 1966171168
    %v1823 = vunpack.c.0.s8 %v1822
    %v1824 = vlaneseq
    %v1825 = vshrl.u32 %v1824, 7
    %v1826 = vsub.s32 %v1823, %v1825
    %v1827 = vrot.slane %v1811, %v1826
    %v1829 = vunpack.c.l.s4 1966171168
    %v1830 = vunpack.c.0.s8 %v1829
    %v1831 = vlaneseq
    %v1832 = vshrl.u32 %v1831, 7
    %v1833 = vsub.s32 %v1830, %v1832
    %v1834 = vrot.slane %v1812, %v1833
    %v1836 = vunpack.c.l.s4 1966171168
    %v1837 = vunpack.c.0.s8 %v1836
    %v1838 = vlaneseq
    %v1839 = vshrl.u32 %v1838, 7
    %v1840 = vsub.s32 %v1837, %v1839
    %v1841 = vrot.slane %v1813, %v1840
    %v1842 = vcombine.high %v1820, %v1820
    %v1843 = vcombine.high %v1827, %v1827
    %v1844 = vcombine.high %v1834, %v1834
    %v1845 = vcombine.high %v1841, %v1841
    %v1846 = vcombine.high %v1560, %v1560
    %v1848 = vunpack.c.l.s4 1966171168
    %v1849 = vunpack.c.0.s8 %v1848
    %v1850 = vlaneseq
    %v1851 = vshrl.u32 %v1850, 7
    %v1852 = vsub.s32 %v1849, %v1851
    %v1853 = vrot.slane %v1560, %v1852
    %v1855 = vunpack.c.l.s4 1966171168
    %v1856 = vunpack.c.0.s8 %v1855
    %v1857 = vlaneseq
    %v1858 = vshrl.u32 %v1857, 7
    %v1859 = vsub.s32 %v1856, %v1858
    %v1860 = vrot.slane %v1846, %v1859
    %v1861 = vcombine.high %v1853, %v1853
    %v1862 = vcombine.high %v1860, %v1860
    %v1864 = vunpack.c.l.s4 1966171168
    %v1865 = vunpack.c.0.s8 %v1864
    %v1866 = vlaneseq
    %v1867 = vshrl.u32 %v1866, 7
    %v1868 = vsub.s32 %v1865, %v1867
    %v1869 = vrot.slane %v1853, %v1868
    %v1871 = vunpack.c.l.s4 1966171168
    %v1872 = vunpack.c.0.s8 %v1871
    %v1873 = vlaneseq
    %v1874 = vshrl.u32 %v1873, 7
    %v1875 = vsub.s32 %v1872, %v1874
    %v1876 = vrot.slane %v1860, %v1875
    %v1878 = vunpack.c.l.s4 1966171168
    %v1879 = vunpack.c.0.s8 %v1878
    %v1880 = vlaneseq
    %v1881 = vshrl.u32 %v1880, 7
    %v1882 = vsub.s32 %v1879, %v1881
    %v1883 = vrot.slane %v1861, %v1882
    %v1885 = vunpack.c.l.s4 1966171168
    %v1886 = vunpack.c.0.s8 %v1885
    %v1887 = vlaneseq
    %v1888 = vshrl.u32 %v1887, 7
    %v1889 = vsub.s32 %v1886, %v1888
    %v1890 = vrot.slane %v1862, %v1889
    %v1891 = vcombine.high %v1869, %v1869
    %v1892 = vcombine.high %v1876, %v1876
    %v1893 = vcombine.high %v1883, %v1883
    %v1894 = vcombine.high %v1890, %v1890
    %v1895 = vlaneseq
    %v1896 = vshrl.u32 %v1895, 7
    %v1897 = vsub.s32 0, %v1896
    %v1898 = vrot.slane %v1561, %v1897
    %1900 = vbcast.lane.b32.xlu0 %v1898, 256
    %v1901 = vpop.permute.xlu0 %1900
    %v1902 = vlaneseq
    %v1903 = vshrl.u32 %v1902, 7
    %v1904 = vsub.s32 1, %v1903
    %v1905 = vrot.slane %v1561, %v1904
    %1907 = vbcast.lane.b32.xlu0 %v1905, 256
    %v1908 = vpop.permute.xlu0 %1907
    %v1909 = vlaneseq
    %v1910 = vshrl.u32 %v1909, 7
    %v1911 = vsub.s32 2, %v1910
    %v1912 = vrot.slane %v1561, %v1911
    %1914 = vbcast.lane.b32.xlu0 %v1912, 256
    %v1915 = vpop.permute.xlu0 %1914
    %v1916 = vlaneseq
    %v1917 = vshrl.u32 %v1916, 7
    %v1918 = vsub.s32 3, %v1917
    %v1919 = vrot.slane %v1561, %v1918
    %1921 = vbcast.lane.b32.xlu0 %v1919, 256
    %v1922 = vpop.permute.xlu0 %1921
    %v1923 = vlaneseq
    %v1924 = vshrl.u32 %v1923, 7
    %v1925 = vsub.s32 4, %v1924
    %v1926 = vrot.slane %v1561, %v1925
    %1928 = vbcast.lane.b32.xlu0 %v1926, 256
    %v1929 = vpop.permute.xlu0 %1928
    %v1930 = vlaneseq
    %v1931 = vshrl.u32 %v1930, 7
    %v1932 = vsub.s32 5, %v1931
    %v1933 = vrot.slane %v1561, %v1932
    %1935 = vbcast.lane.b32.xlu0 %v1933, 256
    %v1936 = vpop.permute.xlu0 %1935
    %v1937 = vlaneseq
    %v1938 = vshrl.u32 %v1937, 7
    %v1939 = vsub.s32 6, %v1938
    %v1940 = vrot.slane %v1561, %v1939
    %1942 = vbcast.lane.b32.xlu0 %v1940, 256
    %v1943 = vpop.permute.xlu0 %1942
    %v1944 = vlaneseq
    %v1945 = vshrl.u32 %v1944, 7
    %v1946 = vsub.s32 7, %v1945
    %v1947 = vrot.slane %v1561, %v1946
    %1949 = vbcast.lane.b32.xlu0 %v1947, 256
    %v1950 = vpop.permute.xlu0 %1949
    %v1951 = vlaneseq
    %v1952 = vshrl.u32 %v1951, 7
    %v1953 = vsub.s32 0, %v1952
    %v1954 = vrot.slane %v1563, %v1953
    %1956 = vbcast.lane.b32.xlu0 %v1954, 256
    %v1957 = vpop.permute.xlu0 %1956
    %v1958 = vlaneseq
    %v1959 = vshrl.u32 %v1958, 7
    %v1960 = vsub.s32 1, %v1959
    %v1961 = vrot.slane %v1563, %v1960
    %1963 = vbcast.lane.b32.xlu0 %v1961, 256
    %v1964 = vpop.permute.xlu0 %1963
    %v1965 = vlaneseq
    %v1966 = vshrl.u32 %v1965, 7
    %v1967 = vsub.s32 2, %v1966
    %v1968 = vrot.slane %v1563, %v1967
    %1970 = vbcast.lane.b32.xlu0 %v1968, 256
    %v1971 = vpop.permute.xlu0 %1970
    %v1972 = vlaneseq
    %v1973 = vshrl.u32 %v1972, 7
    %v1974 = vsub.s32 3, %v1973
    %v1975 = vrot.slane %v1563, %v1974
    %1977 = vbcast.lane.b32.xlu0 %v1975, 256
    %v1978 = vpop.permute.xlu0 %1977
    %v1979 = vlaneseq
    %v1980 = vshrl.u32 %v1979, 7
    %v1981 = vsub.s32 4, %v1980
    %v1982 = vrot.slane %v1563, %v1981
    %1984 = vbcast.lane.b32.xlu0 %v1982, 256
    %v1985 = vpop.permute.xlu0 %1984
    %v1986 = vlaneseq
    %v1987 = vshrl.u32 %v1986, 7
    %v1988 = vsub.s32 5, %v1987
    %v1989 = vrot.slane %v1563, %v1988
    %1991 = vbcast.lane.b32.xlu0 %v1989, 256
    %v1992 = vpop.permute.xlu0 %1991
    %v1993 = vlaneseq
    %v1994 = vshrl.u32 %v1993, 7
    %v1995 = vsub.s32 6, %v1994
    %v1996 = vrot.slane %v1563, %v1995
    %1998 = vbcast.lane.b32.xlu0 %v1996, 256
    %v1999 = vpop.permute.xlu0 %1998
    %v2000 = vlaneseq
    %v2001 = vshrl.u32 %v2000, 7
    %v2002 = vsub.s32 7, %v2001
    %v2003 = vrot.slane %v1563, %v2002
    %2005 = vbcast.lane.b32.xlu0 %v2003, 256
    %v2006 = vpop.permute.xlu0 %2005
    %v2007 = vlaneseq
    %v2008 = vshrl.u32 %v2007, 7
    %v2009 = vsub.s32 0, %v2008
    %v2010 = vrot.slane %v1820, %v2009
    %v2011 = vlaneseq
    %v2012 = vshrl.u32 %v2011, 7
    %v2013 = vsub.s32 0, %v2012
    %v2014 = vrot.slane %v1834, %v2013
    %v2015 = vlaneseq
    %v2016 = vshrl.u32 %v2015, 7
    %v2017 = vsub.s32 0, %v2016
    %v2018 = vrot.slane %v1842, %v2017
    %v2019 = vlaneseq
    %v2020 = vshrl.u32 %v2019, 7
    %v2021 = vsub.s32 0, %v2020
    %v2022 = vrot.slane %v1844, %v2021
    %v2023 = vlaneseq
    %v2024 = vshrl.u32 %v2023, 7
    %v2025 = vsub.s32 0, %v2024
    %v2026 = vrot.slane %v1827, %v2025
    %v2027 = vlaneseq
    %v2028 = vshrl.u32 %v2027, 7
    %v2029 = vsub.s32 0, %v2028
    %v2030 = vrot.slane %v1841, %v2029
    %v2031 = vlaneseq
    %v2032 = vshrl.u32 %v2031, 7
    %v2033 = vsub.s32 0, %v2032
    %v2034 = vrot.slane %v1843, %v2033
    %v2035 = vlaneseq
    %v2036 = vshrl.u32 %v2035, 7
    %v2037 = vsub.s32 0, %v2036
    %v2038 = vrot.slane %v1845, %v2037
    %v2039 = vlaneseq
    %v2040 = vshrl.u32 %v2039, 7
    %v2041 = vsub.s32 0, %v2040
    %v2042 = vrot.slane %v1869, %v2041
    %v2043 = vlaneseq
    %v2044 = vshrl.u32 %v2043, 7
    %v2045 = vsub.s32 0, %v2044
    %v2046 = vrot.slane %v1883, %v2045
    %v2047 = vlaneseq
    %v2048 = vshrl.u32 %v2047, 7
    %v2049 = vsub.s32 0, %v2048
    %v2050 = vrot.slane %v1891, %v2049
    %v2051 = vlaneseq
    %v2052 = vshrl.u32 %v2051, 7
    %v2053 = vsub.s32 0, %v2052
    %v2054 = vrot.slane %v1893, %v2053
    %v2055 = vlaneseq
    %v2056 = vshrl.u32 %v2055, 7
    %v2057 = vsub.s32 0, %v2056
    %v2058 = vrot.slane %v1876, %v2057
    %v2059 = vlaneseq
    %v2060 = vshrl.u32 %v2059, 7
    %v2061 = vsub.s32 0, %v2060
    %v2062 = vrot.slane %v1890, %v2061
    %v2063 = vlaneseq
    %v2064 = vshrl.u32 %v2063, 7
    %v2065 = vsub.s32 0, %v2064
    %v2066 = vrot.slane %v1892, %v2065
    %v2067 = vlaneseq
    %v2068 = vshrl.u32 %v2067, 7
    %v2069 = vsub.s32 0, %v2068
    %v2070 = vrot.slane %v1894, %v2069
    %v2087 = vmul.f32 %v2010, %v1901
    %v2088 = vmul.f32 %v2014, %v1908
    %v2089 = vmul.f32 %v2018, %v1915
    %v2090 = vmul.f32 %v2022, %v1922
    %v2091 = vmul.f32 %v2026, %v1929
    %v2092 = vmul.f32 %v2030, %v1936
    %v2093 = vmul.f32 %v2034, %v1943
    %v2094 = vmul.f32 %v2038, %v1950
    %v2095 = vmul.f32 %v2042, %v1957
    %v2096 = vmul.f32 %v2046, %v1964
    %v2097 = vmul.f32 %v2050, %v1971
    %v2098 = vmul.f32 %v2054, %v1978
    %v2099 = vmul.f32 %v2058, %v1985
    %v2100 = vmul.f32 %v2062, %v1992
    %v2101 = vmul.f32 %v2066, %v1999
    %v2102 = vmul.f32 %v2070, %v2006
    %v2103 = vlaneseq
    %v2104 = vshrl.u32 %v2103, 7
    %v2105 = vsub.s32 0, %v2104
    %v2106 = vrot.slane %v1564, %v2105
    %2108 = vbcast.lane.b32.xlu0 %v2106, 256
    %v2109 = vpop.permute.xlu0 %2108
    %v2110 = vlaneseq
    %v2111 = vshrl.u32 %v2110, 7
    %v2112 = vsub.s32 1, %v2111
    %v2113 = vrot.slane %v1564, %v2112
    %2115 = vbcast.lane.b32.xlu0 %v2113, 256
    %v2116 = vpop.permute.xlu0 %2115
    %v2117 = vlaneseq
    %v2118 = vshrl.u32 %v2117, 7
    %v2119 = vsub.s32 2, %v2118
    %v2120 = vrot.slane %v1564, %v2119
    %2122 = vbcast.lane.b32.xlu0 %v2120, 256
    %v2123 = vpop.permute.xlu0 %2122
    %v2124 = vlaneseq
    %v2125 = vshrl.u32 %v2124, 7
    %v2126 = vsub.s32 3, %v2125
    %v2127 = vrot.slane %v1564, %v2126
    %2129 = vbcast.lane.b32.xlu0 %v2127, 256
    %v2130 = vpop.permute.xlu0 %2129
    %v2131 = vlaneseq
    %v2132 = vshrl.u32 %v2131, 7
    %v2133 = vsub.s32 4, %v2132
    %v2134 = vrot.slane %v1564, %v2133
    %2136 = vbcast.lane.b32.xlu0 %v2134, 256
    %v2137 = vpop.permute.xlu0 %2136
    %v2138 = vlaneseq
    %v2139 = vshrl.u32 %v2138, 7
    %v2140 = vsub.s32 5, %v2139
    %v2141 = vrot.slane %v1564, %v2140
    %2143 = vbcast.lane.b32.xlu0 %v2141, 256
    %v2144 = vpop.permute.xlu0 %2143
    %v2145 = vlaneseq
    %v2146 = vshrl.u32 %v2145, 7
    %v2147 = vsub.s32 6, %v2146
    %v2148 = vrot.slane %v1564, %v2147
    %2150 = vbcast.lane.b32.xlu0 %v2148, 256
    %v2151 = vpop.permute.xlu0 %2150
    %v2152 = vlaneseq
    %v2153 = vshrl.u32 %v2152, 7
    %v2154 = vsub.s32 7, %v2153
    %v2155 = vrot.slane %v1564, %v2154
    %2157 = vbcast.lane.b32.xlu0 %v2155, 256
    %v2158 = vpop.permute.xlu0 %2157
    %v2159 = vlaneseq
    %v2160 = vshrl.u32 %v2159, 7
    %v2161 = vsub.s32 0, %v2160
    %v2162 = vrot.slane %v1566, %v2161
    %2164 = vbcast.lane.b32.xlu0 %v2162, 256
    %v2165 = vpop.permute.xlu0 %2164
    %v2166 = vlaneseq
    %v2167 = vshrl.u32 %v2166, 7
    %v2168 = vsub.s32 1, %v2167
    %v2169 = vrot.slane %v1566, %v2168
    %2171 = vbcast.lane.b32.xlu0 %v2169, 256
    %v2172 = vpop.permute.xlu0 %2171
    %v2173 = vlaneseq
    %v2174 = vshrl.u32 %v2173, 7
    %v2175 = vsub.s32 2, %v2174
    %v2176 = vrot.slane %v1566, %v2175
    %2178 = vbcast.lane.b32.xlu0 %v2176, 256
    %v2179 = vpop.permute.xlu0 %2178
    %v2180 = vlaneseq
    %v2181 = vshrl.u32 %v2180, 7
    %v2182 = vsub.s32 3, %v2181
    %v2183 = vrot.slane %v1566, %v2182
    %2185 = vbcast.lane.b32.xlu0 %v2183, 256
    %v2186 = vpop.permute.xlu0 %2185
    %v2187 = vlaneseq
    %v2188 = vshrl.u32 %v2187, 7
    %v2189 = vsub.s32 4, %v2188
    %v2190 = vrot.slane %v1566, %v2189
    %2192 = vbcast.lane.b32.xlu0 %v2190, 256
    %v2193 = vpop.permute.xlu0 %2192
    %v2194 = vlaneseq
    %v2195 = vshrl.u32 %v2194, 7
    %v2196 = vsub.s32 5, %v2195
    %v2197 = vrot.slane %v1566, %v2196
    %2199 = vbcast.lane.b32.xlu0 %v2197, 256
    %v2200 = vpop.permute.xlu0 %2199
    %v2201 = vlaneseq
    %v2202 = vshrl.u32 %v2201, 7
    %v2203 = vsub.s32 6, %v2202
    %v2204 = vrot.slane %v1566, %v2203
    %2206 = vbcast.lane.b32.xlu0 %v2204, 256
    %v2207 = vpop.permute.xlu0 %2206
    %v2208 = vlaneseq
    %v2209 = vshrl.u32 %v2208, 7
    %v2210 = vsub.s32 7, %v2209
    %v2211 = vrot.slane %v1566, %v2210
    %2213 = vbcast.lane.b32.xlu0 %v2211, 256
    %v2214 = vpop.permute.xlu0 %2213
    %v2215 = vmul.f32 %v1764, 0.0
    %v2216 = vmul.f32 %v1780, 0.0
    %v2217 = vadd.f32 %v2215, %v2087
    %v2218 = vadd.f32 %v2216, %v2095
    %v2219 = vmul.f32 %v2217, %v2109
    %v2220 = vmul.f32 %v2218, %v2165
    %v2221 = vsel %vm110, %v2219, 0.0
    %v2222 = vrot.slane %v2221, 4
    %v2223 = vadd.f32 %v2221, %v2222
    %v2224 = vrot.slane %v2223, 2
    %v2225 = vadd.f32 %v2223, %v2224
    %v2226 = vrot.slane %v2225, 1
    %v2227 = vadd.f32 %v2225, %v2226
    %v2228 = vsel %vm110, %v2220, 0.0
    %v2229 = vrot.slane %v2228, 4
    %v2230 = vadd.f32 %v2228, %v2229
    %v2231 = vrot.slane %v2230, 2
    %v2232 = vadd.f32 %v2230, %v2231
    %v2233 = vrot.slane %v2232, 1
    %v2234 = vadd.f32 %v2232, %v2233
    %v2235 = vmul.f32 %v1766, %v2217
    %v2236 = vmul.f32 %v1782, %v2218
    %v2237 = vadd.f32 %v2235, %v2088
    %v2238 = vadd.f32 %v2236, %v2096
    %v2239 = vmul.f32 %v2237, %v2116
    %v2240 = vmul.f32 %v2238, %v2172
    %v2241 = vsel %vm110, %v2239, 0.0
    %v2242 = vrot.slane %v2241, 4
    %v2243 = vadd.f32 %v2241, %v2242
    %v2244 = vrot.slane %v2243, 2
    %v2245 = vadd.f32 %v2243, %v2244
    %v2246 = vrot.slane %v2245, 1
    %v2247 = vadd.f32 %v2245, %v2246
    %v2248 = vsel %vm110, %v2240, 0.0
    %v2249 = vrot.slane %v2248, 4
    %v2250 = vadd.f32 %v2248, %v2249
    %v2251 = vrot.slane %v2250, 2
    %v2252 = vadd.f32 %v2250, %v2251
    %v2253 = vrot.slane %v2252, 1
    %v2254 = vadd.f32 %v2252, %v2253
    %v2255 = vmul.f32 %v1768, %v2237
    %v2256 = vmul.f32 %v1784, %v2238
    %v2257 = vadd.f32 %v2255, %v2089
    %v2258 = vadd.f32 %v2256, %v2097
    %v2259 = vmul.f32 %v2257, %v2123
    %v2260 = vmul.f32 %v2258, %v2179
    %v2261 = vsel %vm110, %v2259, 0.0
    %v2262 = vrot.slane %v2261, 4
    %v2263 = vadd.f32 %v2261, %v2262
    %v2264 = vrot.slane %v2263, 2
    %v2265 = vadd.f32 %v2263, %v2264
    %v2266 = vrot.slane %v2265, 1
    %v2267 = vadd.f32 %v2265, %v2266
    %v2268 = vsel %vm110, %v2260, 0.0
    %v2269 = vrot.slane %v2268, 4
    %v2270 = vadd.f32 %v2268, %v2269
    %v2271 = vrot.slane %v2270, 2
    %v2272 = vadd.f32 %v2270, %v2271
    %v2273 = vrot.slane %v2272, 1
    %v2274 = vadd.f32 %v2272, %v2273
    %v2275 = vmul.f32 %v1770, %v2257
    %v2276 = vmul.f32 %v1786, %v2258
    %v2277 = vadd.f32 %v2275, %v2090
    %v2278 = vadd.f32 %v2276, %v2098
    %v2279 = vmul.f32 %v2277, %v2130
    %v2280 = vmul.f32 %v2278, %v2186
    %v2281 = vsel %vm110, %v2279, 0.0
    %v2282 = vrot.slane %v2281, 4
    %v2283 = vadd.f32 %v2281, %v2282
    %v2284 = vrot.slane %v2283, 2
    %v2285 = vadd.f32 %v2283, %v2284
    %v2286 = vrot.slane %v2285, 1
    %v2287 = vadd.f32 %v2285, %v2286
    %v2288 = vsel %vm110, %v2280, 0.0
    %v2289 = vrot.slane %v2288, 4
    %v2290 = vadd.f32 %v2288, %v2289
    %v2291 = vrot.slane %v2290, 2
    %v2292 = vadd.f32 %v2290, %v2291
    %v2293 = vrot.slane %v2292, 1
    %v2294 = vadd.f32 %v2292, %v2293
    %v2295 = vmul.f32 %v1772, %v2277
    %v2296 = vmul.f32 %v1788, %v2278
    %v2297 = vadd.f32 %v2295, %v2091
    %v2298 = vadd.f32 %v2296, %v2099
    %v2299 = vmul.f32 %v2297, %v2137
    %v2300 = vmul.f32 %v2298, %v2193
    %v2301 = vsel %vm110, %v2299, 0.0
    %v2302 = vrot.slane %v2301, 4
    %v2303 = vadd.f32 %v2301, %v2302
    %v2304 = vrot.slane %v2303, 2
    %v2305 = vadd.f32 %v2303, %v2304
    %v2306 = vrot.slane %v2305, 1
    %v2307 = vadd.f32 %v2305, %v2306
    %v2308 = vsel %vm110, %v2300, 0.0
    %v2309 = vrot.slane %v2308, 4
    %v2310 = vadd.f32 %v2308, %v2309
    %v2311 = vrot.slane %v2310, 2
    %v2312 = vadd.f32 %v2310, %v2311
    %v2313 = vrot.slane %v2312, 1
    %v2314 = vadd.f32 %v2312, %v2313
    %v2315 = vmul.f32 %v1774, %v2297
    %v2316 = vmul.f32 %v1790, %v2298
    %v2317 = vadd.f32 %v2315, %v2092
    %v2318 = vadd.f32 %v2316, %v2100
    %v2319 = vmul.f32 %v2317, %v2144
    %v2320 = vmul.f32 %v2318, %v2200
    %v2321 = vsel %vm110, %v2319, 0.0
    %v2322 = vrot.slane %v2321, 4
    %v2323 = vadd.f32 %v2321, %v2322
    %v2324 = vrot.slane %v2323, 2
    %v2325 = vadd.f32 %v2323, %v2324
    %v2326 = vrot.slane %v2325, 1
    %v2327 = vadd.f32 %v2325, %v2326
    %v2328 = vsel %vm110, %v2320, 0.0
    %v2329 = vrot.slane %v2328, 4
    %v2330 = vadd.f32 %v2328, %v2329
    %v2331 = vrot.slane %v2330, 2
    %v2332 = vadd.f32 %v2330, %v2331
    %v2333 = vrot.slane %v2332, 1
    %v2334 = vadd.f32 %v2332, %v2333
    %v2335 = vmul.f32 %v1776, %v2317
    %v2336 = vmul.f32 %v1792, %v2318
    %v2337 = vadd.f32 %v2335, %v2093
    %v2338 = vadd.f32 %v2336, %v2101
    %v2339 = vmul.f32 %v2337, %v2151
    %v2340 = vmul.f32 %v2338, %v2207
    %v2341 = vsel %vm110, %v2339, 0.0
    %v2342 = vrot.slane %v2341, 4
    %v2343 = vadd.f32 %v2341, %v2342
    %v2344 = vrot.slane %v2343, 2
    %v2345 = vadd.f32 %v2343, %v2344
    %v2346 = vrot.slane %v2345, 1
    %v2347 = vadd.f32 %v2345, %v2346
    %v2348 = vsel %vm110, %v2340, 0.0
    %v2349 = vrot.slane %v2348, 4
    %v2350 = vadd.f32 %v2348, %v2349
    %v2351 = vrot.slane %v2350, 2
    %v2352 = vadd.f32 %v2350, %v2351
    %v2353 = vrot.slane %v2352, 1
    %v2354 = vadd.f32 %v2352, %v2353
    %v2355 = vmul.f32 %v1778, %v2337
    %v2356 = vmul.f32 %v1794, %v2338
    %v2357 = vadd.f32 %v2355, %v2094
    %v2358 = vadd.f32 %v2356, %v2102
    %v2359 = vmul.f32 %v2357, %v2158
    %v2360 = vmul.f32 %v2358, %v2214
    %v2361 = vsel %vm110, %v2359, 0.0
    %v2362 = vrot.slane %v2361, 4
    %v2363 = vadd.f32 %v2361, %v2362
    %v2364 = vrot.slane %v2363, 2
    %v2365 = vadd.f32 %v2363, %v2364
    %v2366 = vrot.slane %v2365, 1
    %v2367 = vadd.f32 %v2365, %v2366
    %v2368 = vsel %vm110, %v2360, 0.0
    %v2369 = vrot.slane %v2368, 4
    %v2370 = vadd.f32 %v2368, %v2369
    %v2371 = vrot.slane %v2370, 2
    %v2372 = vadd.f32 %v2370, %v2371
    %v2373 = vrot.slane %v2372, 1
    %v2374 = vadd.f32 %v2372, %v2373
    %vm2375 = vcmask 1040384
    %v2376 = vsel %vm2375, %v2227, %v2247
    %v2377 = vsel %vm2375, %v2234, %v2254
    %vm2378 = vcmask 1041408
    %v2379 = vsel %vm2378, %v2376, %v2267
    %v2380 = vsel %vm2378, %v2377, %v2274
    %vm2381 = vcmask 1042432
    %v2382 = vsel %vm2381, %v2379, %v2287
    %v2383 = vsel %vm2381, %v2380, %v2294
    %vm2384 = vcmask 1043456
    %v2385 = vsel %vm2384, %v2382, %v2307
    %v2386 = vsel %vm2384, %v2383, %v2314
    %vm2387 = vcmask 1044480
    %v2388 = vsel %vm2387, %v2385, %v2327
    %v2389 = vsel %vm2387, %v2386, %v2334
    %vm2390 = vcmask 1045504
    %v2391 = vsel %vm2390, %v2388, %v2347
    %v2392 = vsel %vm2390, %v2389, %v2354
    %vm2393 = vcmask 1046528
    %v2394 = vsel %vm2393, %v2391, %v2367
    %v2395 = vsel %vm2393, %v2392, %v2374
    %2396 = vst.msk [vmem:[#allocation6] sm:$0xff] %vm110, %v2394
    %s2397 = scalar_lea.vmem [#allocation6], 8
    %2398 = vst.msk [vmem:[%s2397] sm:$0xff] %vm110, %v2395
    %v2399 = vld [vmem:[#allocation6] sm:$0xff]
    %v2400 = vld [vmem:[#allocation6 + $0x8] sm:$0xff]
    %v2401 = vld [vmem:[%s16] sm:$0x1]
    %v2403 = vlaneseq
    %v2404 = vshrl.u32 %v2403, 7
    %v2405 = vsub.s32 0, %v2404
    %v2406 = vrot.slane %v2401, %v2405
    %v2408 = vmul.f32 %v2406, %v1157
    %v2409 = vmul.f32 %v2406, %v1158
    %v2410 = vadd.f32 %v2399, %v2408
    %v2411 = vadd.f32 %v2400, %v2409
    %v2412 = vmul.f32 %v2410, %v575
    %v2413 = vmul.f32 %v2411, %v576
    %v2414 = vpack.c.bf16 %v2413, %v2412
    %v2415 = vld [vmem:[%s17] sm:$0xf]
    %v2416 = vld [vmem:[%s17 + $0x4] sm:$0xf]
    %v2417 = vld [vmem:[%s17 + $0x8] sm:$0xf]
    %v2418 = vld [vmem:[%s17 + $0xc] sm:$0xf]
    %v2419 = vld [vmem:[%s18] sm:$0x1]
    %v2421 = vlaneseq
    %v2422 = vshrl.u32 %v2421, 7
    %v2423 = vsub.s32 0, %v2422
    %v2424 = vrot.slane %v2419, %v2423
    %v2430 = vunpack.c.l.b16 %v2415
    %v2431 = vunpack.c.l.b16 %v2416
    %v2432 = vunpack.c.l.b16 %v2417
    %v2433 = vunpack.c.l.b16 %v2418
    %v2434 = vpack.c.b16 %v2431, %v2430
    %v2435 = vpack.c.b16 %v2433, %v2432
    %v2439 = vsel %vm110, %v2414, 0
    %2441 = vmatprep.subr.bf16.mxu0 0
    %2442 = vmatpush1.bf16.msra.mxu0 0
    %2443 = vmatprep.subr.bf16.mxu0 0
    %2444 = vmatpush1.bf16.msra.mxu0 0
    %2445 = vmatprep.subr.bf16.mxu0 0
    %2446 = vmatpush1.bf16.msra.mxu0 0
    %2447 = vmatprep.subr.bf16.mxu0 0
    %2448 = vmatpush1.bf16.msra.mxu0 0
    %2449 = vmatprep.subr.bf16.mxu0 0
    %2450 = vmatpush1.bf16.msra.mxu0 0
    %2451 = vmatprep.subr.bf16.mxu0 0
    %2452 = vmatpush1.bf16.msra.mxu0 0
    %2453 = vmatprep.subr.bf16.mxu0 0
    %2454 = vmatpush1.bf16.msra.mxu0 %v2435
    %2455 = vmatprep.subr.bf16.mxu0 0
    %2456 = vmatpush1.bf16.msra.mxu0 %v2434
    %2457 = vmatprep.subr.bf16.mxu0 0
    %2458 = vmatpush2.bf16.msra.mxu0 0
    %2459 = vmatprep.subr.bf16.mxu0 0
    %2460 = vmatpush2.bf16.msra.mxu0 0
    %2461 = vmatprep.subr.bf16.mxu0 0
    %2462 = vmatpush2.bf16.msra.mxu0 0
    %2463 = vmatprep.subr.bf16.mxu0 0
    %2464 = vmatpush2.bf16.msra.mxu0 0
    %2465 = vmatprep.subr.bf16.mxu0 0
    %2466 = vmatpush2.bf16.msra.mxu0 0
    %2467 = vmatprep.subr.bf16.mxu0 0
    %2468 = vmatpush2.bf16.msra.mxu0 0
    %2469 = vmatprep.subr.bf16.mxu0 0
    %2470 = vmatpush2.bf16.msra.mxu0 0
    %2471 = vmatprep.subr.bf16.mxu0 0
    %2472 = vmatpush2.bf16.msra.mxu0 0
    %2473 = vmatprep.mubr.bf16.mxu0 0
    %2474 = vmatmul.mubr.bf16.gmra.mxu0 %v2439
    %v2475 = vpop.f32.mrf.mxu0
    %v2476 = vadd.f32 %v2424, %v2475
    %v2477 = vpop.f32.mrf.mxu0
    %v2478 = vpop.f32.mrf.mxu0
    %v2479 = vadd.f32 %v2424, %v2478
    %v2480 = vpop.f32.mrf.mxu0
    %2481 = vdwg.mxu0
    %v2482 = vadd.f32 %v2476, %v80
    %v2483 = vadd.f32 %v2479, %v81
    %2484 = vst.msk [vmem:[#allocation10] sm:$0xff] %vm110, %v2482
    %2485 = vst.msk [vmem:[#allocation10 + $0x8] sm:$0xff] %vm110, %v2483
    // Predicated region
    $region86: #{tpu_custom_call.1} parent=1 // pred_check
      _
    $region87: #{tpu_custom_call.1} parent=1 // pred_check_branch
      %2487 = sbr.rel (0) target = $region89
    $region88: #{tpu_custom_call.1} parent=1 // pred_region
      %s2489 = ssub.s32 256, 256
      %2490 = vsyncadd [#allocation8], %s2489
      %s2491 = sshll.u32 [#allocation10], 4
      %s2492 = int_to_ptr.vmem [resolvable:$true] %s2491
      %2497 = dma.vmem_to_hbm [thread:$0]  %s2492, 256, %s20, [#allocation8], 128, 128, 8
    $region89: #{tpu_custom_call.1} parent=1 // pred_fallthru
      _
    // Predicated region
    $region90: #{tpu_custom_call.1} parent=1 // pred_check
      _
    $region91: #{tpu_custom_call.1} parent=1 // pred_check_branch
      %2499 = sbr.rel (0) target = $region93
    $region92: #{tpu_custom_call.1} parent=1 // pred_region
      %2500 = dma.done [#allocation8], 256
    $region93: #{tpu_custom_call.1} parent=1 // pred_fallthru
      _
    %2501 = vsyncpa [#allocation8], 1
    %2502 = vsyncpa [#allocation9], 1

// kernel: tpu_custom_call.1
$region0: #{tpu_custom_call.1}
  #allocation0 [shape = 'u32[]', space=smem, size = 0x4, offset = 0x4, fixed_abs, tag = 'smem constant byte address 0x4 - core index']
  #allocation1 [shape = 'u32[144,128]{1,0:T(1,128)}', space=vmem, size = 0x12000, scoped, tag = 'internal scratch']
  #allocation2 [shape = 'f32[16,32]{1,0:T(8,128)}', space=vmem, size = 0x2000, scoped, tag = 'scratch operand']
  #allocation3 [shape = 'f32[16,32]{1,0:T(8,128)}', space=vmem, size = 0x2000, scoped, tag = 'scratch operand']
  #allocation4 [shape = 'f32[16,8]{1,0:T(8,128)}', space=vmem, size = 0x2000, scoped, tag = 'scratch operand']
  #allocation5 [shape = 'f32[16,8]{1,0:T(8,128)}', space=vmem, size = 0x2000, scoped, tag = 'scratch operand']
  #allocation6 [shape = 'f32[16,32]{1,0:T(8,128)}', space=vmem, size = 0x2000, scoped, tag = 'scratch operand']
  %s0 = inlined_call_operand.vmem [shape: f32[16,32], index: 0, kind: input, shape index: {}]
  %s1 = inlined_call_operand.vmem [shape: bf16[32,32], index: 1, kind: input, shape index: {}]
  %s2 = inlined_call_operand.vmem [shape: f32[1,32], index: 2, kind: input, shape index: {}]
  %s3 = inlined_call_operand.vmem [shape: bf16[32,32], index: 3, kind: input, shape index: {}]
  %s4 = inlined_call_operand.vmem [shape: f32[1,32], index: 4, kind: input, shape index: {}]
  %s5 = inlined_call_operand.vmem [shape: bf16[32,32], index: 5, kind: input, shape index: {}]
  %s6 = inlined_call_operand.vmem [shape: f32[1,32], index: 6, kind: input, shape index: {}]
  %s7 = inlined_call_operand.vmem [shape: f32[32,8], index: 7, kind: input, shape index: {}]
  %s8 = inlined_call_operand.vmem [shape: f32[1,8], index: 8, kind: input, shape index: {}]
  %s9 = inlined_call_operand.vmem [shape: f32[32,8], index: 9, kind: input, shape index: {}]
  %s10 = inlined_call_operand.vmem [shape: f32[1,8], index: 10, kind: input, shape index: {}]
  %s11 = inlined_call_operand.vmem [shape: f32[32,8], index: 11, kind: input, shape index: {}]
  %s12 = inlined_call_operand.vmem [shape: f32[1,8], index: 12, kind: input, shape index: {}]
  %s13 = inlined_call_operand.vmem [shape: f32[8,32], index: 13, kind: input, shape index: {}]
  %s14 = inlined_call_operand.vmem [shape: f32[1,32], index: 14, kind: input, shape index: {}]
  %s15 = inlined_call_operand.vmem [shape: f32[8,32], index: 15, kind: input, shape index: {}]
  %s16 = inlined_call_operand.vmem [shape: f32[1,32], index: 16, kind: input, shape index: {}]
  %s17 = inlined_call_operand.vmem [shape: bf16[32,32], index: 17, kind: input, shape index: {}]
  %s18 = inlined_call_operand.vmem [shape: f32[1,32], index: 18, kind: input, shape index: {}]
  %s19 = inlined_call_operand.vmem [shape: f32[4], index: 19, kind: input, shape index: {}]
  %s20 = inlined_call_operand.hbm [shape: f32[16,32], index: 20, kind: output, shape index: {}]
  %s21 = sld [smem:[#allocation0]]
  $region94: #{tpu_custom_call.1} parent=0
    _
  %s23 = ssub.s32 1, %s21
  %s24 = scalar_select 0, %s23, %s21
  $region1: #{tpu_custom_call.1} parent=0
    #allocation7 [shape = 'u8[512]{0}', space=smem, size = 0x200, scoped, tag = 'input window, operand 19, single buffered']
    #allocation8 [shape = 's32[1]{0}', space=sflag, size = 0x4, scoped, tag = 'scoped memory for tpu_custom_call.1']
    #allocation9 [shape = 's32[1]{0}', space=sflag, size = 0x4, scoped, tag = 'scoped memory for tpu_custom_call.1']
    #allocation10 [shape = 'u8[8192]{0}', space=vmem, size = 0x2000, scoped, tag = 'output window, operand 0, single buffered']
    %25 = vsyncpa [#allocation9], 0
    %26 = vsyncpa [#allocation8], 0
    // Predicated region
    $region2: #{tpu_custom_call.1} parent=1 // pred_check
      _
    $region3: #{tpu_custom_call.1} parent=1 // pred_check_branch
      %28 = sbr.rel (0) target = $region5
    $region4: #{tpu_custom_call.1} parent=1 // pred_region
      _
    $region5: #{tpu_custom_call.1} parent=1 // pred_fallthru
      _
    // Predicated region
    $region6: #{tpu_custom_call.1} parent=1 // pred_check
      _
    $region7: #{tpu_custom_call.1} parent=1 // pred_check_branch
      %30 = sbr.rel (0) target = $region9
    $region8: #{tpu_custom_call.1} parent=1 // pred_region
      _
    $region9: #{tpu_custom_call.1} parent=1 // pred_fallthru
      _
    // Predicated region
    $region10: #{tpu_custom_call.1} parent=1 // pred_check
      _
    $region11: #{tpu_custom_call.1} parent=1 // pred_check_branch
      %32 = sbr.rel (0) target = $region13
    $region12: #{tpu_custom_call.1} parent=1 // pred_region
      _
    $region13: #{tpu_custom_call.1} parent=1 // pred_fallthru
      _
    // Predicated region
    $region14: #{tpu_custom_call.1} parent=1 // pred_check
      _
    $region15: #{tpu_custom_call.1} parent=1 // pred_check_branch
      %34 = sbr.rel (0) target = $region17
    $region16: #{tpu_custom_call.1} parent=1 // pred_region
      _
    $region17: #{tpu_custom_call.1} parent=1 // pred_fallthru
      _
    // Predicated region
    $region18: #{tpu_custom_call.1} parent=1 // pred_check
      _
    $region19: #{tpu_custom_call.1} parent=1 // pred_check_branch
      %36 = sbr.rel (0) target = $region21
    $region20: #{tpu_custom_call.1} parent=1 // pred_region
      _
    $region21: #{tpu_custom_call.1} parent=1 // pred_fallthru
      _
    // Predicated region
    $region22: #{tpu_custom_call.1} parent=1 // pred_check
      _
    $region23: #{tpu_custom_call.1} parent=1 // pred_check_branch
      %38 = sbr.rel (0) target = $region25
    $region24: #{tpu_custom_call.1} parent=1 // pred_region
      _
    $region25: #{tpu_custom_call.1} parent=1 // pred_fallthru
      _
    // Predicated region
    $region26: #{tpu_custom_call.1} parent=1 // pred_check
      _
    $region27: #{tpu_custom_call.1} parent=1 // pred_check_branch
      %40 = sbr.rel (0) target = $region29
    $region28: #{tpu_custom_call.1} parent=1 // pred_region
      _
    $region29: #{tpu_custom_call.1} parent=1 // pred_fallthru
      _
    // Predicated region
    $region30: #{tpu_custom_call.1} parent=1 // pred_check
      _
    $region31: #{tpu_custom_call.1} parent=1 // pred_check_branch
      %42 = sbr.rel (0) target = $region33
    $region32: #{tpu_custom_call.1} parent=1 // pred_region
      _
    $region33: #{tpu_custom_call.1} parent=1 // pred_fallthru
      _
    // Predicated region
    $region34: #{tpu_custom_call.1} parent=1 // pred_check
      _
    $region35: #{tpu_custom_call.1} parent=1 // pred_check_branch
      %44 = sbr.rel (0) target = $region37
    $region36: #{tpu_custom_call.1} parent=1 // pred_region
      _
    $region37: #{tpu_custom_call.1} parent=1 // pred_fallthru
      _
    // Predicated region
    $region38: #{tpu_custom_call.1} parent=1 // pred_check
      _
    $region39: #{tpu_custom_call.1} parent=1 // pred_check_branch
      %46 = sbr.rel (0) target = $region41
    $region40: #{tpu_custom_call.1} parent=1 // pred_region
      _
    $region41: #{tpu_custom_call.1} parent=1 // pred_fallthru
      _
    // Predicated region
    $region42: #{tpu_custom_call.1} parent=1 // pred_check
      _
    $region43: #{tpu_custom_call.1} parent=1 // pred_check_branch
      %48 = sbr.rel (0) target = $region45
    $region44: #{tpu_custom_call.1} parent=1 // pred_region
      _
    $region45: #{tpu_custom_call.1} parent=1 // pred_fallthru
      _
    // Predicated region
    $region46: #{tpu_custom_call.1} parent=1 // pred_check
      _
    $region47: #{tpu_custom_call.1} parent=1 // pred_check_branch
      %50 = sbr.rel (0) target = $region49
    $region48: #{tpu_custom_call.1} parent=1 // pred_region
      _
    $region49: #{tpu_custom_call.1} parent=1 // pred_fallthru
      _
    // Predicated region
    $region50: #{tpu_custom_call.1} parent=1 // pred_check
      _
    $region51: #{tpu_custom_call.1} parent=1 // pred_check_branch
      %52 = sbr.rel (0) target = $region53
    $region52: #{tpu_custom_call.1} parent=1 // pred_region
      _
    $region53: #{tpu_custom_call.1} parent=1 // pred_fallthru
      _
    // Predicated region
    $region54: #{tpu_custom_call.1} parent=1 // pred_check
      _
    $region55: #{tpu_custom_call.1} parent=1 // pred_check_branch
      %54 = sbr.rel (0) target = $region57
    $region56: #{tpu_custom_call.1} parent=1 // pred_region
      _
    $region57: #{tpu_custom_call.1} parent=1 // pred_fallthru
      _
    // Predicated region
    $region58: #{tpu_custom_call.1} parent=1 // pred_check
      _
    $region59: #{tpu_custom_call.1} parent=1 // pred_check_branch
      %56 = sbr.rel (0) target = $region61
    $region60: #{tpu_custom_call.1} parent=1 // pred_region
      _
    $region61: #{tpu_custom_call.1} parent=1 // pred_fallthru
      _
    // Predicated region
    $region62: #{tpu_custom_call.1} parent=1 // pred_check
      _
    $region63: #{tpu_custom_call.1} parent=1 // pred_check_branch
      %58 = sbr.rel (0) target = $region65
    $region64: #{tpu_custom_call.1} parent=1 // pred_region
      _
    $region65: #{tpu_custom_call.1} parent=1 // pred_fallthru
      _
    // Predicated region
    $region66: #{tpu_custom_call.1} parent=1 // pred_check
      _
    $region67: #{tpu_custom_call.1} parent=1 // pred_check_branch
      %60 = sbr.rel (0) target = $region69
    $region68: #{tpu_custom_call.1} parent=1 // pred_region
      _
    $region69: #{tpu_custom_call.1} parent=1 // pred_fallthru
      _
    // Predicated region
    $region70: #{tpu_custom_call.1} parent=1 // pred_check
      _
    $region71: #{tpu_custom_call.1} parent=1 // pred_check_branch
      %62 = sbr.rel (0) target = $region73
    $region72: #{tpu_custom_call.1} parent=1 // pred_region
      _
    $region73: #{tpu_custom_call.1} parent=1 // pred_fallthru
      _
    // Predicated region
    $region74: #{tpu_custom_call.1} parent=1 // pred_check
      _
    $region75: #{tpu_custom_call.1} parent=1 // pred_check_branch
      %64 = sbr.rel (0) target = $region77
    $region76: #{tpu_custom_call.1} parent=1 // pred_region
      _
    $region77: #{tpu_custom_call.1} parent=1 // pred_fallthru
      _
    // Predicated region
    $region78: #{tpu_custom_call.1} parent=1 // pred_check
      _
    $region79: #{tpu_custom_call.1} parent=1 // pred_check_branch
      %66 = sbr.rel (0) target = $region81
    $region80: #{tpu_custom_call.1} parent=1 // pred_region
      %s68 = ssub.s32 16, 16
      %69 = vsyncadd [#allocation9], %s68
      %s71 = sshll.u32 %s19, 4
      %s72 = int_to_ptr.vmem [resolvable:$true] %s71
      %74 = dma.vmem_to_smem %s72, 16, [#allocation7], [#allocation9]
    $region81: #{tpu_custom_call.1} parent=1 // pred_fallthru
      _
    // Predicated region
    $region82: #{tpu_custom_call.1} parent=1 // pred_check
      _
    $region83: #{tpu_custom_call.1} parent=1 // pred_check_branch
      %76 = sbr.rel (0) target = $region85
    $region84: #{tpu_custom_call.1} parent=1 // pred_region
      %77 = dma.done [#allocation9], 16
    $region85: #{tpu_custom_call.1} parent=1 // pred_fallthru
      _
    %78 = sfence
    %v80 = vld [vmem:[%s0] sm:$0xff]
    %v81 = vld [vmem:[%s0 + $0x8] sm:$0xff]
    %v82 = vpack.c.bf16 %v81, %v80
    %s83 = sld [smem:[#allocation7]]
    %s84 = sld [smem:[#allocation7 + $0x1]]
    %s85 = sld [smem:[#allocation7 + $0x2]]
    %s86 = sld [smem:[#allocation7 + $0x3]]
    %v87 = vld [vmem:[%s1] sm:$0xf]
    %v88 = vld [vmem:[%s1 + $0x4] sm:$0xf]
    %v89 = vld [vmem:[%s1 + $0x8] sm:$0xf]
    %v90 = vld [vmem:[%s1 + $0xc] sm:$0xf]
    %v91 = vld [vmem:[%s2] sm:$0x1]
    %v93 = vlaneseq
    %v94 = vshrl.u32 %v93, 7
    %v95 = vsub.s32 0, %v94
    %v96 = vrot.slane %v91, %v95
    %v102 = vunpack.c.l.b16 %v87
    %v103 = vunpack.c.l.b16 %v88
    %v104 = vunpack.c.l.b16 %v89
    %v105 = vunpack.c.l.b16 %v90
    %v106 = vpack.c.b16 %v103, %v102
    %v107 = vpack.c.b16 %v105, %v104
    %vm110 = vcmask 261120
    %v112 = vsel %vm110, %v82, 0
    %114 = vmatprep.subr.bf16.mxu0 0
    %115 = vmatpush1.bf16.msra.mxu0 0
    %116 = vmatprep.subr.bf16.mxu0 0
    %117 = vmatpush1.bf16.msra.mxu0 0
    %118 = vmatprep.subr.bf16.mxu0 0
    %119 = vmatpush1.bf16.msra.mxu0 0
    %120 = vmatprep.subr.bf16.mxu0 0
    %121 = vmatpush1.bf16.msra.mxu0 0
    %122 = vmatprep.subr.bf16.mxu0 0
    %123 = vmatpush1.bf16.msra.mxu0 0
    %124 = vmatprep.subr.bf16.mxu0 0
    %125 = vmatpush1.bf16.msra.mxu0 0
    %126 = vmatprep.subr.bf16.mxu0 0
    %127 = vmatpush1.bf16.msra.mxu0 %v107
    %128 = vmatprep.subr.bf16.mxu0 0
    %129 = vmatpush1.bf16.msra.mxu0 %v106
    %130 = vmatprep.subr.bf16.mxu0 0
    %131 = vmatpush2.bf16.msra.mxu0 0
    %132 = vmatprep.subr.bf16.mxu0 0
    %133 = vmatpush2.bf16.msra.mxu0 0
    %134 = vmatprep.subr.bf16.mxu0 0
    %135 = vmatpush2.bf16.msra.mxu0 0
    %136 = vmatprep.subr.bf16.mxu0 0
    %137 = vmatpush2.bf16.msra.mxu0 0
    %138 = vmatprep.subr.bf16.mxu0 0
    %139 = vmatpush2.bf16.msra.mxu0 0
    %140 = vmatprep.subr.bf16.mxu0 0
    %141 = vmatpush2.bf16.msra.mxu0 0
    %142 = vmatprep.subr.bf16.mxu0 0
    %143 = vmatpush2.bf16.msra.mxu0 0
    %144 = vmatprep.subr.bf16.mxu0 0
    %145 = vmatpush2.bf16.msra.mxu0 0
    %146 = vmatprep.mubr.bf16.mxu0 0
    %147 = vmatmul.mubr.bf16.gmra.mxu0 %v112
    %v148 = vpop.f32.mrf.mxu0
    %v149 = vadd.f32 %v96, %v148
    %v150 = vpop.f32.mrf.mxu0
    %v151 = vpop.f32.mrf.mxu0
    %v152 = vadd.f32 %v96, %v151
    %v153 = vpop.f32.mrf.mxu0
    %154 = vdwg.mxu0
    %v155 = vand.u32 2147483647, %v149
    %vm156 = vcmp.le.f32.partialorder %v155, 0.7853982
    %vm157 = vcmp.lt.s32.totalorder %v149, 0
    %v158 = vand.u32 %v149, 2139095040
    %v159 = vshrl.u32 %v158, 23
    %v160 = vsub.s32 %v159, 127
    %v161 = vand.u32 2147483647, %v149
    %v162 = vand.u32 %v161, 8388607
    %v163 = vor.u32 %v162, 8388608
    %v164 = vsub.s32 0, %v163
    %v165 = vadd.s32 %v160, 1
    %vm166 = vcmp.gt.s32.totalorder %v165, 0
    %v167 = vsel %vm166, %v165, 0
    %v168 = vshrl.u32 %v167, 5
    %v169 = vand.u32 %v167, 31
    %v170 = vsub.s32 32, %v169
    %v171 = vshrl.u32 683565275, %v170
    %v172 = vshll.u32 683565275, %v169
    %v173 = vshrl.u32 2475754826, %v170
    %v174 = vor.u32 %v172, %v173
    %v175 = vshll.u32 2475754826, %v169
    %v176 = vshrl.u32 2131351028, %v170
    %v177 = vor.u32 %v175, %v176
    %v178 = vshll.u32 2131351028, %v169
    %v179 = vshrl.u32 2102212464, %v170
    %v180 = vor.u32 %v178, %v179
    %v181 = vshll.u32 2102212464, %v169
    %v182 = vshrl.u32 920167782, %v170
    %v183 = vor.u32 %v181, %v182
    %v184 = vshll.u32 920167782, %v169
    %v185 = vshrl.u32 1326507024, %v170
    %v186 = vor.u32 %v184, %v185
    %vm187 = vcmp.lt.s32.totalorder %v168, 1
    %vm188 = vcmp.lt.s32.totalorder %v168, 2
    %vm189 = vcmp.lt.s32.totalorder %v168, 3
    %vm190 = vcmp.lt.s32.totalorder %v168, 4
    %v191 = vsel %vm187, %v171, %v174
    %v192 = vsel %vm190, %v180, 2102212464
    %v193 = vsel %vm189, %v177, %v192
    %v194 = vsel %vm188, %v191, %v193
    %v195 = vsel %vm187, %v174, %v177
    %v196 = vsel %vm190, %v183, 920167782
    %v197 = vsel %vm189, %v180, %v196
    %v198 = vsel %vm188, %v195, %v197
    %v199 = vsel %vm187, %v177, %v180
    %v200 = vsel %vm190, %v186, 1326507024
    %v201 = vsel %vm189, %v183, %v200
    %v202 = vsel %vm188, %v199, %v201
    %v203 = vshll.u32 %v163, 8
    %v204 = vmul.u32.u64.compose %v203, %v202
    %v205 = vextract.low.u32 %v204
    %v206 = vextract.high.u32 %v204
    %v207 = vmul.u32.u64.compose %v203, %v198
    %v208 = vextract.low.u32 %v207
    %v209 = vextract.high.u32 %v207
    %v210 = vmul.u32 %v203, %v194
    %v211 = vadd.s32 %v206, %v208
    %vm212 = vc.u32 %v206, %v208
    %v213 = vadd.s32 %v209, 1
    %v214 = vsel %vm212, %v213, %v209
    %v215 = vadd.s32 %v210, %v214
    %v216 = vadd.s32 %v215, 536870912
    %v217 = vshrl.u32 %v216, 30
    %v218 = vshll.u32 %v217, 30
    %v219 = vsub.s32 %v215, %v218
    %vm220 = vcmp.lt.s32.totalorder %v219, 0
    %v221 = vsub.s32 0, %v219
    %v222 = vsel %vm220, %v221, %v219
    %v223 = vclz %v222
    %v224 = vsub.s32 %v223, 2
    %vm225 = vcmp.gt.s32.totalorder 0, %v224
    %v226 = vsel %vm225, 0, %v224
    %v227 = vsub.s32 32, %v226
    %v228 = vshll.u32 %v219, %v226
    %v229 = vshrl.u32 %v211, %v227
    %v230 = vor.u32 %v228, %v229
    %v231 = vsub.s32 4294967266, %v226
    %v232 = vadd.s32 %v231, 127
    %v233 = vshll.u32 %v232, 23
    %v234 = vor.u32 4788187, %v233
    %v235 = vand.u32 2147483647, %v234
    %v237 = vcvt.s32.f32 %v230
    %v238 = vmul.f32 %v237, %v235
    %v239 = vxor.u32 %v238, 2147483648
    %v240 = vsel %vm157, %v239, %v238
    %v241 = vsub.s32 4, %v217
    %v242 = vsel %vm157, %v241, %v217
    %v243 = vsel %vm156, %v149, %v240
    %v244 = vsel %vm156, 0, %v242
    %v245 = vcosq.f32.pop %v243
    %v246 = vsinq.f32.pop %v243
    %vm247 = vweird.f32 %v149
    %v248 = vadd.s32 %v244, 3
    %v249 = vand.u32 %v248, 3
    %vm250 = vcmp.lt.s32.totalorder %v249, 2
    %vm251 = vcmp.eq.s32.totalorder %v249, 0
    %v252 = vxor.u32 %v246, 2147483648
    %v253 = vsel %vm251, %v245, %v252
    %vm254 = vcmp.eq.s32.totalorder %v249, 2
    %v255 = vxor.u32 %v245, 2147483648
    %v256 = vsel %vm254, %v255, %v246
    %v257 = vsel %vm250, %v253, %v256
    %v258 = vsel %vm247, nan, %v257
    %v259 = vand.u32 2147483647, %v152
    %vm260 = vcmp.le.f32.partialorder %v259, 0.7853982
    %vm261 = vcmp.lt.s32.totalorder %v152, 0
    %v262 = vand.u32 %v152, 2139095040
    %v263 = vshrl.u32 %v262, 23
    %v264 = vsub.s32 %v263, 127
    %v265 = vand.u32 2147483647, %v152
    %v266 = vand.u32 %v265, 8388607
    %v267 = vor.u32 %v266, 8388608
    %v268 = vsub.s32 0, %v267
    %v269 = vadd.s32 %v264, 1
    %vm270 = vcmp.gt.s32.totalorder %v269, 0
    %v271 = vsel %vm270, %v269, 0
    %v272 = vshrl.u32 %v271, 5
    %v273 = vand.u32 %v271, 31
    %v274 = vsub.s32 32, %v273
    %v275 = vshrl.u32 683565275, %v274
    %v276 = vshll.u32 683565275, %v273
    %v277 = vshrl.u32 2475754826, %v274
    %v278 = vor.u32 %v276, %v277
    %v279 = vshll.u32 2475754826, %v273
    %v280 = vshrl.u32 2131351028, %v274
    %v281 = vor.u32 %v279, %v280
    %v282 = vshll.u32 2131351028, %v273
    %v283 = vshrl.u32 2102212464, %v274
    %v284 = vor.u32 %v282, %v283
    %v285 = vshll.u32 2102212464, %v273
    %v286 = vshrl.u32 920167782, %v274
    %v287 = vor.u32 %v285, %v286
    %v288 = vshll.u32 920167782, %v273
    %v289 = vshrl.u32 1326507024, %v274
    %v290 = vor.u32 %v288, %v289
    %vm291 = vcmp.lt.s32.totalorder %v272, 1
    %vm292 = vcmp.lt.s32.totalorder %v272, 2
    %vm293 = vcmp.lt.s32.totalorder %v272, 3
    %vm294 = vcmp.lt.s32.totalorder %v272, 4
    %v295 = vsel %vm291, %v275, %v278
    %v296 = vsel %vm294, %v284, 2102212464
    %v297 = vsel %vm293, %v281, %v296
    %v298 = vsel %vm292, %v295, %v297
    %v299 = vsel %vm291, %v278, %v281
    %v300 = vsel %vm294, %v287, 920167782
    %v301 = vsel %vm293, %v284, %v300
    %v302 = vsel %vm292, %v299, %v301
    %v303 = vsel %vm291, %v281, %v284
    %v304 = vsel %vm294, %v290, 1326507024
    %v305 = vsel %vm293, %v287, %v304
    %v306 = vsel %vm292, %v303, %v305
    %v307 = vshll.u32 %v267, 8
    %v308 = vmul.u32.u64.compose %v307, %v306
    %v309 = vextract.low.u32 %v308
    %v310 = vextract.high.u32 %v308
    %v311 = vmul.u32.u64.compose %v307, %v302
    %v312 = vextract.low.u32 %v311
    %v313 = vextract.high.u32 %v311
    %v314 = vmul.u32 %v307, %v298
    %v315 = vadd.s32 %v310, %v312
    %vm316 = vc.u32 %v310, %v312
    %v317 = vadd.s32 %v313, 1
    %v318 = vsel %vm316, %v317, %v313
    %v319 = vadd.s32 %v314, %v318
    %v320 = vadd.s32 %v319, 536870912
    %v321 = vshrl.u32 %v320, 30
    %v322 = vshll.u32 %v321, 30
    %v323 = vsub.s32 %v319, %v322
    %vm324 = vcmp.lt.s32.totalorder %v323, 0
    %v325 = vsub.s32 0, %v323
    %v326 = vsel %vm324, %v325, %v323
    %v327 = vclz %v326
    %v328 = vsub.s32 %v327, 2
    %vm329 = vcmp.gt.s32.totalorder 0, %v328
    %v330 = vsel %vm329, 0, %v328
    %v331 = vsub.s32 32, %v330
    %v332 = vshll.u32 %v323, %v330
    %v333 = vshrl.u32 %v315, %v331
    %v334 = vor.u32 %v332, %v333
    %v335 = vsub.s32 4294967266, %v330
    %v336 = vadd.s32 %v335, 127
    %v337 = vshll.u32 %v336, 23
    %v338 = vor.u32 4788187, %v337
    %v339 = vand.u32 2147483647, %v338
    %v341 = vcvt.s32.f32 %v334
    %v342 = vmul.f32 %v341, %v339
    %v343 = vxor.u32 %v342, 2147483648
    %v344 = vsel %vm261, %v343, %v342
    %v345 = vsub.s32 4, %v321
    %v346 = vsel %vm261, %v345, %v321
    %v347 = vsel %vm260, %v152, %v344
    %v348 = vsel %vm260, 0, %v346
    %v349 = vcosq.f32.pop %v347
    %v350 = vsinq.f32.pop %v347
    %vm351 = vweird.f32 %v152
    %v352 = vadd.s32 %v348, 3
    %v353 = vand.u32 %v352, 3
    %vm354 = vcmp.lt.s32.totalorder %v353, 2
    %vm355 = vcmp.eq.s32.totalorder %v353, 0
    %v356 = vxor.u32 %v350, 2147483648
    %v357 = vsel %vm355, %v349, %v356
    %vm358 = vcmp.eq.s32.totalorder %v353, 2
    %v359 = vxor.u32 %v349, 2147483648
    %v360 = vsel %vm358, %v359, %v350
    %v361 = vsel %vm354, %v357, %v360
    %v362 = vsel %vm351, nan, %v361
    %v363 = vstv %s83
    %v364 = vmul.f32 %v363, %v258
    %v365 = vmul.f32 %v363, %v362
    %v366 = vand.u32 2147483647, %v149
    %vm367 = vcmp.le.f32.partialorder %v366, 0.7853982
    %vm368 = vcmp.lt.s32.totalorder %v149, 0
    %v369 = vand.u32 %v149, 2139095040
    %v370 = vshrl.u32 %v369, 23
    %v371 = vsub.s32 %v370, 127
    %v372 = vand.u32 2147483647, %v149
    %v373 = vand.u32 %v372, 8388607
    %v374 = vor.u32 %v373, 8388608
    %v375 = vsub.s32 0, %v374
    %v376 = vadd.s32 %v371, 1
    %vm377 = vcmp.gt.s32.totalorder %v376, 0
    %v378 = vsel %vm377, %v376, 0
    %v379 = vshrl.u32 %v378, 5
    %v380 = vand.u32 %v378, 31
    %v381 = vsub.s32 32, %v380
    %v382 = vshrl.u32 683565275, %v381
    %v383 = vshll.u32 683565275, %v380
    %v384 = vshrl.u32 2475754826, %v381
    %v385 = vor.u32 %v383, %v384
    %v386 = vshll.u32 2475754826, %v380
    %v387 = vshrl.u32 2131351028, %v381
    %v388 = vor.u32 %v386, %v387
    %v389 = vshll.u32 2131351028, %v380
    %v390 = vshrl.u32 2102212464, %v381
    %v391 = vor.u32 %v389, %v390
    %v392 = vshll.u32 2102212464, %v380
    %v393 = vshrl.u32 920167782, %v381
    %v394 = vor.u32 %v392, %v393
    %v395 = vshll.u32 920167782, %v380
    %v396 = vshrl.u32 1326507024, %v381
    %v397 = vor.u32 %v395, %v396
    %vm398 = vcmp.lt.s32.totalorder %v379, 1
    %vm399 = vcmp.lt.s32.totalorder %v379, 2
    %vm400 = vcmp.lt.s32.totalorder %v379, 3
    %vm401 = vcmp.lt.s32.totalorder %v379, 4
    %v402 = vsel %vm398, %v382, %v385
    %v403 = vsel %vm401, %v391, 2102212464
    %v404 = vsel %vm400, %v388, %v403
    %v405 = vsel %vm399, %v402, %v404
    %v406 = vsel %vm398, %v385, %v388
    %v407 = vsel %vm401, %v394, 920167782
    %v408 = vsel %vm400, %v391, %v407
    %v409 = vsel %vm399, %v406, %v408
    %v410 = vsel %vm398, %v388, %v391
    %v411 = vsel %vm401, %v397, 1326507024
    %v412 = vsel %vm400, %v394, %v411
    %v413 = vsel %vm399, %v410, %v412
    %v414 = vshll.u32 %v374, 8
    %v415 = vmul.u32.u64.compose %v414, %v413
    %v416 = vextract.low.u32 %v415
    %v417 = vextract.high.u32 %v415
    %v418 = vmul.u32.u64.compose %v414, %v409
    %v419 = vextract.low.u32 %v418
    %v420 = vextract.high.u32 %v418
    %v421 = vmul.u32 %v414, %v405
    %v422 = vadd.s32 %v417, %v419
    %vm423 = vc.u32 %v417, %v419
    %v424 = vadd.s32 %v420, 1
    %v425 = vsel %vm423, %v424, %v420
    %v426 = vadd.s32 %v421, %v425
    %v427 = vadd.s32 %v426, 536870912
    %v428 = vshrl.u32 %v427, 30
    %v429 = vshll.u32 %v428, 30
    %v430 = vsub.s32 %v426, %v429
    %vm431 = vcmp.lt.s32.totalorder %v430, 0
    %v432 = vsub.s32 0, %v430
    %v433 = vsel %vm431, %v432, %v430
    %v434 = vclz %v433
    %v435 = vsub.s32 %v434, 2
    %vm436 = vcmp.gt.s32.totalorder 0, %v435
    %v437 = vsel %vm436, 0, %v435
    %v438 = vsub.s32 32, %v437
    %v439 = vshll.u32 %v430, %v437
    %v440 = vshrl.u32 %v422, %v438
    %v441 = vor.u32 %v439, %v440
    %v442 = vsub.s32 4294967266, %v437
    %v443 = vadd.s32 %v442, 127
    %v444 = vshll.u32 %v443, 23
    %v445 = vor.u32 4788187, %v444
    %v446 = vand.u32 2147483647, %v445
    %v448 = vcvt.s32.f32 %v441
    %v449 = vmul.f32 %v448, %v446
    %v450 = vxor.u32 %v449, 2147483648
    %v451 = vsel %vm368, %v450, %v449
    %v452 = vsub.s32 4, %v428
    %v453 = vsel %vm368, %v452, %v428
    %v454 = vsel %vm367, %v149, %v451
    %v455 = vsel %vm367, 0, %v453
    %v456 = vcosq.f32.pop %v454
    %v457 = vsinq.f32.pop %v454
    %vm458 = vweird.f32 %v149
    %v459 = vand.u32 %v455, 3
    %vm460 = vcmp.lt.s32.totalorder %v459, 2
    %vm461 = vcmp.eq.s32.totalorder %v459, 0
    %v462 = vxor.u32 %v457, 2147483648
    %v463 = vsel %vm461, %v456, %v462
    %vm464 = vcmp.eq.s32.totalorder %v459, 2
    %v465 = vxor.u32 %v456, 2147483648
    %v466 = vsel %vm464, %v465, %v457
    %v467 = vsel %vm460, %v463, %v466
    %v468 = vsel %vm458, nan, %v467
    %v469 = vand.u32 2147483647, %v152
    %vm470 = vcmp.le.f32.partialorder %v469, 0.7853982
    %vm471 = vcmp.lt.s32.totalorder %v152, 0
    %v472 = vand.u32 %v152, 2139095040
    %v473 = vshrl.u32 %v472, 23
    %v474 = vsub.s32 %v473, 127
    %v475 = vand.u32 2147483647, %v152
    %v476 = vand.u32 %v475, 8388607
    %v477 = vor.u32 %v476, 8388608
    %v478 = vsub.s32 0, %v477
    %v479 = vadd.s32 %v474, 1
    %vm480 = vcmp.gt.s32.totalorder %v479, 0
    %v481 = vsel %vm480, %v479, 0
    %v482 = vshrl.u32 %v481, 5
    %v483 = vand.u32 %v481, 31
    %v484 = vsub.s32 32, %v483
    %v485 = vshrl.u32 683565275, %v484
    %v486 = vshll.u32 683565275, %v483
    %v487 = vshrl.u32 2475754826, %v484
    %v488 = vor.u32 %v486, %v487
    %v489 = vshll.u32 2475754826, %v483
    %v490 = vshrl.u32 2131351028, %v484
    %v491 = vor.u32 %v489, %v490
    %v492 = vshll.u32 2131351028, %v483
    %v493 = vshrl.u32 2102212464, %v484
    %v494 = vor.u32 %v492, %v493
    %v495 = vshll.u32 2102212464, %v483
    %v496 = vshrl.u32 920167782, %v484
    %v497 = vor.u32 %v495, %v496
    %v498 = vshll.u32 920167782, %v483
    %v499 = vshrl.u32 1326507024, %v484
    %v500 = vor.u32 %v498, %v499
    %vm501 = vcmp.lt.s32.totalorder %v482, 1
    %vm502 = vcmp.lt.s32.totalorder %v482, 2
    %vm503 = vcmp.lt.s32.totalorder %v482, 3
    %vm504 = vcmp.lt.s32.totalorder %v482, 4
    %v505 = vsel %vm501, %v485, %v488
    %v506 = vsel %vm504, %v494, 2102212464
    %v507 = vsel %vm503, %v491, %v506
    %v508 = vsel %vm502, %v505, %v507
    %v509 = vsel %vm501, %v488, %v491
    %v510 = vsel %vm504, %v497, 920167782
    %v511 = vsel %vm503, %v494, %v510
    %v512 = vsel %vm502, %v509, %v511
    %v513 = vsel %vm501, %v491, %v494
    %v514 = vsel %vm504, %v500, 1326507024
    %v515 = vsel %vm503, %v497, %v514
    %v516 = vsel %vm502, %v513, %v515
    %v517 = vshll.u32 %v477, 8
    %v518 = vmul.u32.u64.compose %v517, %v516
    %v519 = vextract.low.u32 %v518
    %v520 = vextract.high.u32 %v518
    %v521 = vmul.u32.u64.compose %v517, %v512
    %v522 = vextract.low.u32 %v521
    %v523 = vextract.high.u32 %v521
    %v524 = vmul.u32 %v517, %v508
    %v525 = vadd.s32 %v520, %v522
    %vm526 = vc.u32 %v520, %v522
    %v527 = vadd.s32 %v523, 1
    %v528 = vsel %vm526, %v527, %v523
    %v529 = vadd.s32 %v524, %v528
    %v530 = vadd.s32 %v529, 536870912
    %v531 = vshrl.u32 %v530, 30
    %v532 = vshll.u32 %v531, 30
    %v533 = vsub.s32 %v529, %v532
    %vm534 = vcmp.lt.s32.totalorder %v533, 0
    %v535 = vsub.s32 0, %v533
    %v536 = vsel %vm534, %v535, %v533
    %v537 = vclz %v536
    %v538 = vsub.s32 %v537, 2
    %vm539 = vcmp.gt.s32.totalorder 0, %v538
    %v540 = vsel %vm539, 0, %v538
    %v541 = vsub.s32 32, %v540
    %v542 = vshll.u32 %v533, %v540
    %v543 = vshrl.u32 %v525, %v541
    %v544 = vor.u32 %v542, %v543
    %v545 = vsub.s32 4294967266, %v540
    %v546 = vadd.s32 %v545, 127
    %v547 = vshll.u32 %v546, 23
    %v548 = vor.u32 4788187, %v547
    %v549 = vand.u32 2147483647, %v548
    %v551 = vcvt.s32.f32 %v544
    %v552 = vmul.f32 %v551, %v549
    %v553 = vxor.u32 %v552, 2147483648
    %v554 = vsel %vm471, %v553, %v552
    %v555 = vsub.s32 4, %v531
    %v556 = vsel %vm471, %v555, %v531
    %v557 = vsel %vm470, %v152, %v554
    %v558 = vsel %vm470, 0, %v556
    %v559 = vcosq.f32.pop %v557
    %v560 = vsinq.f32.pop %v557
    %vm561 = vweird.f32 %v152
    %v562 = vand.u32 %v558, 3
    %vm563 = vcmp.lt.s32.totalorder %v562, 2
    %vm564 = vcmp.eq.s32.totalorder %v562, 0
    %v565 = vxor.u32 %v560, 2147483648
    %v566 = vsel %vm564, %v559, %v565
    %vm567 = vcmp.eq.s32.totalorder %v562, 2
    %v568 = vxor.u32 %v559, 2147483648
    %v569 = vsel %vm567, %v568, %v560
    %v570 = vsel %vm563, %v566, %v569
    %v571 = vsel %vm561, nan, %v570
    %v572 = vstv %s84
    %v573 = vmul.f32 %v572, %v468
    %v574 = vmul.f32 %v572, %v571
    %v575 = vadd.f32 %v364, %v573
    %v576 = vadd.f32 %v365, %v574
    %v577 = vld [vmem:[%s3] sm:$0xf]
    %v578 = vld [vmem:[%s3 + $0x4] sm:$0xf]
    %v579 = vld [vmem:[%s3 + $0x8] sm:$0xf]
    %v580 = vld [vmem:[%s3 + $0xc] sm:$0xf]
    %v581 = vld [vmem:[%s4] sm:$0x1]
    %v583 = vlaneseq
    %v584 = vshrl.u32 %v583, 7
    %v585 = vsub.s32 0, %v584
    %v586 = vrot.slane %v581, %v585
    %v592 = vunpack.c.l.b16 %v577
    %v593 = vunpack.c.l.b16 %v578
    %v594 = vunpack.c.l.b16 %v579
    %v595 = vunpack.c.l.b16 %v580
    %v596 = vpack.c.b16 %v593, %v592
    %v597 = vpack.c.b16 %v595, %v594
    %600 = vmatprep.subr.bf16.mxu0 0
    %601 = vmatpush1.bf16.msra.mxu0 0
    %602 = vmatprep.subr.bf16.mxu0 0
    %603 = vmatpush1.bf16.msra.mxu0 0
    %604 = vmatprep.subr.bf16.mxu0 0
    %605 = vmatpush1.bf16.msra.mxu0 0
    %606 = vmatprep.subr.bf16.mxu0 0
    %607 = vmatpush1.bf16.msra.mxu0 0
    %608 = vmatprep.subr.bf16.mxu0 0
    %609 = vmatpush1.bf16.msra.mxu0 0
    %610 = vmatprep.subr.bf16.mxu0 0
    %611 = vmatpush1.bf16.msra.mxu0 0
    %612 = vmatprep.subr.bf16.mxu0 0
    %613 = vmatpush1.bf16.msra.mxu0 %v597
    %614 = vmatprep.subr.bf16.mxu0 0
    %615 = vmatpush1.bf16.msra.mxu0 %v596
    %616 = vmatprep.subr.bf16.mxu0 0
    %617 = vmatpush2.bf16.msra.mxu0 0
    %618 = vmatprep.subr.bf16.mxu0 0
    %619 = vmatpush2.bf16.msra.mxu0 0
    %620 = vmatprep.subr.bf16.mxu0 0
    %621 = vmatpush2.bf16.msra.mxu0 0
    %622 = vmatprep.subr.bf16.mxu0 0
    %623 = vmatpush2.bf16.msra.mxu0 0
    %624 = vmatprep.subr.bf16.mxu0 0
    %625 = vmatpush2.bf16.msra.mxu0 0
    %626 = vmatprep.subr.bf16.mxu0 0
    %627 = vmatpush2.bf16.msra.mxu0 0
    %628 = vmatprep.subr.bf16.mxu0 0
    %629 = vmatpush2.bf16.msra.mxu0 0
    %630 = vmatprep.subr.bf16.mxu0 0
    %631 = vmatpush2.bf16.msra.mxu0 0
    %632 = vmatprep.mubr.bf16.mxu0 0
    %633 = vmatmul.mubr.bf16.gmra.mxu0 %v112
    %v634 = vpop.f32.mrf.mxu0
    %v635 = vadd.f32 %v586, %v634
    %v636 = vpop.f32.mrf.mxu0
    %v637 = vpop.f32.mrf.mxu0
    %v638 = vadd.f32 %v586, %v637
    %v639 = vpop.f32.mrf.mxu0
    %640 = vdwg.mxu0
    %v641 = vpack.c.bf16 %v638, %v635
    %v642 = vld [vmem:[%s5] sm:$0xf]
    %v643 = vld [vmem:[%s5 + $0x4] sm:$0xf]
    %v644 = vld [vmem:[%s5 + $0x8] sm:$0xf]
    %v645 = vld [vmem:[%s5 + $0xc] sm:$0xf]
    %v646 = vld [vmem:[%s6] sm:$0x1]
    %v648 = vlaneseq
    %v649 = vshrl.u32 %v648, 7
    %v650 = vsub.s32 0, %v649
    %v651 = vrot.slane %v646, %v650
    %v657 = vunpack.c.l.b16 %v642
    %v658 = vunpack.c.l.b16 %v643
    %v659 = vunpack.c.l.b16 %v644
    %v660 = vunpack.c.l.b16 %v645
    %v661 = vpack.c.b16 %v658, %v657
    %v662 = vpack.c.b16 %v660, %v659
    %v666 = vsel %vm110, %v641, 0
    %668 = vmatprep.subr.bf16.mxu0 0
    %669 = vmatpush1.bf16.msra.mxu0 0
    %670 = vmatprep.subr.bf16.mxu0 0
    %671 = vmatpush1.bf16.msra.mxu0 0
    %672 = vmatprep.subr.bf16.mxu0 0
    %673 = vmatpush1.bf16.msra.mxu0 0
    %674 = vmatprep.subr.bf16.mxu0 0
    %675 = vmatpush1.bf16.msra.mxu0 0
    %676 = vmatprep.subr.bf16.mxu0 0
    %677 = vmatpush1.bf16.msra.mxu0 0
    %678 = vmatprep.subr.bf16.mxu0 0
    %679 = vmatpush1.bf16.msra.mxu0 0
    %680 = vmatprep.subr.bf16.mxu0 0
    %681 = vmatpush1.bf16.msra.mxu0 %v662
    %682 = vmatprep.subr.bf16.mxu0 0
    %683 = vmatpush1.bf16.msra.mxu0 %v661
    %684 = vmatprep.subr.bf16.mxu0 0
    %685 = vmatpush2.bf16.msra.mxu0 0
    %686 = vmatprep.subr.bf16.mxu0 0
    %687 = vmatpush2.bf16.msra.mxu0 0
    %688 = vmatprep.subr.bf16.mxu0 0
    %689 = vmatpush2.bf16.msra.mxu0 0
    %690 = vmatprep.subr.bf16.mxu0 0
    %691 = vmatpush2.bf16.msra.mxu0 0
    %692 = vmatprep.subr.bf16.mxu0 0
    %693 = vmatpush2.bf16.msra.mxu0 0
    %694 = vmatprep.subr.bf16.mxu0 0
    %695 = vmatpush2.bf16.msra.mxu0 0
    %696 = vmatprep.subr.bf16.mxu0 0
    %697 = vmatpush2.bf16.msra.mxu0 0
    %698 = vmatprep.subr.bf16.mxu0 0
    %699 = vmatpush2.bf16.msra.mxu0 0
    %700 = vmatprep.mubr.bf16.mxu0 0
    %701 = vmatmul.mubr.bf16.gmra.mxu0 %v666
    %v702 = vpop.f32.mrf.mxu0
    %v703 = vadd.f32 %v651, %v702
    %v704 = vpop.f32.mrf.mxu0
    %v705 = vpop.f32.mrf.mxu0
    %v706 = vadd.f32 %v651, %v705
    %v707 = vpop.f32.mrf.mxu0
    %708 = vdwg.mxu0
    %vm709 = vcmp.gt.f32.partialorder %v703, 20.0
    %vm710 = vcmp.gt.f32.partialorder %v706, 20.0
    %v711 = vmin.f32 %v703, 20.0
    %v712 = vmin.f32 %v706, 20.0
    %v713 = vmul.f32 %v711, 1.442695
    %v714 = vpow.pop %v713
    %v715 = vmul.f32 %v712, 1.442695
    %v716 = vpow.pop %v715
    %v717 = vadd.f32 %v714, 1.0
    %v718 = vlog2.pop %v717
    %v719 = vmul.f32 %v718, 0.6931472
    %v720 = vmul.f32 -0.5, %v714
    %v721 = vadd.f32 %v720, 1.0
    %v722 = vmul.f32 %v721, %v714
    %v723 = vand.u32 2147483647, %v714
    %vm724 = vcmp.lt.f32.partialorder %v723, 0.0004427343
    %v725 = vsel %vm724, %v722, %v719
    %v726 = vadd.f32 %v716, 1.0
    %v727 = vlog2.pop %v726
    %v728 = vmul.f32 %v727, 0.6931472
    %v729 = vmul.f32 -0.5, %v716
    %v730 = vadd.f32 %v729, 1.0
    %v731 = vmul.f32 %v730, %v716
    %v732 = vand.u32 2147483647, %v716
    %vm733 = vcmp.lt.f32.partialorder %v732, 0.0004427343
    %v734 = vsel %vm733, %v731, %v728
    %v735 = vsel %vm709, %v703, %v725
    %v736 = vsel %vm710, %v706, %v734
    %v737 = vand.u32 2147483647, %v735
    %vm738 = vcmp.le.f32.partialorder %v737, 0.7853982
    %vm739 = vcmp.lt.s32.totalorder %v735, 0
    %v740 = vand.u32 %v735, 2139095040
    %v741 = vshrl.u32 %v740, 23
    %v742 = vsub.s32 %v741, 127
    %v743 = vand.u32 2147483647, %v735
    %v744 = vand.u32 %v743, 8388607
    %v745 = vor.u32 %v744, 8388608
    %v746 = vsub.s32 0, %v745
    %v747 = vadd.s32 %v742, 1
    %vm748 = vcmp.gt.s32.totalorder %v747, 0
    %v749 = vsel %vm748, %v747, 0
    %v750 = vshrl.u32 %v749, 5
    %v751 = vand.u32 %v749, 31
    %v752 = vsub.s32 32, %v751
    %v753 = vshrl.u32 683565275, %v752
    %v754 = vshll.u32 683565275, %v751
    %v755 = vshrl.u32 2475754826, %v752
    %v756 = vor.u32 %v754, %v755
    %v757 = vshll.u32 2475754826, %v751
    %v758 = vshrl.u32 2131351028, %v752
    %v759 = vor.u32 %v757, %v758
    %v760 = vshll.u32 2131351028, %v751
    %v761 = vshrl.u32 2102212464, %v752
    %v762 = vor.u32 %v760, %v761
    %v763 = vshll.u32 2102212464, %v751
    %v764 = vshrl.u32 920167782, %v752
    %v765 = vor.u32 %v763, %v764
    %v766 = vshll.u32 920167782, %v751
    %v767 = vshrl.u32 1326507024, %v752
    %v768 = vor.u32 %v766, %v767
    %vm769 = vcmp.lt.s32.totalorder %v750, 1
    %vm770 = vcmp.lt.s32.totalorder %v750, 2
    %vm771 = vcmp.lt.s32.totalorder %v750, 3
    %vm772 = vcmp.lt.s32.totalorder %v750, 4
    %v773 = vsel %vm769, %v753, %v756
    %v774 = vsel %vm772, %v762, 2102212464
    %v775 = vsel %vm771, %v759, %v774
    %v776 = vsel %vm770, %v773, %v775
    %v777 = vsel %vm769, %v756, %v759
    %v778 = vsel %vm772, %v765, 920167782
    %v779 = vsel %vm771, %v762, %v778
    %v780 = vsel %vm770, %v777, %v779
    %v781 = vsel %vm769, %v759, %v762
    %v782 = vsel %vm772, %v768, 1326507024
    %v783 = vsel %vm771, %v765, %v782
    %v784 = vsel %vm770, %v781, %v783
    %v785 = vshll.u32 %v745, 8
    %v786 = vmul.u32.u64.compose %v785, %v784
    %v787 = vextract.low.u32 %v786
    %v788 = vextract.high.u32 %v786
    %v789 = vmul.u32.u64.compose %v785, %v780
    %v790 = vextract.low.u32 %v789
    %v791 = vextract.high.u32 %v789
    %v792 = vmul.u32 %v785, %v776
    %v793 = vadd.s32 %v788, %v790
    %vm794 = vc.u32 %v788, %v790
    %v795 = vadd.s32 %v791, 1
    %v796 = vsel %vm794, %v795, %v791
    %v797 = vadd.s32 %v792, %v796
    %v798 = vadd.s32 %v797, 536870912
    %v799 = vshrl.u32 %v798, 30
    %v800 = vshll.u32 %v799, 30
    %v801 = vsub.s32 %v797, %v800
    %vm802 = vcmp.lt.s32.totalorder %v801, 0
    %v803 = vsub.s32 0, %v801
    %v804 = vsel %vm802, %v803, %v801
    %v805 = vclz %v804
    %v806 = vsub.s32 %v805, 2
    %vm807 = vcmp.gt.s32.totalorder 0, %v806
    %v808 = vsel %vm807, 0, %v806
    %v809 = vsub.s32 32, %v808
    %v810 = vshll.u32 %v801, %v808
    %v811 = vshrl.u32 %v793, %v809
    %v812 = vor.u32 %v810, %v811
    %v813 = vsub.s32 4294967266, %v808
    %v814 = vadd.s32 %v813, 127
    %v815 = vshll.u32 %v814, 23
    %v816 = vor.u32 4788187, %v815
    %v817 = vand.u32 2147483647, %v816
    %v819 = vcvt.s32.f32 %v812
    %v820 = vmul.f32 %v819, %v817
    %v821 = vxor.u32 %v820, 2147483648
    %v822 = vsel %vm739, %v821, %v820
    %v823 = vsub.s32 4, %v799
    %v824 = vsel %vm739, %v823, %v799
    %v825 = vsel %vm738, %v735, %v822
    %v826 = vsel %vm738, 0, %v824
    %v827 = vcosq.f32.pop %v825
    %v828 = vsinq.f32.pop %v825
    %vm829 = vweird.f32 %v735
    %v830 = vadd.s32 %v826, 3
    %v831 = vand.u32 %v830, 3
    %vm832 = vcmp.lt.s32.totalorder %v831, 2
    %vm833 = vcmp.eq.s32.totalorder %v831, 0
    %v834 = vxor.u32 %v828, 2147483648
    %v835 = vsel %vm833, %v827, %v834
    %vm836 = vcmp.eq.s32.totalorder %v831, 2
    %v837 = vxor.u32 %v827, 2147483648
    %v838 = vsel %vm836, %v837, %v828
    %v839 = vsel %vm832, %v835, %v838
    %v840 = vsel %vm829, nan, %v839
    %v841 = vand.u32 2147483647, %v736
    %vm842 = vcmp.le.f32.partialorder %v841, 0.7853982
    %vm843 = vcmp.lt.s32.totalorder %v736, 0
    %v844 = vand.u32 %v736, 2139095040
    %v845 = vshrl.u32 %v844, 23
    %v846 = vsub.s32 %v845, 127
    %v847 = vand.u32 2147483647, %v736
    %v848 = vand.u32 %v847, 8388607
    %v849 = vor.u32 %v848, 8388608
    %v850 = vsub.s32 0, %v849
    %v851 = vadd.s32 %v846, 1
    %vm852 = vcmp.gt.s32.totalorder %v851, 0
    %v853 = vsel %vm852, %v851, 0
    %v854 = vshrl.u32 %v853, 5
    %v855 = vand.u32 %v853, 31
    %v856 = vsub.s32 32, %v855
    %v857 = vshrl.u32 683565275, %v856
    %v858 = vshll.u32 683565275, %v855
    %v859 = vshrl.u32 2475754826, %v856
    %v860 = vor.u32 %v858, %v859
    %v861 = vshll.u32 2475754826, %v855
    %v862 = vshrl.u32 2131351028, %v856
    %v863 = vor.u32 %v861, %v862
    %v864 = vshll.u32 2131351028, %v855
    %v865 = vshrl.u32 2102212464, %v856
    %v866 = vor.u32 %v864, %v865
    %v867 = vshll.u32 2102212464, %v855
    %v868 = vshrl.u32 920167782, %v856
    %v869 = vor.u32 %v867, %v868
    %v870 = vshll.u32 920167782, %v855
    %v871 = vshrl.u32 1326507024, %v856
    %v872 = vor.u32 %v870, %v871
    %vm873 = vcmp.lt.s32.totalorder %v854, 1
    %vm874 = vcmp.lt.s32.totalorder %v854, 2
    %vm875 = vcmp.lt.s32.totalorder %v854, 3
    %vm876 = vcmp.lt.s32.totalorder %v854, 4
    %v877 = vsel %vm873, %v857, %v860
    %v878 = vsel %vm876, %v866, 2102212464
    %v879 = vsel %vm875, %v863, %v878
    %v880 = vsel %vm874, %v877, %v879
    %v881 = vsel %vm873, %v860, %v863
    %v882 = vsel %vm876, %v869, 920167782
    %v883 = vsel %vm875, %v866, %v882
    %v884 = vsel %vm874, %v881, %v883
    %v885 = vsel %vm873, %v863, %v866
    %v886 = vsel %vm876, %v872, 1326507024
    %v887 = vsel %vm875, %v869, %v886
    %v888 = vsel %vm874, %v885, %v887
    %v889 = vshll.u32 %v849, 8
    %v890 = vmul.u32.u64.compose %v889, %v888
    %v891 = vextract.low.u32 %v890
    %v892 = vextract.high.u32 %v890
    %v893 = vmul.u32.u64.compose %v889, %v884
    %v894 = vextract.low.u32 %v893
    %v895 = vextract.high.u32 %v893
    %v896 = vmul.u32 %v889, %v880
    %v897 = vadd.s32 %v892, %v894
    %vm898 = vc.u32 %v892, %v894
    %v899 = vadd.s32 %v895, 1
    %v900 = vsel %vm898, %v899, %v895
    %v901 = vadd.s32 %v896, %v900
    %v902 = vadd.s32 %v901, 536870912
    %v903 = vshrl.u32 %v902, 30
    %v904 = vshll.u32 %v903, 30
    %v905 = vsub.s32 %v901, %v904
    %vm906 = vcmp.lt.s32.totalorder %v905, 0
    %v907 = vsub.s32 0, %v905
    %v908 = vsel %vm906, %v907, %v905
    %v909 = vclz %v908
    %v910 = vsub.s32 %v909, 2
    %vm911 = vcmp.gt.s32.totalorder 0, %v910
    %v912 = vsel %vm911, 0, %v910
    %v913 = vsub.s32 32, %v912
    %v914 = vshll.u32 %v905, %v912
    %v915 = vshrl.u32 %v897, %v913
    %v916 = vor.u32 %v914, %v915
    %v917 = vsub.s32 4294967266, %v912
    %v918 = vadd.s32 %v917, 127
    %v919 = vshll.u32 %v918, 23
    %v920 = vor.u32 4788187, %v919
    %v921 = vand.u32 2147483647, %v920
    %v923 = vcvt.s32.f32 %v916
    %v924 = vmul.f32 %v923, %v921
    %v925 = vxor.u32 %v924, 2147483648
    %v926 = vsel %vm843, %v925, %v924
    %v927 = vsub.s32 4, %v903
    %v928 = vsel %vm843, %v927, %v903
    %v929 = vsel %vm842, %v736, %v926
    %v930 = vsel %vm842, 0, %v928
    %v931 = vcosq.f32.pop %v929
    %v932 = vsinq.f32.pop %v929
    %vm933 = vweird.f32 %v736
    %v934 = vadd.s32 %v930, 3
    %v935 = vand.u32 %v934, 3
    %vm936 = vcmp.lt.s32.totalorder %v935, 2
    %vm937 = vcmp.eq.s32.totalorder %v935, 0
    %v938 = vxor.u32 %v932, 2147483648
    %v939 = vsel %vm937, %v931, %v938
    %vm940 = vcmp.eq.s32.totalorder %v935, 2
    %v941 = vxor.u32 %v931, 2147483648
    %v942 = vsel %vm940, %v941, %v932
    %v943 = vsel %vm936, %v939, %v942
    %v944 = vsel %vm933, nan, %v943
    %v945 = vstv %s85
    %v946 = vmul.f32 %v945, %v840
    %v947 = vmul.f32 %v945, %v944
    %v948 = vand.u32 2147483647, %v735
    %vm949 = vcmp.le.f32.partialorder %v948, 0.7853982
    %vm950 = vcmp.lt.s32.totalorder %v735, 0
    %v951 = vand.u32 %v735, 2139095040
    %v952 = vshrl.u32 %v951, 23
    %v953 = vsub.s32 %v952, 127
    %v954 = vand.u32 2147483647, %v735
    %v955 = vand.u32 %v954, 8388607
    %v956 = vor.u32 %v955, 8388608
    %v957 = vsub.s32 0, %v956
    %v958 = vadd.s32 %v953, 1
    %vm959 = vcmp.gt.s32.totalorder %v958, 0
    %v960 = vsel %vm959, %v958, 0
    %v961 = vshrl.u32 %v960, 5
    %v962 = vand.u32 %v960, 31
    %v963 = vsub.s32 32, %v962
    %v964 = vshrl.u32 683565275, %v963
    %v965 = vshll.u32 683565275, %v962
    %v966 = vshrl.u32 2475754826, %v963
    %v967 = vor.u32 %v965, %v966
    %v968 = vshll.u32 2475754826, %v962
    %v969 = vshrl.u32 2131351028, %v963
    %v970 = vor.u32 %v968, %v969
    %v971 = vshll.u32 2131351028, %v962
    %v972 = vshrl.u32 2102212464, %v963
    %v973 = vor.u32 %v971, %v972
    %v974 = vshll.u32 2102212464, %v962
    %v975 = vshrl.u32 920167782, %v963
    %v976 = vor.u32 %v974, %v975
    %v977 = vshll.u32 920167782, %v962
    %v978 = vshrl.u32 1326507024, %v963
    %v979 = vor.u32 %v977, %v978
    %vm980 = vcmp.lt.s32.totalorder %v961, 1
    %vm981 = vcmp.lt.s32.totalorder %v961, 2
    %vm982 = vcmp.lt.s32.totalorder %v961, 3
    %vm983 = vcmp.lt.s32.totalorder %v961, 4
    %v984 = vsel %vm980, %v964, %v967
    %v985 = vsel %vm983, %v973, 2102212464
    %v986 = vsel %vm982, %v970, %v985
    %v987 = vsel %vm981, %v984, %v986
    %v988 = vsel %vm980, %v967, %v970
    %v989 = vsel %vm983, %v976, 920167782
    %v990 = vsel %vm982, %v973, %v989
    %v991 = vsel %vm981, %v988, %v990
    %v992 = vsel %vm980, %v970, %v973
    %v993 = vsel %vm983, %v979, 1326507024
    %v994 = vsel %vm982, %v976, %v993
    %v995 = vsel %vm981, %v992, %v994
    %v996 = vshll.u32 %v956, 8
    %v997 = vmul.u32.u64.compose %v996, %v995
    %v998 = vextract.low.u32 %v997
    %v999 = vextract.high.u32 %v997
    %v1000 = vmul.u32.u64.compose %v996, %v991
    %v1001 = vextract.low.u32 %v1000
    %v1002 = vextract.high.u32 %v1000
    %v1003 = vmul.u32 %v996, %v987
    %v1004 = vadd.s32 %v999, %v1001
    %vm1005 = vc.u32 %v999, %v1001
    %v1006 = vadd.s32 %v1002, 1
    %v1007 = vsel %vm1005, %v1006, %v1002
    %v1008 = vadd.s32 %v1003, %v1007
    %v1009 = vadd.s32 %v1008, 536870912
    %v1010 = vshrl.u32 %v1009, 30
    %v1011 = vshll.u32 %v1010, 30
    %v1012 = vsub.s32 %v1008, %v1011
    %vm1013 = vcmp.lt.s32.totalorder %v1012, 0
    %v1014 = vsub.s32 0, %v1012
    %v1015 = vsel %vm1013, %v1014, %v1012
    %v1016 = vclz %v1015
    %v1017 = vsub.s32 %v1016, 2
    %vm1018 = vcmp.gt.s32.totalorder 0, %v1017
    %v1019 = vsel %vm1018, 0, %v1017
    %v1020 = vsub.s32 32, %v1019
    %v1021 = vshll.u32 %v1012, %v1019
    %v1022 = vshrl.u32 %v1004, %v1020
    %v1023 = vor.u32 %v1021, %v1022
    %v1024 = vsub.s32 4294967266, %v1019
    %v1025 = vadd.s32 %v1024, 127
    %v1026 = vshll.u32 %v1025, 23
    %v1027 = vor.u32 4788187, %v1026
    %v1028 = vand.u32 2147483647, %v1027
    %v1030 = vcvt.s32.f32 %v1023
    %v1031 = vmul.f32 %v1030, %v1028
    %v1032 = vxor.u32 %v1031, 2147483648
    %v1033 = vsel %vm950, %v1032, %v1031
    %v1034 = vsub.s32 4, %v1010
    %v1035 = vsel %vm950, %v1034, %v1010
    %v1036 = vsel %vm949, %v735, %v1033
    %v1037 = vsel %vm949, 0, %v1035
    %v1038 = vcosq.f32.pop %v1036
    %v1039 = vsinq.f32.pop %v1036
    %vm1040 = vweird.f32 %v735
    %v1041 = vand.u32 %v1037, 3
    %vm1042 = vcmp.lt.s32.totalorder %v1041, 2
    %vm1043 = vcmp.eq.s32.totalorder %v1041, 0
    %v1044 = vxor.u32 %v1039, 2147483648
    %v1045 = vsel %vm1043, %v1038, %v1044
    %vm1046 = vcmp.eq.s32.totalorder %v1041, 2
    %v1047 = vxor.u32 %v1038, 2147483648
    %v1048 = vsel %vm1046, %v1047, %v1039
    %v1049 = vsel %vm1042, %v1045, %v1048
    %v1050 = vsel %vm1040, nan, %v1049
    %v1051 = vand.u32 2147483647, %v736
    %vm1052 = vcmp.le.f32.partialorder %v1051, 0.7853982
    %vm1053 = vcmp.lt.s32.totalorder %v736, 0
    %v1054 = vand.u32 %v736, 2139095040
    %v1055 = vshrl.u32 %v1054, 23
    %v1056 = vsub.s32 %v1055, 127
    %v1057 = vand.u32 2147483647, %v736
    %v1058 = vand.u32 %v1057, 8388607
    %v1059 = vor.u32 %v1058, 8388608
    %v1060 = vsub.s32 0, %v1059
    %v1061 = vadd.s32 %v1056, 1
    %vm1062 = vcmp.gt.s32.totalorder %v1061, 0
    %v1063 = vsel %vm1062, %v1061, 0
    %v1064 = vshrl.u32 %v1063, 5
    %v1065 = vand.u32 %v1063, 31
    %v1066 = vsub.s32 32, %v1065
    %v1067 = vshrl.u32 683565275, %v1066
    %v1068 = vshll.u32 683565275, %v1065
    %v1069 = vshrl.u32 2475754826, %v1066
    %v1070 = vor.u32 %v1068, %v1069
    %v1071 = vshll.u32 2475754826, %v1065
    %v1072 = vshrl.u32 2131351028, %v1066
    %v1073 = vor.u32 %v1071, %v1072
    %v1074 = vshll.u32 2131351028, %v1065
    %v1075 = vshrl.u32 2102212464, %v1066
    %v1076 = vor.u32 %v1074, %v1075
    %v1077 = vshll.u32 2102212464, %v1065
    %v1078 = vshrl.u32 920167782, %v1066
    %v1079 = vor.u32 %v1077, %v1078
    %v1080 = vshll.u32 920167782, %v1065
    %v1081 = vshrl.u32 1326507024, %v1066
    %v1082 = vor.u32 %v1080, %v1081
    %vm1083 = vcmp.lt.s32.totalorder %v1064, 1
    %vm1084 = vcmp.lt.s32.totalorder %v1064, 2
    %vm1085 = vcmp.lt.s32.totalorder %v1064, 3
    %vm1086 = vcmp.lt.s32.totalorder %v1064, 4
    %v1087 = vsel %vm1083, %v1067, %v1070
    %v1088 = vsel %vm1086, %v1076, 2102212464
    %v1089 = vsel %vm1085, %v1073, %v1088
    %v1090 = vsel %vm1084, %v1087, %v1089
    %v1091 = vsel %vm1083, %v1070, %v1073
    %v1092 = vsel %vm1086, %v1079, 920167782
    %v1093 = vsel %vm1085, %v1076, %v1092
    %v1094 = vsel %vm1084, %v1091, %v1093
    %v1095 = vsel %vm1083, %v1073, %v1076
    %v1096 = vsel %vm1086, %v1082, 1326507024
    %v1097 = vsel %vm1085, %v1079, %v1096
    %v1098 = vsel %vm1084, %v1095, %v1097
    %v1099 = vshll.u32 %v1059, 8
    %v1100 = vmul.u32.u64.compose %v1099, %v1098
    %v1101 = vextract.low.u32 %v1100
    %v1102 = vextract.high.u32 %v1100
    %v1103 = vmul.u32.u64.compose %v1099, %v1094
    %v1104 = vextract.low.u32 %v1103
    %v1105 = vextract.high.u32 %v1103
    %v1106 = vmul.u32 %v1099, %v1090
    %v1107 = vadd.s32 %v1102, %v1104
    %vm1108 = vc.u32 %v1102, %v1104
    %v1109 = vadd.s32 %v1105, 1
    %v1110 = vsel %vm1108, %v1109, %v1105
    %v1111 = vadd.s32 %v1106, %v1110
    %v1112 = vadd.s32 %v1111, 536870912
    %v1113 = vshrl.u32 %v1112, 30
    %v1114 = vshll.u32 %v1113, 30
    %v1115 = vsub.s32 %v1111, %v1114
    %vm1116 = vcmp.lt.s32.totalorder %v1115, 0
    %v1117 = vsub.s32 0, %v1115
    %v1118 = vsel %vm1116, %v1117, %v1115
    %v1119 = vclz %v1118
    %v1120 = vsub.s32 %v1119, 2
    %vm1121 = vcmp.gt.s32.totalorder 0, %v1120
    %v1122 = vsel %vm1121, 0, %v1120
    %v1123 = vsub.s32 32, %v1122
    %v1124 = vshll.u32 %v1115, %v1122
    %v1125 = vshrl.u32 %v1107, %v1123
    %v1126 = vor.u32 %v1124, %v1125
    %v1127 = vsub.s32 4294967266, %v1122
    %v1128 = vadd.s32 %v1127, 127
    %v1129 = vshll.u32 %v1128, 23
    %v1130 = vor.u32 4788187, %v1129
    %v1131 = vand.u32 2147483647, %v1130
    %v1133 = vcvt.s32.f32 %v1126
    %v1134 = vmul.f32 %v1133, %v1131
    %v1135 = vxor.u32 %v1134, 2147483648
    %v1136 = vsel %vm1053, %v1135, %v1134
    %v1137 = vsub.s32 4, %v1113
    %v1138 = vsel %vm1053, %v1137, %v1113
    %v1139 = vsel %vm1052, %v736, %v1136
    %v1140 = vsel %vm1052, 0, %v1138
    %v1141 = vcosq.f32.pop %v1139
    %v1142 = vsinq.f32.pop %v1139
    %vm1143 = vweird.f32 %v736
    %v1144 = vand.u32 %v1140, 3
    %vm1145 = vcmp.lt.s32.totalorder %v1144, 2
    %vm1146 = vcmp.eq.s32.totalorder %v1144, 0
    %v1147 = vxor.u32 %v1142, 2147483648
    %v1148 = vsel %vm1146, %v1141, %v1147
    %vm1149 = vcmp.eq.s32.totalorder %v1144, 2
    %v1150 = vxor.u32 %v1141, 2147483648
    %v1151 = vsel %vm1149, %v1150, %v1142
    %v1152 = vsel %vm1145, %v1148, %v1151
    %v1153 = vsel %vm1143, nan, %v1152
    %v1154 = vstv %s86
    %v1155 = vmul.f32 %v1154, %v1050
    %v1156 = vmul.f32 %v1154, %v1153
    %v1157 = vadd.f32 %v946, %v1155
    %v1158 = vadd.f32 %v947, %v1156
    %v1159 = vld [vmem:[%s7] sm:$0xff]
    %v1160 = vld [vmem:[%s7 + $0x8] sm:$0xff]
    %v1161 = vld [vmem:[%s7 + $0x10] sm:$0xff]
    %v1162 = vld [vmem:[%s7 + $0x18] sm:$0xff]
    %v1163 = vld [vmem:[%s8] sm:$0x1]
    %v1165 = vlaneseq
    %v1166 = vshrl.u32 %v1165, 7
    %v1167 = vsub.s32 0, %v1166
    %v1168 = vrot.slane %v1163, %v1167
    %v1171 = vsel %vm110, %v1157, 0
    %v1174 = vsel %vm110, %v1158, 0
    %1176 = vmatprep.subr.mxu0 0.0
    %1177 = vmatpush1.msra.mxu0 0.0
    %1178 = vmatprep.subr.mxu0 0.0
    %1179 = vmatpush1.msra.mxu0 0.0
    %1180 = vmatprep.subr.mxu0 0.0
    %1181 = vmatpush1.msra.mxu0 0.0
    %1182 = vmatprep.subr.mxu0 0.0
    %1183 = vmatpush1.msra.mxu0 0.0
    %1184 = vmatprep.subr.mxu0 0.0
    %1185 = vmatpush1.msra.mxu0 0.0
    %1186 = vmatprep.subr.mxu0 0.0
    %1187 = vmatpush1.msra.mxu0 0.0
    %1188 = vmatprep.subr.mxu0 0.0
    %1189 = vmatpush1.msra.mxu0 0.0
    %1190 = vmatprep.subr.mxu0 0.0
    %1191 = vmatpush1.msra.mxu0 0.0
    %1192 = vmatprep.subr.mxu0 0.0
    %1193 = vmatpush1.msra.mxu0 0.0
    %1194 = vmatprep.subr.mxu0 0.0
    %1195 = vmatpush1.msra.mxu0 0.0
    %1196 = vmatprep.subr.mxu0 0.0
    %1197 = vmatpush1.msra.mxu0 0.0
    %1198 = vmatprep.subr.mxu0 0.0
    %1199 = vmatpush1.msra.mxu0 0.0
    %1200 = vmatprep.subr.mxu0 0.0
    %1201 = vmatpush1.msra.mxu0 %v1162
    %1202 = vmatprep.subr.mxu0 0.0
    %1203 = vmatpush1.msra.mxu0 %v1161
    %1204 = vmatprep.subr.mxu0 0.0
    %1205 = vmatpush1.msra.mxu0 %v1160
    %1206 = vmatprep.subr.mxu0 0.0
    %1207 = vmatpush1.msra.mxu0 %v1159
    %1208 = vmatprep.subr.mxu0 0.0
    %1209 = vmatpush2.msra.mxu0 0.0
    %1210 = vmatprep.subr.mxu0 0.0
    %1211 = vmatpush2.msra.mxu0 0.0
    %1212 = vmatprep.subr.mxu0 0.0
    %1213 = vmatpush2.msra.mxu0 0.0
    %1214 = vmatprep.subr.mxu0 0.0
    %1215 = vmatpush2.msra.mxu0 0.0
    %1216 = vmatprep.subr.mxu0 0.0
    %1217 = vmatpush2.msra.mxu0 0.0
    %1218 = vmatprep.subr.mxu0 0.0
    %1219 = vmatpush2.msra.mxu0 0.0
    %1220 = vmatprep.subr.mxu0 0.0
    %1221 = vmatpush2.msra.mxu0 0.0
    %1222 = vmatprep.subr.mxu0 0.0
    %1223 = vmatpush2.msra.mxu0 0.0
    %1224 = vmatprep.subr.mxu0 0.0
    %1225 = vmatpush2.msra.mxu0 0.0
    %1226 = vmatprep.subr.mxu0 0.0
    %1227 = vmatpush2.msra.mxu0 0.0
    %1228 = vmatprep.subr.mxu0 0.0
    %1229 = vmatpush2.msra.mxu0 0.0
    %1230 = vmatprep.subr.mxu0 0.0
    %1231 = vmatpush2.msra.mxu0 0.0
    %1232 = vmatprep.subr.mxu0 0.0
    %1233 = vmatpush2.msra.mxu0 0.0
    %1234 = vmatprep.subr.mxu0 0.0
    %1235 = vmatpush2.msra.mxu0 0.0
    %1236 = vmatprep.subr.mxu0 0.0
    %1237 = vmatpush2.msra.mxu0 0.0
    %1238 = vmatprep.subr.mxu0 0.0
    %1239 = vmatpush2.msra.mxu0 0.0
    %1240 = vmatprep.mubr.f32.mxu0 0.0
    %1241 = vmatmul.mubr.f32.gmra.mxu0 %v1171
    %v1242 = vpop.f32.mrf.mxu0
    %v1243 = vadd.f32 %v1168, %v1242
    %v1244 = vpop.f32.mrf.mxu0
    %1245 = vmatprep.mubr.f32.mxu0 0.0
    %1246 = vmatmul.mubr.f32.gmra.mxu0 %v1174
    %v1247 = vpop.f32.mrf.mxu0
    %v1248 = vadd.f32 %v1168, %v1247
    %v1249 = vpop.f32.mrf.mxu0
    %1250 = vdwg.mxu0
    %v1251 = vld [vmem:[%s9] sm:$0xff]
    %v1252 = vld [vmem:[%s9 + $0x8] sm:$0xff]
    %v1253 = vld [vmem:[%s9 + $0x10] sm:$0xff]
    %v1254 = vld [vmem:[%s9 + $0x18] sm:$0xff]
    %v1255 = vld [vmem:[%s10] sm:$0x1]
    %v1257 = vlaneseq
    %v1258 = vshrl.u32 %v1257, 7
    %v1259 = vsub.s32 0, %v1258
    %v1260 = vrot.slane %v1255, %v1259
    %1262 = vmatprep.subr.mxu0 0.0
    %1263 = vmatpush1.msra.mxu0 0.0
    %1264 = vmatprep.subr.mxu0 0.0
    %1265 = vmatpush1.msra.mxu0 0.0
    %1266 = vmatprep.subr.mxu0 0.0
    %1267 = vmatpush1.msra.mxu0 0.0
    %1268 = vmatprep.subr.mxu0 0.0
    %1269 = vmatpush1.msra.mxu0 0.0
    %1270 = vmatprep.subr.mxu0 0.0
    %1271 = vmatpush1.msra.mxu0 0.0
    %1272 = vmatprep.subr.mxu0 0.0
    %1273 = vmatpush1.msra.mxu0 0.0
    %1274 = vmatprep.subr.mxu0 0.0
    %1275 = vmatpush1.msra.mxu0 0.0
    %1276 = vmatprep.subr.mxu0 0.0
    %1277 = vmatpush1.msra.mxu0 0.0
    %1278 = vmatprep.subr.mxu0 0.0
    %1279 = vmatpush1.msra.mxu0 0.0
    %1280 = vmatprep.subr.mxu0 0.0
    %1281 = vmatpush1.msra.mxu0 0.0
    %1282 = vmatprep.subr.mxu0 0.0
    %1283 = vmatpush1.msra.mxu0 0.0
    %1284 = vmatprep.subr.mxu0 0.0
    %1285 = vmatpush1.msra.mxu0 0.0
    %1286 = vmatprep.subr.mxu0 0.0
    %1287 = vmatpush1.msra.mxu0 %v1254
    %1288 = vmatprep.subr.mxu0 0.0
    %1289 = vmatpush1.msra.mxu0 %v1253
    %1290 = vmatprep.subr.mxu0 0.0
    %1291 = vmatpush1.msra.mxu0 %v1252
    %1292 = vmatprep.subr.mxu0 0.0
    %1293 = vmatpush1.msra.mxu0 %v1251
    %1294 = vmatprep.subr.mxu0 0.0
    %1295 = vmatpush2.msra.mxu0 0.0
    %1296 = vmatprep.subr.mxu0 0.0
    %1297 = vmatpush2.msra.mxu0 0.0
    %1298 = vmatprep.subr.mxu0 0.0
    %1299 = vmatpush2.msra.mxu0 0.0
    %1300 = vmatprep.subr.mxu0 0.0
    %1301 = vmatpush2.msra.mxu0 0.0
    %1302 = vmatprep.subr.mxu0 0.0
    %1303 = vmatpush2.msra.mxu0 0.0
    %1304 = vmatprep.subr.mxu0 0.0
    %1305 = vmatpush2.msra.mxu0 0.0
    %1306 = vmatprep.subr.mxu0 0.0
    %1307 = vmatpush2.msra.mxu0 0.0
    %1308 = vmatprep.subr.mxu0 0.0
    %1309 = vmatpush2.msra.mxu0 0.0
    %1310 = vmatprep.subr.mxu0 0.0
    %1311 = vmatpush2.msra.mxu0 0.0
    %1312 = vmatprep.subr.mxu0 0.0
    %1313 = vmatpush2.msra.mxu0 0.0
    %1314 = vmatprep.subr.mxu0 0.0
    %1315 = vmatpush2.msra.mxu0 0.0
    %1316 = vmatprep.subr.mxu0 0.0
    %1317 = vmatpush2.msra.mxu0 0.0
    %1318 = vmatprep.subr.mxu0 0.0
    %1319 = vmatpush2.msra.mxu0 0.0
    %1320 = vmatprep.subr.mxu0 0.0
    %1321 = vmatpush2.msra.mxu0 0.0
    %1322 = vmatprep.subr.mxu0 0.0
    %1323 = vmatpush2.msra.mxu0 0.0
    %1324 = vmatprep.subr.mxu0 0.0
    %1325 = vmatpush2.msra.mxu0 0.0
    %1326 = vmatprep.mubr.f32.mxu0 0.0
    %1327 = vmatmul.mubr.f32.gmra.mxu0 %v1171
    %v1328 = vpop.f32.mrf.mxu0
    %v1329 = vadd.f32 %v1260, %v1328
    %v1330 = vpop.f32.mrf.mxu0
    %1331 = vmatprep.mubr.f32.mxu0 0.0
    %1332 = vmatmul.mubr.f32.gmra.mxu0 %v1174
    %v1333 = vpop.f32.mrf.mxu0
    %v1334 = vadd.f32 %v1260, %v1333
    %v1335 = vpop.f32.mrf.mxu0
    %1336 = vdwg.mxu0
    %v1337 = vld [vmem:[%s11] sm:$0xff]
    %v1338 = vld [vmem:[%s11 + $0x8] sm:$0xff]
    %v1339 = vld [vmem:[%s11 + $0x10] sm:$0xff]
    %v1340 = vld [vmem:[%s11 + $0x18] sm:$0xff]
    %v1341 = vld [vmem:[%s12] sm:$0x1]
    %v1343 = vlaneseq
    %v1344 = vshrl.u32 %v1343, 7
    %v1345 = vsub.s32 0, %v1344
    %v1346 = vrot.slane %v1341, %v1345
    %1348 = vmatprep.subr.mxu0 0.0
    %1349 = vmatpush1.msra.mxu0 0.0
    %1350 = vmatprep.subr.mxu0 0.0
    %1351 = vmatpush1.msra.mxu0 0.0
    %1352 = vmatprep.subr.mxu0 0.0
    %1353 = vmatpush1.msra.mxu0 0.0
    %1354 = vmatprep.subr.mxu0 0.0
    %1355 = vmatpush1.msra.mxu0 0.0
    %1356 = vmatprep.subr.mxu0 0.0
    %1357 = vmatpush1.msra.mxu0 0.0
    %1358 = vmatprep.subr.mxu0 0.0
    %1359 = vmatpush1.msra.mxu0 0.0
    %1360 = vmatprep.subr.mxu0 0.0
    %1361 = vmatpush1.msra.mxu0 0.0
    %1362 = vmatprep.subr.mxu0 0.0
    %1363 = vmatpush1.msra.mxu0 0.0
    %1364 = vmatprep.subr.mxu0 0.0
    %1365 = vmatpush1.msra.mxu0 0.0
    %1366 = vmatprep.subr.mxu0 0.0
    %1367 = vmatpush1.msra.mxu0 0.0
    %1368 = vmatprep.subr.mxu0 0.0
    %1369 = vmatpush1.msra.mxu0 0.0
    %1370 = vmatprep.subr.mxu0 0.0
    %1371 = vmatpush1.msra.mxu0 0.0
    %1372 = vmatprep.subr.mxu0 0.0
    %1373 = vmatpush1.msra.mxu0 %v1340
    %1374 = vmatprep.subr.mxu0 0.0
    %1375 = vmatpush1.msra.mxu0 %v1339
    %1376 = vmatprep.subr.mxu0 0.0
    %1377 = vmatpush1.msra.mxu0 %v1338
    %1378 = vmatprep.subr.mxu0 0.0
    %1379 = vmatpush1.msra.mxu0 %v1337
    %1380 = vmatprep.subr.mxu0 0.0
    %1381 = vmatpush2.msra.mxu0 0.0
    %1382 = vmatprep.subr.mxu0 0.0
    %1383 = vmatpush2.msra.mxu0 0.0
    %1384 = vmatprep.subr.mxu0 0.0
    %1385 = vmatpush2.msra.mxu0 0.0
    %1386 = vmatprep.subr.mxu0 0.0
    %1387 = vmatpush2.msra.mxu0 0.0
    %1388 = vmatprep.subr.mxu0 0.0
    %1389 = vmatpush2.msra.mxu0 0.0
    %1390 = vmatprep.subr.mxu0 0.0
    %1391 = vmatpush2.msra.mxu0 0.0
    %1392 = vmatprep.subr.mxu0 0.0
    %1393 = vmatpush2.msra.mxu0 0.0
    %1394 = vmatprep.subr.mxu0 0.0
    %1395 = vmatpush2.msra.mxu0 0.0
    %1396 = vmatprep.subr.mxu0 0.0
    %1397 = vmatpush2.msra.mxu0 0.0
    %1398 = vmatprep.subr.mxu0 0.0
    %1399 = vmatpush2.msra.mxu0 0.0
    %1400 = vmatprep.subr.mxu0 0.0
    %1401 = vmatpush2.msra.mxu0 0.0
    %1402 = vmatprep.subr.mxu0 0.0
    %1403 = vmatpush2.msra.mxu0 0.0
    %1404 = vmatprep.subr.mxu0 0.0
    %1405 = vmatpush2.msra.mxu0 0.0
    %1406 = vmatprep.subr.mxu0 0.0
    %1407 = vmatpush2.msra.mxu0 0.0
    %1408 = vmatprep.subr.mxu0 0.0
    %1409 = vmatpush2.msra.mxu0 0.0
    %1410 = vmatprep.subr.mxu0 0.0
    %1411 = vmatpush2.msra.mxu0 0.0
    %1412 = vmatprep.mubr.f32.mxu0 0.0
    %1413 = vmatmul.mubr.f32.gmra.mxu0 %v1171
    %v1414 = vpop.f32.mrf.mxu0
    %v1415 = vadd.f32 %v1346, %v1414
    %v1416 = vpop.f32.mrf.mxu0
    %1417 = vmatprep.mubr.f32.mxu0 0.0
    %1418 = vmatmul.mubr.f32.gmra.mxu0 %v1174
    %v1419 = vpop.f32.mrf.mxu0
    %v1420 = vadd.f32 %v1346, %v1419
    %v1421 = vpop.f32.mrf.mxu0
    %1422 = vdwg.mxu0
    %v1423 = vld [vmem:[%s13] sm:$0xff]
    %v1424 = vld [vmem:[%s14] sm:$0x1]
    %v1426 = vlaneseq
    %v1427 = vshrl.u32 %v1426, 7
    %v1428 = vsub.s32 0, %v1427
    %v1429 = vrot.slane %v1424, %v1428
    %vm1431 = vcmask 64512
    %v1433 = vsel %vm1431, %v1243, 0
    %v1436 = vsel %vm1431, %v1248, 0
    %1438 = vmatprep.subr.mxu0 0.0
    %1439 = vmatpush1.msra.mxu0 0.0
    %1440 = vmatprep.subr.mxu0 0.0
    %1441 = vmatpush1.msra.mxu0 0.0
    %1442 = vmatprep.subr.mxu0 0.0
    %1443 = vmatpush1.msra.mxu0 0.0
    %1444 = vmatprep.subr.mxu0 0.0
    %1445 = vmatpush1.msra.mxu0 0.0
    %1446 = vmatprep.subr.mxu0 0.0
    %1447 = vmatpush1.msra.mxu0 0.0
    %1448 = vmatprep.subr.mxu0 0.0
    %1449 = vmatpush1.msra.mxu0 0.0
    %1450 = vmatprep.subr.mxu0 0.0
    %1451 = vmatpush1.msra.mxu0 0.0
    %1452 = vmatprep.subr.mxu0 0.0
    %1453 = vmatpush1.msra.mxu0 0.0
    %1454 = vmatprep.subr.mxu0 0.0
    %1455 = vmatpush1.msra.mxu0 0.0
    %1456 = vmatprep.subr.mxu0 0.0
    %1457 = vmatpush1.msra.mxu0 0.0
    %1458 = vmatprep.subr.mxu0 0.0
    %1459 = vmatpush1.msra.mxu0 0.0
    %1460 = vmatprep.subr.mxu0 0.0
    %1461 = vmatpush1.msra.mxu0 0.0
    %1462 = vmatprep.subr.mxu0 0.0
    %1463 = vmatpush1.msra.mxu0 0.0
    %1464 = vmatprep.subr.mxu0 0.0
    %1465 = vmatpush1.msra.mxu0 0.0
    %1466 = vmatprep.subr.mxu0 0.0
    %1467 = vmatpush1.msra.mxu0 0.0
    %1468 = vmatprep.subr.mxu0 0.0
    %1469 = vmatpush1.msra.mxu0 %v1423
    %1470 = vmatprep.subr.mxu0 0.0
    %1471 = vmatpush2.msra.mxu0 0.0
    %1472 = vmatprep.subr.mxu0 0.0
    %1473 = vmatpush2.msra.mxu0 0.0
    %1474 = vmatprep.subr.mxu0 0.0
    %1475 = vmatpush2.msra.mxu0 0.0
    %1476 = vmatprep.subr.mxu0 0.0
    %1477 = vmatpush2.msra.mxu0 0.0
    %1478 = vmatprep.subr.mxu0 0.0
    %1479 = vmatpush2.msra.mxu0 0.0
    %1480 = vmatprep.subr.mxu0 0.0
    %1481 = vmatpush2.msra.mxu0 0.0
    %1482 = vmatprep.subr.mxu0 0.0
    %1483 = vmatpush2.msra.mxu0 0.0
    %1484 = vmatprep.subr.mxu0 0.0
    %1485 = vmatpush2.msra.mxu0 0.0
    %1486 = vmatprep.subr.mxu0 0.0
    %1487 = vmatpush2.msra.mxu0 0.0
    %1488 = vmatprep.subr.mxu0 0.0
    %1489 = vmatpush2.msra.mxu0 0.0
    %1490 = vmatprep.subr.mxu0 0.0
    %1491 = vmatpush2.msra.mxu0 0.0
    %1492 = vmatprep.subr.mxu0 0.0
    %1493 = vmatpush2.msra.mxu0 0.0
    %1494 = vmatprep.subr.mxu0 0.0
    %1495 = vmatpush2.msra.mxu0 0.0
    %1496 = vmatprep.subr.mxu0 0.0
    %1497 = vmatpush2.msra.mxu0 0.0
    %1498 = vmatprep.subr.mxu0 0.0
    %1499 = vmatpush2.msra.mxu0 0.0
    %1500 = vmatprep.subr.mxu0 0.0
    %1501 = vmatpush2.msra.mxu0 0.0
    %1502 = vmatprep.mubr.f32.mxu0 0.0
    %1503 = vmatmul.mubr.f32.gmra.mxu0 %v1433
    %v1504 = vpop.f32.mrf.mxu0
    %v1505 = vadd.f32 %v1429, %v1504
    %v1506 = vpop.f32.mrf.mxu0
    %1507 = vmatprep.mubr.f32.mxu0 0.0
    %1508 = vmatmul.mubr.f32.gmra.mxu0 %v1436
    %v1509 = vpop.f32.mrf.mxu0
    %v1510 = vadd.f32 %v1429, %v1509
    %v1511 = vpop.f32.mrf.mxu0
    %1512 = vdwg.mxu0
    %vm1513 = vcmp.gt.f32.partialorder %v1505, 20.0
    %vm1514 = vcmp.gt.f32.partialorder %v1510, 20.0
    %v1515 = vmin.f32 %v1505, 20.0
    %v1516 = vmin.f32 %v1510, 20.0
    %v1517 = vmul.f32 %v1515, 1.442695
    %v1518 = vpow.pop %v1517
    %v1519 = vmul.f32 %v1516, 1.442695
    %v1520 = vpow.pop %v1519
    %v1521 = vadd.f32 %v1518, 1.0
    %v1522 = vlog2.pop %v1521
    %v1523 = vmul.f32 %v1522, 0.6931472
    %v1524 = vmul.f32 -0.5, %v1518
    %v1525 = vadd.f32 %v1524, 1.0
    %v1526 = vmul.f32 %v1525, %v1518
    %v1527 = vand.u32 2147483647, %v1518
    %vm1528 = vcmp.lt.f32.partialorder %v1527, 0.0004427343
    %v1529 = vsel %vm1528, %v1526, %v1523
    %v1530 = vadd.f32 %v1520, 1.0
    %v1531 = vlog2.pop %v1530
    %v1532 = vmul.f32 %v1531, 0.6931472
    %v1533 = vmul.f32 -0.5, %v1520
    %v1534 = vadd.f32 %v1533, 1.0
    %v1535 = vmul.f32 %v1534, %v1520
    %v1536 = vand.u32 2147483647, %v1520
    %vm1537 = vcmp.lt.f32.partialorder %v1536, 0.0004427343
    %v1538 = vsel %vm1537, %v1535, %v1532
    %v1539 = vsel %vm1513, %v1505, %v1529
    %v1540 = vsel %vm1514, %v1510, %v1538
    %1541 = vst.msk [vmem:[#allocation2] sm:$0xff] %vm110, %v1539
    %1542 = vst.msk [vmem:[#allocation2 + $0x8] sm:$0xff] %vm110, %v1540
    %v1543 = vmul.f32 %v1539, %v1157
    %v1544 = vmul.f32 %v1540, %v1158
    %1545 = vst.msk [vmem:[#allocation3] sm:$0xff] %vm110, %v1543
    %1546 = vst.msk [vmem:[#allocation3 + $0x8] sm:$0xff] %vm110, %v1544
    %1547 = vst.msk [vmem:[#allocation4] sm:$0xff] %vm1431, %v1329
    %1548 = vst.msk [vmem:[#allocation4 + $0x8] sm:$0xff] %vm1431, %v1334
    %1549 = vst.msk [vmem:[#allocation5] sm:$0xff] %vm1431, %v1415
    %1550 = vst.msk [vmem:[#allocation5 + $0x8] sm:$0xff] %vm1431, %v1420
    %v1551 = vld [vmem:[%s15] sm:$0xff]
    %v1552 = vmul.f32 %v1551, 1.442695
    %v1553 = vpow.pop %v1552
    %v1554 = vsub.f32 0.0, %v1553
    %v1555 = vld [vmem:[#allocation2] sm:$0xff]
    %s1556 = scalar_lea.vmem [#allocation2], 8
    %v1557 = vld [vmem:[%s1556] sm:$0xff]
    %v1558 = vld [vmem:[#allocation3] sm:$0xff]
    %s1559 = scalar_lea.vmem [#allocation3], 8
    %v1560 = vld [vmem:[%s1559] sm:$0xff]
    %v1561 = vld [vmem:[#allocation4] sm:$0xff]
    %s1562 = scalar_lea.vmem [#allocation4], 8
    %v1563 = vld [vmem:[%s1562] sm:$0xff]
    %v1564 = vld [vmem:[#allocation5] sm:$0xff]
    %s1565 = scalar_lea.vmem [#allocation5], 8
    %v1566 = vld [vmem:[%s1565] sm:$0xff]
    %v1569 = vcombine.high %v1555, %v1555
    %v1571 = vunpack.c.l.s4 1966171168
    %v1572 = vunpack.c.0.s8 %v1571
    %v1573 = vlaneseq
    %v1574 = vshrl.u32 %v1573, 7
    %v1575 = vsub.s32 %v1572, %v1574
    %v1576 = vrot.slane %v1555, %v1575
    %v1578 = vunpack.c.l.s4 1966171168
    %v1579 = vunpack.c.0.s8 %v1578
    %v1580 = vlaneseq
    %v1581 = vshrl.u32 %v1580, 7
    %v1582 = vsub.s32 %v1579, %v1581
    %v1583 = vrot.slane %v1569, %v1582
    %v1584 = vcombine.high %v1576, %v1576
    %v1585 = vcombine.high %v1583, %v1583
    %v1587 = vunpack.c.l.s4 1966171168
    %v1588 = vunpack.c.0.s8 %v1587
    %v1589 = vlaneseq
    %v1590 = vshrl.u32 %v1589, 7
    %v1591 = vsub.s32 %v1588, %v1590
    %v1592 = vrot.slane %v1576, %v1591
    %v1594 = vunpack.c.l.s4 1966171168
    %v1595 = vunpack.c.0.s8 %v1594
    %v1596 = vlaneseq
    %v1597 = vshrl.u32 %v1596, 7
    %v1598 = vsub.s32 %v1595, %v1597
    %v1599 = vrot.slane %v1583, %v1598
    %v1601 = vunpack.c.l.s4 1966171168
    %v1602 = vunpack.c.0.s8 %v1601
    %v1603 = vlaneseq
    %v1604 = vshrl.u32 %v1603, 7
    %v1605 = vsub.s32 %v1602, %v1604
    %v1606 = vrot.slane %v1584, %v1605
    %v1608 = vunpack.c.l.s4 1966171168
    %v1609 = vunpack.c.0.s8 %v1608
    %v1610 = vlaneseq
    %v1611 = vshrl.u32 %v1610, 7
    %v1612 = vsub.s32 %v1609, %v1611
    %v1613 = vrot.slane %v1585, %v1612
    %v1614 = vcombine.high %v1592, %v1592
    %v1615 = vcombine.high %v1599, %v1599
    %v1616 = vcombine.high %v1606, %v1606
    %v1617 = vcombine.high %v1613, %v1613
    %v1618 = vcombine.high %v1557, %v1557
    %v1620 = vunpack.c.l.s4 1966171168
    %v1621 = vunpack.c.0.s8 %v1620
    %v1622 = vlaneseq
    %v1623 = vshrl.u32 %v1622, 7
    %v1624 = vsub.s32 %v1621, %v1623
    %v1625 = vrot.slane %v1557, %v1624
    %v1627 = vunpack.c.l.s4 1966171168
    %v1628 = vunpack.c.0.s8 %v1627
    %v1629 = vlaneseq
    %v1630 = vshrl.u32 %v1629, 7
    %v1631 = vsub.s32 %v1628, %v1630
    %v1632 = vrot.slane %v1618, %v1631
    %v1633 = vcombine.high %v1625, %v1625
    %v1634 = vcombine.high %v1632, %v1632
    %v1636 = vunpack.c.l.s4 1966171168
    %v1637 = vunpack.c.0.s8 %v1636
    %v1638 = vlaneseq
    %v1639 = vshrl.u32 %v1638, 7
    %v1640 = vsub.s32 %v1637, %v1639
    %v1641 = vrot.slane %v1625, %v1640
    %v1643 = vunpack.c.l.s4 1966171168
    %v1644 = vunpack.c.0.s8 %v1643
    %v1645 = vlaneseq
    %v1646 = vshrl.u32 %v1645, 7
    %v1647 = vsub.s32 %v1644, %v1646
    %v1648 = vrot.slane %v1632, %v1647
    %v1650 = vunpack.c.l.s4 1966171168
    %v1651 = vunpack.c.0.s8 %v1650
    %v1652 = vlaneseq
    %v1653 = vshrl.u32 %v1652, 7
    %v1654 = vsub.s32 %v1651, %v1653
    %v1655 = vrot.slane %v1633, %v1654
    %v1657 = vunpack.c.l.s4 1966171168
    %v1658 = vunpack.c.0.s8 %v1657
    %v1659 = vlaneseq
    %v1660 = vshrl.u32 %v1659, 7
    %v1661 = vsub.s32 %v1658, %v1660
    %v1662 = vrot.slane %v1634, %v1661
    %v1663 = vcombine.high %v1641, %v1641
    %v1664 = vcombine.high %v1648, %v1648
    %v1665 = vcombine.high %v1655, %v1655
    %v1666 = vcombine.high %v1662, %v1662
    %v1667 = vlaneseq
    %v1668 = vshrl.u32 %v1667, 7
    %v1669 = vsub.s32 0, %v1668
    %v1670 = vrot.slane %v1592, %v1669
    %v1671 = vlaneseq
    %v1672 = vshrl.u32 %v1671, 7
    %v1673 = vsub.s32 0, %v1672
    %v1674 = vrot.slane %v1606, %v1673
    %v1675 = vlaneseq
    %v1676 = vshrl.u32 %v1675, 7
    %v1677 = vsub.s32 0, %v1676
    %v1678 = vrot.slane %v1614, %v1677
    %v1679 = vlaneseq
    %v1680 = vshrl.u32 %v1679, 7
    %v1681 = vsub.s32 0, %v1680
    %v1682 = vrot.slane %v1616, %v1681
    %v1683 = vlaneseq
    %v1684 = vshrl.u32 %v1683, 7
    %v1685 = vsub.s32 0, %v1684
    %v1686 = vrot.slane %v1599, %v1685
    %v1687 = vlaneseq
    %v1688 = vshrl.u32 %v1687, 7
    %v1689 = vsub.s32 0, %v1688
    %v1690 = vrot.slane %v1613, %v1689
    %v1691 = vlaneseq
    %v1692 = vshrl.u32 %v1691, 7
    %v1693 = vsub.s32 0, %v1692
    %v1694 = vrot.slane %v1615, %v1693
    %v1695 = vlaneseq
    %v1696 = vshrl.u32 %v1695, 7
    %v1697 = vsub.s32 0, %v1696
    %v1698 = vrot.slane %v1617, %v1697
    %v1699 = vlaneseq
    %v1700 = vshrl.u32 %v1699, 7
    %v1701 = vsub.s32 0, %v1700
    %v1702 = vrot.slane %v1641, %v1701
    %v1703 = vlaneseq
    %v1704 = vshrl.u32 %v1703, 7
    %v1705 = vsub.s32 0, %v1704
    %v1706 = vrot.slane %v1655, %v1705
    %v1707 = vlaneseq
    %v1708 = vshrl.u32 %v1707, 7
    %v1709 = vsub.s32 0, %v1708
    %v1710 = vrot.slane %v1663, %v1709
    %v1711 = vlaneseq
    %v1712 = vshrl.u32 %v1711, 7
    %v1713 = vsub.s32 0, %v1712
    %v1714 = vrot.slane %v1665, %v1713
    %v1715 = vlaneseq
    %v1716 = vshrl.u32 %v1715, 7
    %v1717 = vsub.s32 0, %v1716
    %v1718 = vrot.slane %v1648, %v1717
    %v1719 = vlaneseq
    %v1720 = vshrl.u32 %v1719, 7
    %v1721 = vsub.s32 0, %v1720
    %v1722 = vrot.slane %v1662, %v1721
    %v1723 = vlaneseq
    %v1724 = vshrl.u32 %v1723, 7
    %v1725 = vsub.s32 0, %v1724
    %v1726 = vrot.slane %v1664, %v1725
    %v1727 = vlaneseq
    %v1728 = vshrl.u32 %v1727, 7
    %v1729 = vsub.s32 0, %v1728
    %v1730 = vrot.slane %v1666, %v1729
    %v1747 = vmul.f32 %v1670, %v1554
    %v1748 = vmul.f32 %v1674, %v1554
    %v1749 = vmul.f32 %v1678, %v1554
    %v1750 = vmul.f32 %v1682, %v1554
    %v1751 = vmul.f32 %v1686, %v1554
    %v1752 = vmul.f32 %v1690, %v1554
    %v1753 = vmul.f32 %v1694, %v1554
    %v1754 = vmul.f32 %v1698, %v1554
    %v1755 = vmul.f32 %v1702, %v1554
    %v1756 = vmul.f32 %v1706, %v1554
    %v1757 = vmul.f32 %v1710, %v1554
    %v1758 = vmul.f32 %v1714, %v1554
    %v1759 = vmul.f32 %v1718, %v1554
    %v1760 = vmul.f32 %v1722, %v1554
    %v1761 = vmul.f32 %v1726, %v1554
    %v1762 = vmul.f32 %v1730, %v1554
    %v1763 = vmul.f32 %v1747, 1.442695
    %v1764 = vpow.pop %v1763
    %v1765 = vmul.f32 %v1748, 1.442695
    %v1766 = vpow.pop %v1765
    %v1767 = vmul.f32 %v1749, 1.442695
    %v1768 = vpow.pop %v1767
    %v1769 = vmul.f32 %v1750, 1.442695
    %v1770 = vpow.pop %v1769
    %v1771 = vmul.f32 %v1751, 1.442695
    %v1772 = vpow.pop %v1771
    %v1773 = vmul.f32 %v1752, 1.442695
    %v1774 = vpow.pop %v1773
    %v1775 = vmul.f32 %v1753, 1.442695
    %v1776 = vpow.pop %v1775
    %v1777 = vmul.f32 %v1754, 1.442695
    %v1778 = vpow.pop %v1777
    %v1779 = vmul.f32 %v1755, 1.442695
    %v1780 = vpow.pop %v1779
    %v1781 = vmul.f32 %v1756, 1.442695
    %v1782 = vpow.pop %v1781
    %v1783 = vmul.f32 %v1757, 1.442695
    %v1784 = vpow.pop %v1783
    %v1785 = vmul.f32 %v1758, 1.442695
    %v1786 = vpow.pop %v1785
    %v1787 = vmul.f32 %v1759, 1.442695
    %v1788 = vpow.pop %v1787
    %v1789 = vmul.f32 %v1760, 1.442695
    %v1790 = vpow.pop %v1789
    %v1791 = vmul.f32 %v1761, 1.442695
    %v1792 = vpow.pop %v1791
    %v1793 = vmul.f32 %v1762, 1.442695
    %v1794 = vpow.pop %v1793
    %v1797 = vcombine.high %v1558, %v1558
    %v1799 = vunpack.c.l.s4 1966171168
    %v1800 = vunpack.c.0.s8 %v1799
    %v1801 = vlaneseq
    %v1802 = vshrl.u32 %v1801, 7
    %v1803 = vsub.s32 %v1800, %v1802
    %v1804 = vrot.slane %v1558, %v1803
    %v1806 = vunpack.c.l.s4 1966171168
    %v1807 = vunpack.c.0.s8 %v1806
    %v1808 = vlaneseq
    %v1809 = vshrl.u32 %v1808, 7
    %v1810 = vsub.s32 %v1807, %v1809
    %v1811 = vrot.slane %v1797, %v1810
    %v1812 = vcombine.high %v1804, %v1804
    %v1813 = vcombine.high %v1811, %v1811
    %v1815 = vunpack.c.l.s4 1966171168
    %v1816 = vunpack.c.0.s8 %v1815
    %v1817 = vlaneseq
    %v1818 = vshrl.u32 %v1817, 7
    %v1819 = vsub.s32 %v1816, %v1818
    %v1820 = vrot.slane %v1804, %v1819
    %v1822 = vunpack.c.l.s4 1966171168
    %v1823 = vunpack.c.0.s8 %v1822
    %v1824 = vlaneseq
    %v1825 = vshrl.u32 %v1824, 7
    %v1826 = vsub.s32 %v1823, %v1825
    %v1827 = vrot.slane %v1811, %v1826
    %v1829 = vunpack.c.l.s4 1966171168
    %v1830 = vunpack.c.0.s8 %v1829
    %v1831 = vlaneseq
    %v1832 = vshrl.u32 %v1831, 7
    %v1833 = vsub.s32 %v1830, %v1832
    %v1834 = vrot.slane %v1812, %v1833
    %v1836 = vunpack.c.l.s4 1966171168
    %v1837 = vunpack.c.0.s8 %v1836
    %v1838 = vlaneseq
    %v1839 = vshrl.u32 %v1838, 7
    %v1840 = vsub.s32 %v1837, %v1839
    %v1841 = vrot.slane %v1813, %v1840
    %v1842 = vcombine.high %v1820, %v1820
    %v1843 = vcombine.high %v1827, %v1827
    %v1844 = vcombine.high %v1834, %v1834
    %v1845 = vcombine.high %v1841, %v1841
    %v1846 = vcombine.high %v1560, %v1560
    %v1848 = vunpack.c.l.s4 1966171168
    %v1849 = vunpack.c.0.s8 %v1848
    %v1850 = vlaneseq
    %v1851 = vshrl.u32 %v1850, 7
    %v1852 = vsub.s32 %v1849, %v1851
    %v1853 = vrot.slane %v1560, %v1852
    %v1855 = vunpack.c.l.s4 1966171168
    %v1856 = vunpack.c.0.s8 %v1855
    %v1857 = vlaneseq
    %v1858 = vshrl.u32 %v1857, 7
    %v1859 = vsub.s32 %v1856, %v1858
    %v1860 = vrot.slane %v1846, %v1859
    %v1861 = vcombine.high %v1853, %v1853
    %v1862 = vcombine.high %v1860, %v1860
    %v1864 = vunpack.c.l.s4 1966171168
    %v1865 = vunpack.c.0.s8 %v1864
    %v1866 = vlaneseq
    %v1867 = vshrl.u32 %v1866, 7
    %v1868 = vsub.s32 %v1865, %v1867
    %v1869 = vrot.slane %v1853, %v1868
    %v1871 = vunpack.c.l.s4 1966171168
    %v1872 = vunpack.c.0.s8 %v1871
    %v1873 = vlaneseq
    %v1874 = vshrl.u32 %v1873, 7
    %v1875 = vsub.s32 %v1872, %v1874
    %v1876 = vrot.slane %v1860, %v1875
    %v1878 = vunpack.c.l.s4 1966171168
    %v1879 = vunpack.c.0.s8 %v1878
    %v1880 = vlaneseq
    %v1881 = vshrl.u32 %v1880, 7
    %v1882 = vsub.s32 %v1879, %v1881
    %v1883 = vrot.slane %v1861, %v1882
    %v1885 = vunpack.c.l.s4 1966171168
    %v1886 = vunpack.c.0.s8 %v1885
    %v1887 = vlaneseq
    %v1888 = vshrl.u32 %v1887, 7
    %v1889 = vsub.s32 %v1886, %v1888
    %v1890 = vrot.slane %v1862, %v1889
    %v1891 = vcombine.high %v1869, %v1869
    %v1892 = vcombine.high %v1876, %v1876
    %v1893 = vcombine.high %v1883, %v1883
    %v1894 = vcombine.high %v1890, %v1890
    %v1895 = vlaneseq
    %v1896 = vshrl.u32 %v1895, 7
    %v1897 = vsub.s32 0, %v1896
    %v1898 = vrot.slane %v1561, %v1897
    %1900 = vbcast.lane.b32.xlu0 %v1898, 256
    %v1901 = vpop.permute.xlu0 %1900
    %v1902 = vlaneseq
    %v1903 = vshrl.u32 %v1902, 7
    %v1904 = vsub.s32 1, %v1903
    %v1905 = vrot.slane %v1561, %v1904
    %1907 = vbcast.lane.b32.xlu0 %v1905, 256
    %v1908 = vpop.permute.xlu0 %1907
    %v1909 = vlaneseq
    %v1910 = vshrl.u32 %v1909, 7
    %v1911 = vsub.s32 2, %v1910
    %v1912 = vrot.slane %v1561, %v1911
    %1914 = vbcast.lane.b32.xlu0 %v1912, 256
    %v1915 = vpop.permute.xlu0 %1914
    %v1916 = vlaneseq
    %v1917 = vshrl.u32 %v1916, 7
    %v1918 = vsub.s32 3, %v1917
    %v1919 = vrot.slane %v1561, %v1918
    %1921 = vbcast.lane.b32.xlu0 %v1919, 256
    %v1922 = vpop.permute.xlu0 %1921
    %v1923 = vlaneseq
    %v1924 = vshrl.u32 %v1923, 7
    %v1925 = vsub.s32 4, %v1924
    %v1926 = vrot.slane %v1561, %v1925
    %1928 = vbcast.lane.b32.xlu0 %v1926, 256
    %v1929 = vpop.permute.xlu0 %1928
    %v1930 = vlaneseq
    %v1931 = vshrl.u32 %v1930, 7
    %v1932 = vsub.s32 5, %v1931
    %v1933 = vrot.slane %v1561, %v1932
    %1935 = vbcast.lane.b32.xlu0 %v1933, 256
    %v1936 = vpop.permute.xlu0 %1935
    %v1937 = vlaneseq
    %v1938 = vshrl.u32 %v1937, 7
    %v1939 = vsub.s32 6, %v1938
    %v1940 = vrot.slane %v1561, %v1939
    %1942 = vbcast.lane.b32.xlu0 %v1940, 256
    %v1943 = vpop.permute.xlu0 %1942
    %v1944 = vlaneseq
    %v1945 = vshrl.u32 %v1944, 7
    %v1946 = vsub.s32 7, %v1945
    %v1947 = vrot.slane %v1561, %v1946
    %1949 = vbcast.lane.b32.xlu0 %v1947, 256
    %v1950 = vpop.permute.xlu0 %1949
    %v1951 = vlaneseq
    %v1952 = vshrl.u32 %v1951, 7
    %v1953 = vsub.s32 0, %v1952
    %v1954 = vrot.slane %v1563, %v1953
    %1956 = vbcast.lane.b32.xlu0 %v1954, 256
    %v1957 = vpop.permute.xlu0 %1956
    %v1958 = vlaneseq
    %v1959 = vshrl.u32 %v1958, 7
    %v1960 = vsub.s32 1, %v1959
    %v1961 = vrot.slane %v1563, %v1960
    %1963 = vbcast.lane.b32.xlu0 %v1961, 256
    %v1964 = vpop.permute.xlu0 %1963
    %v1965 = vlaneseq
    %v1966 = vshrl.u32 %v1965, 7
    %v1967 = vsub.s32 2, %v1966
    %v1968 = vrot.slane %v1563, %v1967
    %1970 = vbcast.lane.b32.xlu0 %v1968, 256
    %v1971 = vpop.permute.xlu0 %1970
    %v1972 = vlaneseq
    %v1973 = vshrl.u32 %v1972, 7
    %v1974 = vsub.s32 3, %v1973
    %v1975 = vrot.slane %v1563, %v1974
    %1977 = vbcast.lane.b32.xlu0 %v1975, 256
    %v1978 = vpop.permute.xlu0 %1977
    %v1979 = vlaneseq
    %v1980 = vshrl.u32 %v1979, 7
    %v1981 = vsub.s32 4, %v1980
    %v1982 = vrot.slane %v1563, %v1981
    %1984 = vbcast.lane.b32.xlu0 %v1982, 256
    %v1985 = vpop.permute.xlu0 %1984
    %v1986 = vlaneseq
    %v1987 = vshrl.u32 %v1986, 7
    %v1988 = vsub.s32 5, %v1987
    %v1989 = vrot.slane %v1563, %v1988
    %1991 = vbcast.lane.b32.xlu0 %v1989, 256
    %v1992 = vpop.permute.xlu0 %1991
    %v1993 = vlaneseq
    %v1994 = vshrl.u32 %v1993, 7
    %v1995 = vsub.s32 6, %v1994
    %v1996 = vrot.slane %v1563, %v1995
    %1998 = vbcast.lane.b32.xlu0 %v1996, 256
    %v1999 = vpop.permute.xlu0 %1998
    %v2000 = vlaneseq
    %v2001 = vshrl.u32 %v2000, 7
    %v2002 = vsub.s32 7, %v2001
    %v2003 = vrot.slane %v1563, %v2002
    %2005 = vbcast.lane.b32.xlu0 %v2003, 256
    %v2006 = vpop.permute.xlu0 %2005
    %v2007 = vlaneseq
    %v2008 = vshrl.u32 %v2007, 7
    %v2009 = vsub.s32 0, %v2008
    %v2010 = vrot.slane %v1820, %v2009
    %v2011 = vlaneseq
    %v2012 = vshrl.u32 %v2011, 7
    %v2013 = vsub.s32 0, %v2012
    %v2014 = vrot.slane %v1834, %v2013
    %v2015 = vlaneseq
    %v2016 = vshrl.u32 %v2015, 7
    %v2017 = vsub.s32 0, %v2016
    %v2018 = vrot.slane %v1842, %v2017
    %v2019 = vlaneseq
    %v2020 = vshrl.u32 %v2019, 7
    %v2021 = vsub.s32 0, %v2020
    %v2022 = vrot.slane %v1844, %v2021
    %v2023 = vlaneseq
    %v2024 = vshrl.u32 %v2023, 7
    %v2025 = vsub.s32 0, %v2024
    %v2026 = vrot.slane %v1827, %v2025
    %v2027 = vlaneseq
    %v2028 = vshrl.u32 %v2027, 7
    %v2029 = vsub.s32 0, %v2028
    %v2030 = vrot.slane %v1841, %v2029
    %v2031 = vlaneseq
    %v2032 = vshrl.u32 %v2031, 7
    %v2033 = vsub.s32 0, %v2032
    %v2034 = vrot.slane %v1843, %v2033
    %v2035 = vlaneseq
    %v2036 = vshrl.u32 %v2035, 7
    %v2037 = vsub.s32 0, %v2036
    %v2038 = vrot.slane %v1845, %v2037
    %v2039 = vlaneseq
    %v2040 = vshrl.u32 %v2039, 7
    %v2041 = vsub.s32 0, %v2040
    %v2042 = vrot.slane %v1869, %v2041
    %v2043 = vlaneseq
    %v2044 = vshrl.u32 %v2043, 7
    %v2045 = vsub.s32 0, %v2044
    %v2046 = vrot.slane %v1883, %v2045
    %v2047 = vlaneseq
    %v2048 = vshrl.u32 %v2047, 7
    %v2049 = vsub.s32 0, %v2048
    %v2050 = vrot.slane %v1891, %v2049
    %v2051 = vlaneseq
    %v2052 = vshrl.u32 %v2051, 7
    %v2053 = vsub.s32 0, %v2052
    %v2054 = vrot.slane %v1893, %v2053
    %v2055 = vlaneseq
    %v2056 = vshrl.u32 %v2055, 7
    %v2057 = vsub.s32 0, %v2056
    %v2058 = vrot.slane %v1876, %v2057
    %v2059 = vlaneseq
    %v2060 = vshrl.u32 %v2059, 7
    %v2061 = vsub.s32 0, %v2060
    %v2062 = vrot.slane %v1890, %v2061
    %v2063 = vlaneseq
    %v2064 = vshrl.u32 %v2063, 7
    %v2065 = vsub.s32 0, %v2064
    %v2066 = vrot.slane %v1892, %v2065
    %v2067 = vlaneseq
    %v2068 = vshrl.u32 %v2067, 7
    %v2069 = vsub.s32 0, %v2068
    %v2070 = vrot.slane %v1894, %v2069
    %v2087 = vmul.f32 %v2010, %v1901
    %v2088 = vmul.f32 %v2014, %v1908
    %v2089 = vmul.f32 %v2018, %v1915
    %v2090 = vmul.f32 %v2022, %v1922
    %v2091 = vmul.f32 %v2026, %v1929
    %v2092 = vmul.f32 %v2030, %v1936
    %v2093 = vmul.f32 %v2034, %v1943
    %v2094 = vmul.f32 %v2038, %v1950
    %v2095 = vmul.f32 %v2042, %v1957
    %v2096 = vmul.f32 %v2046, %v1964
    %v2097 = vmul.f32 %v2050, %v1971
    %v2098 = vmul.f32 %v2054, %v1978
    %v2099 = vmul.f32 %v2058, %v1985
    %v2100 = vmul.f32 %v2062, %v1992
    %v2101 = vmul.f32 %v2066, %v1999
    %v2102 = vmul.f32 %v2070, %v2006
    %v2103 = vlaneseq
    %v2104 = vshrl.u32 %v2103, 7
    %v2105 = vsub.s32 0, %v2104
    %v2106 = vrot.slane %v1564, %v2105
    %2108 = vbcast.lane.b32.xlu0 %v2106, 256
    %v2109 = vpop.permute.xlu0 %2108
    %v2110 = vlaneseq
    %v2111 = vshrl.u32 %v2110, 7
    %v2112 = vsub.s32 1, %v2111
    %v2113 = vrot.slane %v1564, %v2112
    %2115 = vbcast.lane.b32.xlu0 %v2113, 256
    %v2116 = vpop.permute.xlu0 %2115
    %v2117 = vlaneseq
    %v2118 = vshrl.u32 %v2117, 7
    %v2119 = vsub.s32 2, %v2118
    %v2120 = vrot.slane %v1564, %v2119
    %2122 = vbcast.lane.b32.xlu0 %v2120, 256
    %v2123 = vpop.permute.xlu0 %2122
    %v2124 = vlaneseq
    %v2125 = vshrl.u32 %v2124, 7
    %v2126 = vsub.s32 3, %v2125
    %v2127 = vrot.slane %v1564, %v2126
    %2129 = vbcast.lane.b32.xlu0 %v2127, 256
    %v2130 = vpop.permute.xlu0 %2129
    %v2131 = vlaneseq
    %v2132 = vshrl.u32 %v2131, 7
    %v2133 = vsub.s32 4, %v2132
    %v2134 = vrot.slane %v1564, %v2133
    %2136 = vbcast.lane.b32.xlu0 %v2134, 256
    %v2137 = vpop.permute.xlu0 %2136
    %v2138 = vlaneseq
    %v2139 = vshrl.u32 %v2138, 7
    %v2140 = vsub.s32 5, %v2139
    %v2141 = vrot.slane %v1564, %v2140
    %2143 = vbcast.lane.b32.xlu0 %v2141, 256
    %v2144 = vpop.permute.xlu0 %2143
    %v2145 = vlaneseq
    %v2146 = vshrl.u32 %v2145, 7
    %v2147 = vsub.s32 6, %v2146
    %v2148 = vrot.slane %v1564, %v2147
    %2150 = vbcast.lane.b32.xlu0 %v2148, 256
    %v2151 = vpop.permute.xlu0 %2150
    %v2152 = vlaneseq
    %v2153 = vshrl.u32 %v2152, 7
    %v2154 = vsub.s32 7, %v2153
    %v2155 = vrot.slane %v1564, %v2154
    %2157 = vbcast.lane.b32.xlu0 %v2155, 256
    %v2158 = vpop.permute.xlu0 %2157
    %v2159 = vlaneseq
    %v2160 = vshrl.u32 %v2159, 7
    %v2161 = vsub.s32 0, %v2160
    %v2162 = vrot.slane %v1566, %v2161
    %2164 = vbcast.lane.b32.xlu0 %v2162, 256
    %v2165 = vpop.permute.xlu0 %2164
    %v2166 = vlaneseq
    %v2167 = vshrl.u32 %v2166, 7
    %v2168 = vsub.s32 1, %v2167
    %v2169 = vrot.slane %v1566, %v2168
    %2171 = vbcast.lane.b32.xlu0 %v2169, 256
    %v2172 = vpop.permute.xlu0 %2171
    %v2173 = vlaneseq
    %v2174 = vshrl.u32 %v2173, 7
    %v2175 = vsub.s32 2, %v2174
    %v2176 = vrot.slane %v1566, %v2175
    %2178 = vbcast.lane.b32.xlu0 %v2176, 256
    %v2179 = vpop.permute.xlu0 %2178
    %v2180 = vlaneseq
    %v2181 = vshrl.u32 %v2180, 7
    %v2182 = vsub.s32 3, %v2181
    %v2183 = vrot.slane %v1566, %v2182
    %2185 = vbcast.lane.b32.xlu0 %v2183, 256
    %v2186 = vpop.permute.xlu0 %2185
    %v2187 = vlaneseq
    %v2188 = vshrl.u32 %v2187, 7
    %v2189 = vsub.s32 4, %v2188
    %v2190 = vrot.slane %v1566, %v2189
    %2192 = vbcast.lane.b32.xlu0 %v2190, 256
    %v2193 = vpop.permute.xlu0 %2192
    %v2194 = vlaneseq
    %v2195 = vshrl.u32 %v2194, 7
    %v2196 = vsub.s32 5, %v2195
    %v2197 = vrot.slane %v1566, %v2196
    %2199 = vbcast.lane.b32.xlu0 %v2197, 256
    %v2200 = vpop.permute.xlu0 %2199
    %v2201 = vlaneseq
    %v2202 = vshrl.u32 %v2201, 7
    %v2203 = vsub.s32 6, %v2202
    %v2204 = vrot.slane %v1566, %v2203
    %2206 = vbcast.lane.b32.xlu0 %v2204, 256
    %v2207 = vpop.permute.xlu0 %2206
    %v2208 = vlaneseq
    %v2209 = vshrl.u32 %v2208, 7
    %v2210 = vsub.s32 7, %v2209
    %v2211 = vrot.slane %v1566, %v2210
    %2213 = vbcast.lane.b32.xlu0 %v2211, 256
    %v2214 = vpop.permute.xlu0 %2213
    %v2215 = vmul.f32 %v1764, 0.0
    %v2216 = vmul.f32 %v1780, 0.0
    %v2217 = vadd.f32 %v2215, %v2087
    %v2218 = vadd.f32 %v2216, %v2095
    %v2219 = vmul.f32 %v2217, %v2109
    %v2220 = vmul.f32 %v2218, %v2165
    %v2221 = vsel %vm110, %v2219, 0.0
    %v2222 = vrot.slane %v2221, 4
    %v2223 = vadd.f32 %v2221, %v2222
    %v2224 = vrot.slane %v2223, 2
    %v2225 = vadd.f32 %v2223, %v2224
    %v2226 = vrot.slane %v2225, 1
    %v2227 = vadd.f32 %v2225, %v2226
    %v2228 = vsel %vm110, %v2220, 0.0
    %v2229 = vrot.slane %v2228, 4
    %v2230 = vadd.f32 %v2228, %v2229
    %v2231 = vrot.slane %v2230, 2
    %v2232 = vadd.f32 %v2230, %v2231
    %v2233 = vrot.slane %v2232, 1
    %v2234 = vadd.f32 %v2232, %v2233
    %v2235 = vmul.f32 %v1766, %v2217
    %v2236 = vmul.f32 %v1782, %v2218
    %v2237 = vadd.f32 %v2235, %v2088
    %v2238 = vadd.f32 %v2236, %v2096
    %v2239 = vmul.f32 %v2237, %v2116
    %v2240 = vmul.f32 %v2238, %v2172
    %v2241 = vsel %vm110, %v2239, 0.0
    %v2242 = vrot.slane %v2241, 4
    %v2243 = vadd.f32 %v2241, %v2242
    %v2244 = vrot.slane %v2243, 2
    %v2245 = vadd.f32 %v2243, %v2244
    %v2246 = vrot.slane %v2245, 1
    %v2247 = vadd.f32 %v2245, %v2246
    %v2248 = vsel %vm110, %v2240, 0.0
    %v2249 = vrot.slane %v2248, 4
    %v2250 = vadd.f32 %v2248, %v2249
    %v2251 = vrot.slane %v2250, 2
    %v2252 = vadd.f32 %v2250, %v2251
    %v2253 = vrot.slane %v2252, 1
    %v2254 = vadd.f32 %v2252, %v2253
    %v2255 = vmul.f32 %v1768, %v2237
    %v2256 = vmul.f32 %v1784, %v2238
    %v2257 = vadd.f32 %v2255, %v2089
    %v2258 = vadd.f32 %v2256, %v2097
    %v2259 = vmul.f32 %v2257, %v2123
    %v2260 = vmul.f32 %v2258, %v2179
    %v2261 = vsel %vm110, %v2259, 0.0
    %v2262 = vrot.slane %v2261, 4
    %v2263 = vadd.f32 %v2261, %v2262
    %v2264 = vrot.slane %v2263, 2
    %v2265 = vadd.f32 %v2263, %v2264
    %v2266 = vrot.slane %v2265, 1
    %v2267 = vadd.f32 %v2265, %v2266
    %v2268 = vsel %vm110, %v2260, 0.0
    %v2269 = vrot.slane %v2268, 4
    %v2270 = vadd.f32 %v2268, %v2269
    %v2271 = vrot.slane %v2270, 2
    %v2272 = vadd.f32 %v2270, %v2271
    %v2273 = vrot.slane %v2272, 1
    %v2274 = vadd.f32 %v2272, %v2273
    %v2275 = vmul.f32 %v1770, %v2257
    %v2276 = vmul.f32 %v1786, %v2258
    %v2277 = vadd.f32 %v2275, %v2090
    %v2278 = vadd.f32 %v2276, %v2098
    %v2279 = vmul.f32 %v2277, %v2130
    %v2280 = vmul.f32 %v2278, %v2186
    %v2281 = vsel %vm110, %v2279, 0.0
    %v2282 = vrot.slane %v2281, 4
    %v2283 = vadd.f32 %v2281, %v2282
    %v2284 = vrot.slane %v2283, 2
    %v2285 = vadd.f32 %v2283, %v2284
    %v2286 = vrot.slane %v2285, 1
    %v2287 = vadd.f32 %v2285, %v2286
    %v2288 = vsel %vm110, %v2280, 0.0
    %v2289 = vrot.slane %v2288, 4
    %v2290 = vadd.f32 %v2288, %v2289
    %v2291 = vrot.slane %v2290, 2
    %v2292 = vadd.f32 %v2290, %v2291
    %v2293 = vrot.slane %v2292, 1
    %v2294 = vadd.f32 %v2292, %v2293
    %v2295 = vmul.f32 %v1772, %v2277
    %v2296 = vmul.f32 %v1788, %v2278
    %v2297 = vadd.f32 %v2295, %v2091
    %v2298 = vadd.f32 %v2296, %v2099
    %v2299 = vmul.f32 %v2297, %v2137
    %v2300 = vmul.f32 %v2298, %v2193
    %v2301 = vsel %vm110, %v2299, 0.0
    %v2302 = vrot.slane %v2301, 4
    %v2303 = vadd.f32 %v2301, %v2302
    %v2304 = vrot.slane %v2303, 2
    %v2305 = vadd.f32 %v2303, %v2304
    %v2306 = vrot.slane %v2305, 1
    %v2307 = vadd.f32 %v2305, %v2306
    %v2308 = vsel %vm110, %v2300, 0.0
    %v2309 = vrot.slane %v2308, 4
    %v2310 = vadd.f32 %v2308, %v2309
    %v2311 = vrot.slane %v2310, 2
    %v2312 = vadd.f32 %v2310, %v2311
    %v2313 = vrot.slane %v2312, 1
    %v2314 = vadd.f32 %v2312, %v2313
    %v2315 = vmul.f32 %v1774, %v2297
    %v2316 = vmul.f32 %v1790, %v2298
    %v2317 = vadd.f32 %v2315, %v2092
    %v2318 = vadd.f32 %v2316, %v2100
    %v2319 = vmul.f32 %v2317, %v2144
    %v2320 = vmul.f32 %v2318, %v2200
    %v2321 = vsel %vm110, %v2319, 0.0
    %v2322 = vrot.slane %v2321, 4
    %v2323 = vadd.f32 %v2321, %v2322
    %v2324 = vrot.slane %v2323, 2
    %v2325 = vadd.f32 %v2323, %v2324
    %v2326 = vrot.slane %v2325, 1
    %v2327 = vadd.f32 %v2325, %v2326
    %v2328 = vsel %vm110, %v2320, 0.0
    %v2329 = vrot.slane %v2328, 4
    %v2330 = vadd.f32 %v2328, %v2329
    %v2331 = vrot.slane %v2330, 2
    %v2332 = vadd.f32 %v2330, %v2331
    %v2333 = vrot.slane %v2332, 1
    %v2334 = vadd.f32 %v2332, %v2333
    %v2335 = vmul.f32 %v1776, %v2317
    %v2336 = vmul.f32 %v1792, %v2318
    %v2337 = vadd.f32 %v2335, %v2093
    %v2338 = vadd.f32 %v2336, %v2101
    %v2339 = vmul.f32 %v2337, %v2151
    %v2340 = vmul.f32 %v2338, %v2207
    %v2341 = vsel %vm110, %v2339, 0.0
    %v2342 = vrot.slane %v2341, 4
    %v2343 = vadd.f32 %v2341, %v2342
    %v2344 = vrot.slane %v2343, 2
    %v2345 = vadd.f32 %v2343, %v2344
    %v2346 = vrot.slane %v2345, 1
    %v2347 = vadd.f32 %v2345, %v2346
    %v2348 = vsel %vm110, %v2340, 0.0
    %v2349 = vrot.slane %v2348, 4
    %v2350 = vadd.f32 %v2348, %v2349
    %v2351 = vrot.slane %v2350, 2
    %v2352 = vadd.f32 %v2350, %v2351
    %v2353 = vrot.slane %v2352, 1
    %v2354 = vadd.f32 %v2352, %v2353
    %v2355 = vmul.f32 %v1778, %v2337
    %v2356 = vmul.f32 %v1794, %v2338
    %v2357 = vadd.f32 %v2355, %v2094
    %v2358 = vadd.f32 %v2356, %v2102
    %v2359 = vmul.f32 %v2357, %v2158
    %v2360 = vmul.f32 %v2358, %v2214
    %v2361 = vsel %vm110, %v2359, 0.0
    %v2362 = vrot.slane %v2361, 4
    %v2363 = vadd.f32 %v2361, %v2362
    %v2364 = vrot.slane %v2363, 2
    %v2365 = vadd.f32 %v2363, %v2364
    %v2366 = vrot.slane %v2365, 1
    %v2367 = vadd.f32 %v2365, %v2366
    %v2368 = vsel %vm110, %v2360, 0.0
    %v2369 = vrot.slane %v2368, 4
    %v2370 = vadd.f32 %v2368, %v2369
    %v2371 = vrot.slane %v2370, 2
    %v2372 = vadd.f32 %v2370, %v2371
    %v2373 = vrot.slane %v2372, 1
    %v2374 = vadd.f32 %v2372, %v2373
    %vm2375 = vcmask 1040384
    %v2376 = vsel %vm2375, %v2227, %v2247
    %v2377 = vsel %vm2375, %v2234, %v2254
    %vm2378 = vcmask 1041408
    %v2379 = vsel %vm2378, %v2376, %v2267
    %v2380 = vsel %vm2378, %v2377, %v2274
    %vm2381 = vcmask 1042432
    %v2382 = vsel %vm2381, %v2379, %v2287
    %v2383 = vsel %vm2381, %v2380, %v2294
    %vm2384 = vcmask 1043456
    %v2385 = vsel %vm2384, %v2382, %v2307
    %v2386 = vsel %vm2384, %v2383, %v2314
    %vm2387 = vcmask 1044480
    %v2388 = vsel %vm2387, %v2385, %v2327
    %v2389 = vsel %vm2387, %v2386, %v2334
    %vm2390 = vcmask 1045504
    %v2391 = vsel %vm2390, %v2388, %v2347
    %v2392 = vsel %vm2390, %v2389, %v2354
    %vm2393 = vcmask 1046528
    %v2394 = vsel %vm2393, %v2391, %v2367
    %v2395 = vsel %vm2393, %v2392, %v2374
    %2396 = vst.msk [vmem:[#allocation6] sm:$0xff] %vm110, %v2394
    %s2397 = scalar_lea.vmem [#allocation6], 8
    %2398 = vst.msk [vmem:[%s2397] sm:$0xff] %vm110, %v2395
    %v2399 = vld [vmem:[#allocation6] sm:$0xff]
    %v2400 = vld [vmem:[#allocation6 + $0x8] sm:$0xff]
    %v2401 = vld [vmem:[%s16] sm:$0x1]
    %v2403 = vlaneseq
    %v2404 = vshrl.u32 %v2403, 7
    %v2405 = vsub.s32 0, %v2404
    %v2406 = vrot.slane %v2401, %v2405
    %v2408 = vmul.f32 %v2406, %v1157
    %v2409 = vmul.f32 %v2406, %v1158
    %v2410 = vadd.f32 %v2399, %v2408
    %v2411 = vadd.f32 %v2400, %v2409
    %v2412 = vmul.f32 %v2410, %v575
    %v2413 = vmul.f32 %v2411, %v576
    %v2414 = vpack.c.bf16 %v2413, %v2412
    %v2415 = vld [vmem:[%s17] sm:$0xf]
    %v2416 = vld [vmem:[%s17 + $0x4] sm:$0xf]
    %v2417 = vld [vmem:[%s17 + $0x8] sm:$0xf]
    %v2418 = vld [vmem:[%s17 + $0xc] sm:$0xf]
    %v2419 = vld [vmem:[%s18] sm:$0x1]
    %v2421 = vlaneseq
    %v2422 = vshrl.u32 %v2421, 7
    %v2423 = vsub.s32 0, %v2422
    %v2424 = vrot.slane %v2419, %v2423
    %v2430 = vunpack.c.l.b16 %v2415
    %v2431 = vunpack.c.l.b16 %v2416
    %v2432 = vunpack.c.l.b16 %v2417
    %v2433 = vunpack.c.l.b16 %v2418
    %v2434 = vpack.c.b16 %v2431, %v2430
    %v2435 = vpack.c.b16 %v2433, %v2432
    %v2439 = vsel %vm110, %v2414, 0
    %2441 = vmatprep.subr.bf16.mxu0 0
    %2442 = vmatpush1.bf16.msra.mxu0 0
    %2443 = vmatprep.subr.bf16.mxu0 0
    %2444 = vmatpush1.bf16.msra.mxu0 0
    %2445 = vmatprep.subr.bf16.mxu0 0
    %2446 = vmatpush1.bf16.msra.mxu0 0
    %2447 = vmatprep.subr.bf16.mxu0 0
    %2448 = vmatpush1.bf16.msra.mxu0 0
    %2449 = vmatprep.subr.bf16.mxu0 0
    %2450 = vmatpush1.bf16.msra.mxu0 0
    %2451 = vmatprep.subr.bf16.mxu0 0
    %2452 = vmatpush1.bf16.msra.mxu0 0
    %2453 = vmatprep.subr.bf16.mxu0 0
    %2454 = vmatpush1.bf16.msra.mxu0 %v2435
    %2455 = vmatprep.subr.bf16.mxu0 0
    %2456 = vmatpush1.bf16.msra.mxu0 %v2434
    %2457 = vmatprep.subr.bf16.mxu0 0
    %2458 = vmatpush2.bf16.msra.mxu0 0
    %2459 = vmatprep.subr.bf16.mxu0 0
    %2460 = vmatpush2.bf16.msra.mxu0 0
    %2461 = vmatprep.subr.bf16.mxu0 0
    %2462 = vmatpush2.bf16.msra.mxu0 0
    %2463 = vmatprep.subr.bf16.mxu0 0
    %2464 = vmatpush2.bf16.msra.mxu0 0
    %2465 = vmatprep.subr.bf16.mxu0 0
    %2466 = vmatpush2.bf16.msra.mxu0 0
    %2467 = vmatprep.subr.bf16.mxu0 0
    %2468 = vmatpush2.bf16.msra.mxu0 0
    %2469 = vmatprep.subr.bf16.mxu0 0
    %2470 = vmatpush2.bf16.msra.mxu0 0
    %2471 = vmatprep.subr.bf16.mxu0 0
    %2472 = vmatpush2.bf16.msra.mxu0 0
    %2473 = vmatprep.mubr.bf16.mxu0 0
    %2474 = vmatmul.mubr.bf16.gmra.mxu0 %v2439
    %v2475 = vpop.f32.mrf.mxu0
    %v2476 = vadd.f32 %v2424, %v2475
    %v2477 = vpop.f32.mrf.mxu0
    %v2478 = vpop.f32.mrf.mxu0
    %v2479 = vadd.f32 %v2424, %v2478
    %v2480 = vpop.f32.mrf.mxu0
    %2481 = vdwg.mxu0
    %v2482 = vadd.f32 %v2476, %v80
    %v2483 = vadd.f32 %v2479, %v81
    %2484 = vst.msk [vmem:[#allocation10] sm:$0xff] %vm110, %v2482
    %2485 = vst.msk [vmem:[#allocation10 + $0x8] sm:$0xff] %vm110, %v2483
    // Predicated region
    $region86: #{tpu_custom_call.1} parent=1 // pred_check
      _
    $region87: #{tpu_custom_call.1} parent=1 // pred_check_branch
      %2487 = sbr.rel (0) target = $region89
    $region88: #{tpu_custom_call.1} parent=1 // pred_region
      %s2489 = ssub.s32 256, 256
      %2490 = vsyncadd [#allocation8], %s2489
      %s2491 = sshll.u32 [#allocation10], 4
      %s2492 = int_to_ptr.vmem [resolvable:$true] %s2491
      %2497 = dma.vmem_to_hbm [thread:$0]  %s2492, 256, %s20, [#allocation8], 128, 128, 8
    $region89: #{tpu_custom_call.1} parent=1 // pred_fallthru
      _
    // Predicated region
    $region90: #{tpu_custom_call.1} parent=1 // pred_check
      _
    $region91: #{tpu_custom_call.1} parent=1 // pred_check_branch
      %2499 = sbr.rel (0) target = $region93
    $region92: #{tpu_custom_call.1} parent=1 // pred_region
      %2500 = dma.done [#allocation8], 256
    $region93: #{tpu_custom_call.1} parent=1 // pred_fallthru
      _
    %2501 = vsyncpa [#allocation8], 1
    %2502 = vsyncpa [#allocation9], 1

</llo_original>
